<compile_context>
chip_gen: v6e
topology: v6e:2x2x1
jax: 0.10.0
libtpu: 0.0.40
codegen_flags: <defaults>
</compile_context>

<pallas_src>
import functools
import math

import jax
import jax.numpy as jnp
from jax.experimental import pallas as pl
from jax.experimental.pallas import tpu as pltpu


def _temporal_attn_kernel(q_ref, k_ref, v_ref, o_ref, *, scale):
    # Refs carry one (b, h) slab in the module's *native* layout:
    #   (L1, L2, d_k) == (len1, len2, d_k)
    # Attention runs over len1, batched over len2 (and over (b, h) via grid).
    #
    # The PyTorch transpose(2,3)/transpose-back is pure relabeling; it lives
    # entirely inside the kernel as in-VMEM relayouts (last dim untouched),
    # so the wrapper emits no standalone transpose kernels.
    q = jnp.swapaxes(q_ref[...], 0, 1)   # (L2, L1, d_k)
    k = jnp.swapaxes(k_ref[...], 0, 1)   # (L2, L1, d_k)
    v = jnp.swapaxes(v_ref[...], 0, 1)   # (L2, L1, d_k)

    # scores[t, i, j] = sum_d q[t, i, d] * k[t, j, d]   (f32 accumulation)
    scores = jnp.einsum("tid,tjd->tij", q, k,
                        preferred_element_type=jnp.float32)
    # Scale the f32 scores (not Q): fewer elements, exact in f32.
    scores = scores * scale

    # Numerically-stable softmax over the key axis (len1), in f32.
    m = jnp.max(scores, axis=-1, keepdims=True)
    p = jnp.exp(scores - m)
    denom = jnp.sum(p, axis=-1, keepdims=True)
    attn = p * pl.reciprocal(denom, approx=False)   # EUP slot, exact

    # ctx[t, i, d] = sum_j attn[t, i, j] * v[t, j, d]
    ctx = jnp.einsum("tij,tjd->tid", attn.astype(v.dtype), v,
                     preferred_element_type=jnp.float32)

    # Back to the native (L1, L2, d_k) layout and store.
    # NOTE: with d_k=32 the store uses 32 of 128 lanes; at production shapes a
    # lane-dense (L1, L2*d_k) output slab is worth benchmarking -- at these
    # tiny sizes the extra in-kernel relayout it needs may not pay off.
    o_ref[...] = jnp.swapaxes(ctx, 0, 1).astype(o_ref.dtype)


def temporal_scaled_dot_product(Q, K, V):
    """Q, K, V: [B, H, len1, len2, d_k] -> context [B, H, len1, len2, d_k]."""
    B, H, L1, L2, d_k = Q.shape
    assert K.shape == Q.shape and V.shape == Q.shape
    scale = 1.0 / math.sqrt(d_k)

    kernel = functools.partial(_temporal_attn_kernel, scale=scale)

    sq = pl.Squeezed()
    # One (L1, L2, d_k) slab per (b, h) grid point.  The last two block dims
    # equal the full array dims, so the (8, 128) constraint is satisfied.
    # Per-step VMEM with lane padding (d_k=32 -> 128), double-buffered, for 4
    # operands is ~0.5 MiB here.
    # TODO(synk): if L1/L2/d_k grow, split L2 into a third grid axis before the
    # per-step slab approaches v7x's 32 MiB scoped-VMEM default.
    spec = pl.BlockSpec((sq, sq, L1, L2, d_k), lambda b, h: (b, h, 0, 0, 0))

    return pl.pallas_call(
        kernel,
        out_shape=jax.ShapeDtypeStruct((B, H, L1, L2, d_k), Q.dtype),
        grid_spec=pltpu.PrefetchScalarGridSpec(
            num_scalar_prefetch=0,
            grid=(B, H),                  # 8 steps: pipelined, 4/TC on v7x
            in_specs=[spec, spec, spec],
            out_specs=spec,
        ),
        compiler_params=pltpu.CompilerParams(
            dimension_semantics=("parallel", "parallel")),
    )(Q, K, V)


def _reference(Q, K, V):
    """Pure-JAX replica of TemporalScaledDotProduct.forward."""
    d_k = Q.shape[-1]
    Qt = jnp.swapaxes(Q, 2, 3)
    Kt = jnp.swapaxes(K, 2, 3)
    Vt = jnp.swapaxes(V, 2, 3)
    scores = jnp.matmul(Qt, jnp.swapaxes(Kt, -1, -2)) / jnp.sqrt(jnp.float32(d_k))
    attn = jax.nn.softmax(scores, axis=-1)
    ctx = jnp.matmul(attn, Vt)
    return jnp.swapaxes(ctx, 2, 3)


if __name__ == "__main__":
    # Small shapes consistent with the module: B=2, heads=4, len1=8, len2=16, d_k=32
    B, H, L1, L2, d_k = 2, 4, 8, 16, 32
    key = jax.random.PRNGKey(0)
    kq, kk, kv = jax.random.split(key, 3)
    Q = jax.random.normal(kq, (B, H, L1, L2, d_k), dtype=jnp.float32)
    K = jax.random.normal(kk, (B, H, L1, L2, d_k), dtype=jnp.float32)
    V = jax.random.normal(kv, (B, H, L1, L2, d_k), dtype=jnp.float32)

    out = temporal_scaled_dot_product(Q, K, V)
    out = jax.block_until_ready(out)

    ref = _reference(Q, K, V)
    assert out.shape == (B, H, L1, L2, d_k)
    # f32 accumulation everywhere + exact (approx=False) reciprocal -> tight check.
    assert jnp.allclose(out, ref, atol=1e-4, rtol=1e-4), "mismatch vs reference"
    print("KERNEL_OK")
</pallas_src>

<mosaic_0001>
module attributes {stable_mosaic.version = 11 : i64} {
  func.func @_temporal_attn_kernel(%arg0: i32, %arg1: i32, %arg2: memref<1x1x8x16x32xf32, #tpu.memory_space<vmem>>, %arg3: memref<1x1x8x16x32xf32, #tpu.memory_space<vmem>>, %arg4: memref<1x1x8x16x32xf32, #tpu.memory_space<vmem>>, %arg5: memref<1x1x8x16x32xf32, #tpu.memory_space<vmem>>) attributes {dimension_semantics = [#tpu.dimension_semantics<parallel>, #tpu.dimension_semantics<parallel>], iteration_bounds = array<i64: 2, 4>, scalar_prefetch = 0 : i64, scratch_operands = 0 : i64, tpu.core_type = #tpu.core_type<tc>, window_params = [{transform_indices = @transform_0, window_bounds = array<i64: 1, 1, 8, 16, 32>}, {transform_indices = @transform_1, window_bounds = array<i64: 1, 1, 8, 16, 32>}, {transform_indices = @transform_2, window_bounds = array<i64: 1, 1, 8, 16, 32>}, {transform_indices = @transform_3, window_bounds = array<i64: 1, 1, 8, 16, 32>}]} {
    %c0 = arith.constant 0 : index
    %c0_0 = arith.constant 0 : index
    %c0_1 = arith.constant 0 : index
    %c0_2 = arith.constant 0 : index
    %c0_3 = arith.constant 0 : index
    %0 = vector.load %arg2[%c0, %c0_0, %c0_1, %c0_2, %c0_3] : memref<1x1x8x16x32xf32, #tpu.memory_space<vmem>>, vector<1x1x8x16x32xf32>
    %1 = vector.shape_cast %0 : vector<1x1x8x16x32xf32> to vector<8x16x32xf32>
    %2 = tpu.transpose %1, [1, 0, 2] : vector<8x16x32xf32> -> vector<16x8x32xf32>
    %c0_4 = arith.constant 0 : index
    %c0_5 = arith.constant 0 : index
    %c0_6 = arith.constant 0 : index
    %c0_7 = arith.constant 0 : index
    %c0_8 = arith.constant 0 : index
    %3 = vector.load %arg3[%c0_4, %c0_5, %c0_6, %c0_7, %c0_8] : memref<1x1x8x16x32xf32, #tpu.memory_space<vmem>>, vector<1x1x8x16x32xf32>
    %4 = vector.shape_cast %3 : vector<1x1x8x16x32xf32> to vector<8x16x32xf32>
    %5 = tpu.transpose %4, [1, 0, 2] : vector<8x16x32xf32> -> vector<16x8x32xf32>
    %c0_9 = arith.constant 0 : index
    %c0_10 = arith.constant 0 : index
    %c0_11 = arith.constant 0 : index
    %c0_12 = arith.constant 0 : index
    %c0_13 = arith.constant 0 : index
    %6 = vector.load %arg4[%c0_9, %c0_10, %c0_11, %c0_12, %c0_13] : memref<1x1x8x16x32xf32, #tpu.memory_space<vmem>>, vector<1x1x8x16x32xf32>
    %7 = vector.shape_cast %6 : vector<1x1x8x16x32xf32> to vector<8x16x32xf32>
    %8 = tpu.transpose %7, [1, 0, 2] : vector<8x16x32xf32> -> vector<16x8x32xf32>
    "tpu.trace_start"() <{level = 10 : i32, message = "tid,tjd->tij"}> : () -> ()
    %cst = arith.constant dense<0.000000e+00> : vector<16x8x8xf32>
    %9 = tpu.matmul %2, %5, %cst {dimension_numbers = #tpu.dot_dimension_numbers<[2], [2], [1], [1], [0, 0, 0, 1, 1, 1], [0], [0]>} : vector<16x8x32xf32>, vector<16x8x32xf32>, vector<16x8x8xf32> -> vector<16x8x8xf32>
    "tpu.trace_stop"() : () -> ()
    %cst_14 = arith.constant 0.176776692 : f32
    %10 = vector.broadcast %cst_14 : f32 to vector<16x8x8xf32>
    %11 = arith.mulf %9, %10 : vector<16x8x8xf32>
    %cst_15 = arith.constant dense<0xFF800000> : vector<16x8xf32>
    %12 = vector.multi_reduction <maximumf>, %11, %cst_15 [2] : vector<16x8x8xf32> to vector<16x8xf32>
    %13 = vector.shape_cast %12 : vector<16x8xf32> to vector<16x8x1xf32>
    %14 = vector.broadcast %13 : vector<16x8x1xf32> to vector<16x8x8xf32>
    %15 = arith.subf %11, %14 : vector<16x8x8xf32>
    %16 = math.exp %15 : vector<16x8x8xf32>
    %cst_16 = arith.constant dense<0.000000e+00> : vector<16x8xf32>
    %17 = vector.multi_reduction <add>, %16, %cst_16 [2] : vector<16x8x8xf32> to vector<16x8xf32>
    %18 = vector.shape_cast %17 : vector<16x8xf32> to vector<16x8x1xf32>
    %19 = tpu.reciprocal %18 : vector<16x8x1xf32> -> vector<16x8x1xf32>
    %20 = vector.broadcast %19 : vector<16x8x1xf32> to vector<16x8x8xf32>
    %21 = arith.mulf %16, %20 : vector<16x8x8xf32>
    "tpu.trace_start"() <{level = 10 : i32, message = "tij,tjd->tid"}> : () -> ()
    %cst_17 = arith.constant dense<0.000000e+00> : vector<16x8x32xf32>
    %22 = tpu.matmul %21, %8, %cst_17 {dimension_numbers = #tpu.dot_dimension_numbers<[2], [1], [1], [2], [0, 0, 0, 1, 1, 2], [0], [0]>} : vector<16x8x8xf32>, vector<16x8x32xf32>, vector<16x8x32xf32> -> vector<16x8x32xf32>
    "tpu.trace_stop"() : () -> ()
    %23 = tpu.transpose %22, [1, 0, 2] : vector<16x8x32xf32> -> vector<8x16x32xf32>
    %c0_18 = arith.constant 0 : index
    %c0_19 = arith.constant 0 : index
    %c0_20 = arith.constant 0 : index
    %c0_21 = arith.constant 0 : index
    %c0_22 = arith.constant 0 : index
    %24 = vector.load %arg5[%c0_18, %c0_19, %c0_20, %c0_21, %c0_22] : memref<1x1x8x16x32xf32, #tpu.memory_space<vmem>>, vector<1x1x8x16x32xf32>
    %25 = vector.shape_cast %24 : vector<1x1x8x16x32xf32> to vector<8x16x32xf32>
    %26 = vector.shape_cast %23 : vector<8x16x32xf32> to vector<1x1x8x16x32xf32>
    tpu.vector_store %arg5[%c0_18, %c0_19, %c0_20, %c0_21, %c0_22], %26 {strides = array<i32>} : memref<1x1x8x16x32xf32, #tpu.memory_space<vmem>>, vector<1x1x8x16x32xf32>,
    return
  }
  func.func @transform_0(%arg0: i32, %arg1: i32) -> (i32, i32, i32, i32, i32) {
    %c0_i32 = arith.constant 0 : i32
    %c0_i32_0 = arith.constant 0 : i32
    %c0_i32_1 = arith.constant 0 : i32
    %c0_i32_2 = arith.constant 0 : i32
    return %arg0, %arg1, %c0_i32, %c0_i32_0, %c0_i32_1 : i32, i32, i32, i32, i32
  }
  func.func @transform_1(%arg0: i32, %arg1: i32) -> (i32, i32, i32, i32, i32) {
    %c0_i32 = arith.constant 0 : i32
    %c0_i32_0 = arith.constant 0 : i32
    %c0_i32_1 = arith.constant 0 : i32
    %c0_i32_2 = arith.constant 0 : i32
    return %arg0, %arg1, %c0_i32, %c0_i32_0, %c0_i32_1 : i32, i32, i32, i32, i32
  }
  func.func @transform_2(%arg0: i32, %arg1: i32) -> (i32, i32, i32, i32, i32) {
    %c0_i32 = arith.constant 0 : i32
    %c0_i32_0 = arith.constant 0 : i32
    %c0_i32_1 = arith.constant 0 : i32
    %c0_i32_2 = arith.constant 0 : i32
    return %arg0, %arg1, %c0_i32, %c0_i32_0, %c0_i32_1 : i32, i32, i32, i32, i32
  }
  func.func @transform_3(%arg0: i32, %arg1: i32) -> (i32, i32, i32, i32, i32) {
    %c0_i32 = arith.constant 0 : i32
    %c0_i32_0 = arith.constant 0 : i32
    %c0_i32_1 = arith.constant 0 : i32
    %c0_i32_2 = arith.constant 0 : i32
    return %arg0, %arg1, %c0_i32, %c0_i32_0, %c0_i32_1 : i32, i32, i32, i32, i32
  }
}

</mosaic_0001>

<llo_original>
// kernel: tpu_custom_call.1
$region0: #{tpu_custom_call.1}
  #allocation0 [shape = 'u32[]', space=smem, size = 0x4, offset = 0x4, fixed_abs, tag = 'smem constant byte address 0x4 - core index']
  #allocation1 [shape = 'u32[144,128]{1,0:T(1,128)}', space=vmem, size = 0x12000, scoped, tag = 'internal scratch']
  %s0 = inlined_call_operand.hbm [shape: f32[2,4,8,16,32], index: 0, kind: input, shape index: {}]
  %s1 = inlined_call_operand.hbm [shape: f32[2,4,8,16,32], index: 1, kind: input, shape index: {}]
  %s2 = inlined_call_operand.hbm [shape: f32[2,4,8,16,32], index: 2, kind: input, shape index: {}]
  %s3 = inlined_call_operand.hbm [shape: f32[2,4,8,16,32], index: 3, kind: output, shape index: {}]
  %s4 = sld [smem:[#allocation0]]
  $region57: #{tpu_custom_call.1} parent=0
    _
  %s6 = ssub.s32 1, %s4
  %s7 = scalar_select 0, %s6, %s4
  $region1: #{tpu_custom_call.1} parent=0
    #allocation2 [shape = 'u8[131072]{0}', space=vmem, size = 0x20000, scoped, tag = 'input window, operand 0']
    #allocation3 [shape = 's32[2]{0}', space=sflag, size = 0x8, scoped, tag = 'scoped memory for tpu_custom_call.1']
    #allocation4 [shape = 's32[2]{0}', space=sflag, size = 0x8, scoped, tag = 'scoped memory for tpu_custom_call.1']
    #allocation5 [shape = 'u8[131072]{0}', space=vmem, size = 0x20000, scoped, tag = 'input window, operand 1']
    #allocation6 [shape = 's32[2]{0}', space=sflag, size = 0x8, scoped, tag = 'scoped memory for tpu_custom_call.1']
    #allocation7 [shape = 'u8[131072]{0}', space=vmem, size = 0x20000, scoped, tag = 'input window, operand 2']
    #allocation8 [shape = 'u8[131072]{0}', space=vmem, size = 0x20000, scoped, tag = 'output window, operand 0']
    %8 = vsyncpa [#allocation3], 0
    %s9 = scalar_lea.sflag [#allocation3], 1
    %10 = vsyncpa %s9, 0
    %11 = vsyncpa [#allocation6], 0
    %s12 = scalar_lea.sflag [#allocation6], 1
    %13 = vsyncpa %s12, 0
    %14 = vsyncpa [#allocation4], 0
    %s15 = scalar_lea.sflag [#allocation4], 1
    %16 = vsyncpa %s15, 0
    loop: start=0, step=1, limit=10
    $region2: #{tpu_custom_call.1} parent=1 // loop_pre_header
      _
    $region3: #{tpu_custom_call.1} parent=1 // loop_header
      %s18 = sphi 0, %s22
      %p19 = scmp.ge.s32.totalorder %s18, 10
      %s25 = sphi 0, %s37
      %s26 = sphi 0, %s33
      %s27 = sphi 0, %s25
      %s28 = sphi 0, %s26
      %s29 = sphi 0, %s27
      %s30 = sphi 0, %s28
      %s42 = sphi 0, %s44
      %s45 = sphi 0, %s42
      %s46 = sphi 0, %s45
      %s62 = sphi 0, %s46
      %s70 = sphi 0, %s72
      %s73 = sphi 0, %s70
      %s74 = sphi 0, %s73
      %s90 = sphi 0, %s74
      %s98 = sphi 0, %s100
      %s101 = sphi 0, %s98
      %s102 = sphi 0, %s101
      %s118 = sphi 0, %s102
      %s126 = sphi 0, %s128
      %s129 = sphi 0, %s126
      %s130 = sphi 0, %s129
      %s146 = sphi 0, %s130
    $region4: #{tpu_custom_call.1} parent=1 // loop_header_branch
      %21 = sbr.rel (%p19) target = $region8
    $region5: #{tpu_custom_call.1} parent=1 // loop_body
      %s23 = ssub.s32 %s18, 1
      %s24 = ssub.s32 %s18, 2
      %s31 = sadd.s32 1, %s26
      %p32 = scmp.ge.s32.totalorder %s31, 4
      %s33 = scalar_select %p32, 0, %s31
      %s34 = sadd.s32 1, %s25
      %s35 = scalar_select %p32, %s34, %s25
      %p36 = scmp.ge.s32.totalorder %s35, 2
      %s37 = scalar_select %p36, 0, %s35
      %s38 = ssub.s32 %s25, %s37
      %s39 = ssub.s32 %s26, %s33
      %s40 = sor.u32 %s38, %s39
      %p41 = scmp.eq.s32.totalorder %s40, 0
      %s43 = sadd.s32 %s42, 1
      %s44 = scalar_select %p41, %s42, %s43
      %p47 = pneg %p41
      %p48 = scmp.eq.s32.totalorder %s18, 7
      %p49 = por %p47, %p48
      %p50 = scmp.ne.s32.totalorder %s42, %s45
      %p51 = scmp.eq.s32.totalorder %s18, 0
      %p52 = por %p50, %p51
      %p53 = scmp.ne.s32.totalorder %s42, %s45
      %p54 = scmp.eq.s32.totalorder %s23, 7
      %p55 = por %p53, %p54
      %p56 = scmp.ne.s32.totalorder %s45, %s46
      %p57 = scmp.eq.s32.totalorder %s23, 0
      %p58 = por %p56, %p57
      %p59 = scmp.ne.s32.totalorder %s45, %s46
      %p60 = scmp.eq.s32.totalorder %s24, 7
      %p61 = por %p59, %p60
      %p63 = scmp.ne.s32.totalorder %s46, %s62
      %p64 = scmp.eq.s32.totalorder %s24, 0
      %p65 = por %p63, %p64
      %s66 = ssub.s32 %s25, %s37
      %s67 = ssub.s32 %s26, %s33
      %s68 = sor.u32 %s66, %s67
      %p69 = scmp.eq.s32.totalorder %s68, 0
      %s71 = sadd.s32 %s70, 1
      %s72 = scalar_select %p69, %s70, %s71
      %p75 = pneg %p69
      %p76 = scmp.eq.s32.totalorder %s18, 7
      %p77 = por %p75, %p76
      %p78 = scmp.ne.s32.totalorder %s70, %s73
      %p79 = scmp.eq.s32.totalorder %s18, 0
      %p80 = por %p78, %p79
      %p81 = scmp.ne.s32.totalorder %s70, %s73
      %p82 = scmp.eq.s32.totalorder %s23, 7
      %p83 = por %p81, %p82
      %p84 = scmp.ne.s32.totalorder %s73, %s74
      %p85 = scmp.eq.s32.totalorder %s23, 0
      %p86 = por %p84, %p85
      %p87 = scmp.ne.s32.totalorder %s73, %s74
      %p88 = scmp.eq.s32.totalorder %s24, 7
      %p89 = por %p87, %p88
      %p91 = scmp.ne.s32.totalorder %s74, %s90
      %p92 = scmp.eq.s32.totalorder %s24, 0
      %p93 = por %p91, %p92
      %s94 = ssub.s32 %s25, %s37
      %s95 = ssub.s32 %s26, %s33
      %s96 = sor.u32 %s94, %s95
      %p97 = scmp.eq.s32.totalorder %s96, 0
      %s99 = sadd.s32 %s98, 1
      %s100 = scalar_select %p97, %s98, %s99
      %p103 = pneg %p97
      %p104 = scmp.eq.s32.totalorder %s18, 7
      %p105 = por %p103, %p104
      %p106 = scmp.ne.s32.totalorder %s98, %s101
      %p107 = scmp.eq.s32.totalorder %s18, 0
      %p108 = por %p106, %p107
      %p109 = scmp.ne.s32.totalorder %s98, %s101
      %p110 = scmp.eq.s32.totalorder %s23, 7
      %p111 = por %p109, %p110
      %p112 = scmp.ne.s32.totalorder %s101, %s102
      %p113 = scmp.eq.s32.totalorder %s23, 0
      %p114 = por %p112, %p113
      %p115 = scmp.ne.s32.totalorder %s101, %s102
      %p116 = scmp.eq.s32.totalorder %s24, 7
      %p117 = por %p115, %p116
      %p119 = scmp.ne.s32.totalorder %s102, %s118
      %p120 = scmp.eq.s32.totalorder %s24, 0
      %p121 = por %p119, %p120
      %s122 = ssub.s32 %s25, %s37
      %s123 = ssub.s32 %s26, %s33
      %s124 = sor.u32 %s122, %s123
      %p125 = scmp.eq.s32.totalorder %s124, 0
      %s127 = sadd.s32 %s126, 1
      %s128 = scalar_select %p125, %s126, %s127
      %p131 = pneg %p125
      %p132 = scmp.eq.s32.totalorder %s18, 7
      %p133 = por %p131, %p132
      %p134 = scmp.ne.s32.totalorder %s126, %s129
      %p135 = scmp.eq.s32.totalorder %s18, 0
      %p136 = por %p134, %p135
      %p137 = scmp.ne.s32.totalorder %s126, %s129
      %p138 = scmp.eq.s32.totalorder %s23, 7
      %p139 = por %p137, %p138
      %p140 = scmp.ne.s32.totalorder %s129, %s130
      %p141 = scmp.eq.s32.totalorder %s23, 0
      %p142 = por %p140, %p141
      %p143 = scmp.ne.s32.totalorder %s129, %s130
      %p144 = scmp.eq.s32.totalorder %s24, 7
      %p145 = por %p143, %p144
      %p147 = scmp.ne.s32.totalorder %s130, %s146
      %p148 = scmp.eq.s32.totalorder %s24, 0
      %p149 = por %p147, %p148
      %p150 = scmp.le.s32.totalorder 1, %s18
      %p151 = scmp.lt.s32.totalorder %s18, 9
      %p152 = pnand %p150, %p151
      %p153 = pneg %p152
      // Predicated region
      $region9: #{tpu_custom_call.1} parent=5 // pred_check
        _
      $region10: #{tpu_custom_call.1} parent=5 // pred_check_branch
        %155 = sbr.rel (%p152) target = $region12
      $region11: #{tpu_custom_call.1} parent=5 // pred_region
        %s156 = ssub.s32 %s18, 1
      $region12: #{tpu_custom_call.1} parent=5 // pred_fallthru
        _
      %p157 = scmp.lt.s32.totalorder %s18, 8
      // Predicated region
      $region13: #{tpu_custom_call.1} parent=5 // pred_check
        %p158 = pneg %p157
      $region14: #{tpu_custom_call.1} parent=5 // pred_check_branch
        %160 = sbr.rel (%p158) target = $region16
      $region15: #{tpu_custom_call.1} parent=5 // pred_region
        // Predicated region
        $region17: #{tpu_custom_call.1} parent=15 // pred_check
          %p161 = pneg %p52
        $region18: #{tpu_custom_call.1} parent=15 // pred_check_branch
          %163 = sbr.rel (%p161) target = $region20
        $region19: #{tpu_custom_call.1} parent=15 // pred_region
          %s164 = sand.u32 %s42, 1
          %s165 = scalar_lea.sflag [#allocation3], %s164
          %s166 = sand.u32 %s42, 1
          %s167 = smul.addr %s166, 128
          %s168 = scalar_lea.vmem [#allocation2], %s167
          %s170 = ssub.s32 2048, 2048
          %171 = vsyncadd %s165, %s170
          %s172 = smul.addr %s26, 16
          %s173 = smul.addr %s25, 64
          %s174 = sadd.s32 %s172, %s173
          %s175 = smul.addr %s174, 128
          %s176 = scalar_lea.hbm %s0, %s175
          %s177 = sshll.u32 %s168, 4
          %s178 = int_to_ptr.vmem [resolvable:$true] %s177
          %183 = dma.hbm_to_vmem [thread:$0]  %s176, 2048, %s178, %s165, 128, 128, 8
        $region20: #{tpu_custom_call.1} parent=15 // pred_fallthru
          _
        // Predicated region
        $region21: #{tpu_custom_call.1} parent=15 // pred_check
          %p184 = pneg %p80
        $region22: #{tpu_custom_call.1} parent=15 // pred_check_branch
          %186 = sbr.rel (%p184) target = $region24
        $region23: #{tpu_custom_call.1} parent=15 // pred_region
          %s187 = sand.u32 %s18, 1
          %s188 = scalar_lea.sflag [#allocation6], %s187
          %s189 = sand.u32 %s70, 1
          %s190 = smul.addr %s189, 128
          %s191 = scalar_lea.vmem [#allocation5], %s190
          %s193 = ssub.s32 2048, 2048
          %194 = vsyncadd %s188, %s193
          %s195 = smul.addr %s26, 16
          %s196 = smul.addr %s25, 64
          %s197 = sadd.s32 %s195, %s196
          %s198 = smul.addr %s197, 128
          %s199 = scalar_lea.hbm %s1, %s198
          %s200 = sshll.u32 %s191, 4
          %s201 = int_to_ptr.vmem [resolvable:$true] %s200
          %206 = dma.hbm_to_vmem [thread:$0]  %s199, 2048, %s201, %s188, 128, 128, 8
        $region24: #{tpu_custom_call.1} parent=15 // pred_fallthru
          _
        // Predicated region
        $region25: #{tpu_custom_call.1} parent=15 // pred_check
          %p207 = pneg %p108
        $region26: #{tpu_custom_call.1} parent=15 // pred_check_branch
          %209 = sbr.rel (%p207) target = $region28
        $region27: #{tpu_custom_call.1} parent=15 // pred_region
          %s210 = sand.u32 %s18, 1
          %s211 = scalar_lea.sflag [#allocation6], %s210
          %s212 = sand.u32 %s98, 1
          %s213 = smul.addr %s212, 128
          %s214 = scalar_lea.vmem [#allocation7], %s213
          %s216 = ssub.s32 2048, 2048
          %217 = vsyncadd %s211, %s216
          %s218 = smul.addr %s26, 16
          %s219 = smul.addr %s25, 64
          %s220 = sadd.s32 %s218, %s219
          %s221 = smul.addr %s220, 128
          %s222 = scalar_lea.hbm %s2, %s221
          %s223 = sshll.u32 %s214, 4
          %s224 = int_to_ptr.vmem [resolvable:$true] %s223
          %229 = dma.hbm_to_vmem [thread:$0]  %s222, 2048, %s224, %s211, 128, 128, 8
        $region28: #{tpu_custom_call.1} parent=15 // pred_fallthru
          _
      $region16: #{tpu_custom_call.1} parent=5 // pred_fallthru
        _
      %p230 = scmp.le.s32.totalorder 1, %s18
      %p231 = scmp.lt.s32.totalorder %s18, 9
      %p232 = pnand %p230, %p231
      %p233 = pneg %p232
      // Predicated region
      $region29: #{tpu_custom_call.1} parent=5 // pred_check
        _
      $region30: #{tpu_custom_call.1} parent=5 // pred_check_branch
        %235 = sbr.rel (%p232) target = $region32
      $region31: #{tpu_custom_call.1} parent=5 // pred_region
        %s236 = ssub.s32 %s18, 1
        %s237 = sand.u32 %s45, 1
        %s238 = scalar_lea.sflag [#allocation3], %s237
        %s239 = sand.u32 %s45, 1
        %s240 = smul.addr %s239, 128
        %s241 = scalar_lea.vmem [#allocation2], %s240
        // Predicated region
        $region33: #{tpu_custom_call.1} parent=31 // pred_check
          %p242 = pneg %p58
        $region34: #{tpu_custom_call.1} parent=31 // pred_check_branch
          %244 = sbr.rel (%p242) target = $region36
        $region35: #{tpu_custom_call.1} parent=31 // pred_region
          %245 = dma.done %s238, 2048
        $region36: #{tpu_custom_call.1} parent=31 // pred_fallthru
          _
        %s246 = sand.u32 %s23, 1
        %s247 = scalar_lea.sflag [#allocation6], %s246
        %s248 = sand.u32 %s73, 1
        %s249 = smul.addr %s248, 128
        %s250 = scalar_lea.vmem [#allocation5], %s249
        // Predicated region
        $region37: #{tpu_custom_call.1} parent=31 // pred_check
          %p251 = pneg %p86
        $region38: #{tpu_custom_call.1} parent=31 // pred_check_branch
          %253 = sbr.rel (%p251) target = $region40
        $region39: #{tpu_custom_call.1} parent=31 // pred_region
          %254 = dma.done %s247, 2048
        $region40: #{tpu_custom_call.1} parent=31 // pred_fallthru
          _
        %s255 = sand.u32 %s23, 1
        %s256 = scalar_lea.sflag [#allocation6], %s255
        %s257 = sand.u32 %s101, 1
        %s258 = smul.addr %s257, 128
        %s259 = scalar_lea.vmem [#allocation7], %s258
        // Predicated region
        $region41: #{tpu_custom_call.1} parent=31 // pred_check
          %p260 = pneg %p114
        $region42: #{tpu_custom_call.1} parent=31 // pred_check_branch
          %262 = sbr.rel (%p260) target = $region44
        $region43: #{tpu_custom_call.1} parent=31 // pred_region
          %263 = dma.done %s256, 2048
        $region44: #{tpu_custom_call.1} parent=31 // pred_fallthru
          _
        %s264 = sand.u32 %s45, 1
        %s265 = scalar_lea.sflag [#allocation3], %s264
        %s266 = sand.u32 %s45, 1
        %s267 = smul.addr %s266, 128
        %s268 = scalar_lea.vmem [#allocation2], %s267
        %p269 = pneg %p58
        %p270 = pneg %p55
        %s271 = sand.u32 %s23, 1
        %s272 = scalar_lea.sflag [#allocation6], %s271
        %s273 = sand.u32 %s73, 1
        %s274 = smul.addr %s273, 128
        %s275 = scalar_lea.vmem [#allocation5], %s274
        %p276 = pneg %p86
        %p277 = pneg %p83
        %s278 = sand.u32 %s23, 1
        %s279 = scalar_lea.sflag [#allocation6], %s278
        %s280 = sand.u32 %s101, 1
        %s281 = smul.addr %s280, 128
        %s282 = scalar_lea.vmem [#allocation7], %s281
        %p283 = pneg %p114
        %p284 = pneg %p111
        %p285 = pneg %p142
        %p286 = pneg %p139
        %s287 = sand.u32 %s129, 1
        %s288 = scalar_lea.sflag [#allocation4], %s287
        %s289 = sand.u32 %s129, 1
        %s290 = smul.addr %s289, 128
        %s291 = scalar_lea.vmem [#allocation8], %s290
        %v292 = vld [vmem:[%s241] sm:$0xff]
        %v293 = vld [vmem:[%s241 + $0x8] sm:$0xff]
        %v294 = vld [vmem:[%s241 + $0x10] sm:$0xff]
        %v295 = vld [vmem:[%s241 + $0x18] sm:$0xff]
        %v296 = vld [vmem:[%s241 + $0x20] sm:$0xff]
        %v297 = vld [vmem:[%s241 + $0x28] sm:$0xff]
        %v298 = vld [vmem:[%s241 + $0x30] sm:$0xff]
        %v299 = vld [vmem:[%s241 + $0x38] sm:$0xff]
        %v300 = vld [vmem:[%s241 + $0x40] sm:$0xff]
        %v301 = vld [vmem:[%s241 + $0x48] sm:$0xff]
        %v302 = vld [vmem:[%s241 + $0x50] sm:$0xff]
        %v303 = vld [vmem:[%s241 + $0x58] sm:$0xff]
        %v304 = vld [vmem:[%s241 + $0x60] sm:$0xff]
        %v305 = vld [vmem:[%s241 + $0x68] sm:$0xff]
        %v306 = vld [vmem:[%s241 + $0x70] sm:$0xff]
        %v307 = vld [vmem:[%s241 + $0x78] sm:$0xff]
        %v308 = vcombine.low %v292, %v296
        %v309 = vcombine.high %v292, %v296
        %v311 = vunpack.c.l.s4 1983009808
        %v312 = vunpack.c.0.s8 %v311
        %v313 = vlaneseq
        %v314 = vshrl.u32 %v313, 7
        %v315 = vsub.s32 %v312, %v314
        %v316 = vrot.slane %v308, %v315
        %v318 = vunpack.c.l.s4 1983009808
        %v319 = vunpack.c.0.s8 %v318
        %v320 = vlaneseq
        %v321 = vshrl.u32 %v320, 7
        %v322 = vsub.s32 %v319, %v321
        %v323 = vrot.slane %v309, %v322
        %v324 = vcombine.low %v294, %v298
        %v325 = vcombine.high %v294, %v298
        %v327 = vunpack.c.l.s4 1983009808
        %v328 = vunpack.c.0.s8 %v327
        %v329 = vlaneseq
        %v330 = vshrl.u32 %v329, 7
        %v331 = vsub.s32 %v328, %v330
        %v332 = vrot.slane %v324, %v331
        %v334 = vunpack.c.l.s4 1983009808
        %v335 = vunpack.c.0.s8 %v334
        %v336 = vlaneseq
        %v337 = vshrl.u32 %v336, 7
        %v338 = vsub.s32 %v335, %v337
        %v339 = vrot.slane %v325, %v338
        %v340 = vcombine.low %v300, %v304
        %v341 = vcombine.high %v300, %v304
        %v343 = vunpack.c.l.s4 1983009808
        %v344 = vunpack.c.0.s8 %v343
        %v345 = vlaneseq
        %v346 = vshrl.u32 %v345, 7
        %v347 = vsub.s32 %v344, %v346
        %v348 = vrot.slane %v340, %v347
        %v350 = vunpack.c.l.s4 1983009808
        %v351 = vunpack.c.0.s8 %v350
        %v352 = vlaneseq
        %v353 = vshrl.u32 %v352, 7
        %v354 = vsub.s32 %v351, %v353
        %v355 = vrot.slane %v341, %v354
        %v356 = vcombine.low %v302, %v306
        %v357 = vcombine.high %v302, %v306
        %v359 = vunpack.c.l.s4 1983009808
        %v360 = vunpack.c.0.s8 %v359
        %v361 = vlaneseq
        %v362 = vshrl.u32 %v361, 7
        %v363 = vsub.s32 %v360, %v362
        %v364 = vrot.slane %v356, %v363
        %v366 = vunpack.c.l.s4 1983009808
        %v367 = vunpack.c.0.s8 %v366
        %v368 = vlaneseq
        %v369 = vshrl.u32 %v368, 7
        %v370 = vsub.s32 %v367, %v369
        %v371 = vrot.slane %v357, %v370
        %v372 = vcombine.low %v316, %v332
        %v373 = vcombine.high %v316, %v332
        %v375 = vunpack.c.l.s4 1934713408
        %v376 = vunpack.c.0.s8 %v375
        %v377 = vlaneseq
        %v378 = vshrl.u32 %v377, 7
        %v379 = vsub.s32 %v376, %v378
        %v380 = vrot.slane %v372, %v379
        %v382 = vunpack.c.l.s4 1934713408
        %v383 = vunpack.c.0.s8 %v382
        %v384 = vlaneseq
        %v385 = vshrl.u32 %v384, 7
        %v386 = vsub.s32 %v383, %v385
        %v387 = vrot.slane %v373, %v386
        %v388 = vcombine.low %v323, %v339
        %v389 = vcombine.high %v323, %v339
        %v391 = vunpack.c.l.s4 1934713408
        %v392 = vunpack.c.0.s8 %v391
        %v393 = vlaneseq
        %v394 = vshrl.u32 %v393, 7
        %v395 = vsub.s32 %v392, %v394
        %v396 = vrot.slane %v388, %v395
        %v398 = vunpack.c.l.s4 1934713408
        %v399 = vunpack.c.0.s8 %v398
        %v400 = vlaneseq
        %v401 = vshrl.u32 %v400, 7
        %v402 = vsub.s32 %v399, %v401
        %v403 = vrot.slane %v389, %v402
        %v404 = vcombine.low %v348, %v364
        %v405 = vcombine.high %v348, %v364
        %v407 = vunpack.c.l.s4 1934713408
        %v408 = vunpack.c.0.s8 %v407
        %v409 = vlaneseq
        %v410 = vshrl.u32 %v409, 7
        %v411 = vsub.s32 %v408, %v410
        %v412 = vrot.slane %v404, %v411
        %v414 = vunpack.c.l.s4 1934713408
        %v415 = vunpack.c.0.s8 %v414
        %v416 = vlaneseq
        %v417 = vshrl.u32 %v416, 7
        %v418 = vsub.s32 %v415, %v417
        %v419 = vrot.slane %v405, %v418
        %v420 = vcombine.low %v355, %v371
        %v421 = vcombine.high %v355, %v371
        %v423 = vunpack.c.l.s4 1934713408
        %v424 = vunpack.c.0.s8 %v423
        %v425 = vlaneseq
        %v426 = vshrl.u32 %v425, 7
        %v427 = vsub.s32 %v424, %v426
        %v428 = vrot.slane %v420, %v427
        %v430 = vunpack.c.l.s4 1934713408
        %v431 = vunpack.c.0.s8 %v430
        %v432 = vlaneseq
        %v433 = vshrl.u32 %v432, 7
        %v434 = vsub.s32 %v431, %v433
        %v435 = vrot.slane %v421, %v434
        %v436 = vcombine.low %v380, %v412
        %v437 = vcombine.high %v380, %v412
        %v438 = vcombine.low %v387, %v419
        %v439 = vcombine.high %v387, %v419
        %v440 = vcombine.low %v396, %v428
        %v441 = vcombine.high %v396, %v428
        %v442 = vcombine.low %v403, %v435
        %v443 = vcombine.high %v403, %v435
        %v444 = vcombine.low %v293, %v297
        %v445 = vcombine.high %v293, %v297
        %v447 = vunpack.c.l.s4 1983009808
        %v448 = vunpack.c.0.s8 %v447
        %v449 = vlaneseq
        %v450 = vshrl.u32 %v449, 7
        %v451 = vsub.s32 %v448, %v450
        %v452 = vrot.slane %v444, %v451
        %v454 = vunpack.c.l.s4 1983009808
        %v455 = vunpack.c.0.s8 %v454
        %v456 = vlaneseq
        %v457 = vshrl.u32 %v456, 7
        %v458 = vsub.s32 %v455, %v457
        %v459 = vrot.slane %v445, %v458
        %v460 = vcombine.low %v295, %v299
        %v461 = vcombine.high %v295, %v299
        %v463 = vunpack.c.l.s4 1983009808
        %v464 = vunpack.c.0.s8 %v463
        %v465 = vlaneseq
        %v466 = vshrl.u32 %v465, 7
        %v467 = vsub.s32 %v464, %v466
        %v468 = vrot.slane %v460, %v467
        %v470 = vunpack.c.l.s4 1983009808
        %v471 = vunpack.c.0.s8 %v470
        %v472 = vlaneseq
        %v473 = vshrl.u32 %v472, 7
        %v474 = vsub.s32 %v471, %v473
        %v475 = vrot.slane %v461, %v474
        %v476 = vcombine.low %v301, %v305
        %v477 = vcombine.high %v301, %v305
        %v479 = vunpack.c.l.s4 1983009808
        %v480 = vunpack.c.0.s8 %v479
        %v481 = vlaneseq
        %v482 = vshrl.u32 %v481, 7
        %v483 = vsub.s32 %v480, %v482
        %v484 = vrot.slane %v476, %v483
        %v486 = vunpack.c.l.s4 1983009808
        %v487 = vunpack.c.0.s8 %v486
        %v488 = vlaneseq
        %v489 = vshrl.u32 %v488, 7
        %v490 = vsub.s32 %v487, %v489
        %v491 = vrot.slane %v477, %v490
        %v492 = vcombine.low %v303, %v307
        %v493 = vcombine.high %v303, %v307
        %v495 = vunpack.c.l.s4 1983009808
        %v496 = vunpack.c.0.s8 %v495
        %v497 = vlaneseq
        %v498 = vshrl.u32 %v497, 7
        %v499 = vsub.s32 %v496, %v498
        %v500 = vrot.slane %v492, %v499
        %v502 = vunpack.c.l.s4 1983009808
        %v503 = vunpack.c.0.s8 %v502
        %v504 = vlaneseq
        %v505 = vshrl.u32 %v504, 7
        %v506 = vsub.s32 %v503, %v505
        %v507 = vrot.slane %v493, %v506
        %v508 = vcombine.low %v452, %v468
        %v509 = vcombine.high %v452, %v468
        %v511 = vunpack.c.l.s4 1934713408
        %v512 = vunpack.c.0.s8 %v511
        %v513 = vlaneseq
        %v514 = vshrl.u32 %v513, 7
        %v515 = vsub.s32 %v512, %v514
        %v516 = vrot.slane %v508, %v515
        %v518 = vunpack.c.l.s4 1934713408
        %v519 = vunpack.c.0.s8 %v518
        %v520 = vlaneseq
        %v521 = vshrl.u32 %v520, 7
        %v522 = vsub.s32 %v519, %v521
        %v523 = vrot.slane %v509, %v522
        %v524 = vcombine.low %v459, %v475
        %v525 = vcombine.high %v459, %v475
        %v527 = vunpack.c.l.s4 1934713408
        %v528 = vunpack.c.0.s8 %v527
        %v529 = vlaneseq
        %v530 = vshrl.u32 %v529, 7
        %v531 = vsub.s32 %v528, %v530
        %v532 = vrot.slane %v524, %v531
        %v534 = vunpack.c.l.s4 1934713408
        %v535 = vunpack.c.0.s8 %v534
        %v536 = vlaneseq
        %v537 = vshrl.u32 %v536, 7
        %v538 = vsub.s32 %v535, %v537
        %v539 = vrot.slane %v525, %v538
        %v540 = vcombine.low %v484, %v500
        %v541 = vcombine.high %v484, %v500
        %v543 = vunpack.c.l.s4 1934713408
        %v544 = vunpack.c.0.s8 %v543
        %v545 = vlaneseq
        %v546 = vshrl.u32 %v545, 7
        %v547 = vsub.s32 %v544, %v546
        %v548 = vrot.slane %v540, %v547
        %v550 = vunpack.c.l.s4 1934713408
        %v551 = vunpack.c.0.s8 %v550
        %v552 = vlaneseq
        %v553 = vshrl.u32 %v552, 7
        %v554 = vsub.s32 %v551, %v553
        %v555 = vrot.slane %v541, %v554
        %v556 = vcombine.low %v491, %v507
        %v557 = vcombine.high %v491, %v507
        %v559 = vunpack.c.l.s4 1934713408
        %v560 = vunpack.c.0.s8 %v559
        %v561 = vlaneseq
        %v562 = vshrl.u32 %v561, 7
        %v563 = vsub.s32 %v560, %v562
        %v564 = vrot.slane %v556, %v563
        %v566 = vunpack.c.l.s4 1934713408
        %v567 = vunpack.c.0.s8 %v566
        %v568 = vlaneseq
        %v569 = vshrl.u32 %v568, 7
        %v570 = vsub.s32 %v567, %v569
        %v571 = vrot.slane %v557, %v570
        %v572 = vcombine.low %v516, %v548
        %v573 = vcombine.high %v516, %v548
        %v574 = vcombine.low %v523, %v555
        %v575 = vcombine.high %v523, %v555
        %v576 = vcombine.low %v532, %v564
        %v577 = vcombine.high %v532, %v564
        %v578 = vcombine.low %v539, %v571
        %v579 = vcombine.high %v539, %v571
        %v580 = vld [vmem:[%s250] sm:$0xff]
        %v581 = vld [vmem:[%s250 + $0x8] sm:$0xff]
        %v582 = vld [vmem:[%s250 + $0x10] sm:$0xff]
        %v583 = vld [vmem:[%s250 + $0x18] sm:$0xff]
        %v584 = vld [vmem:[%s250 + $0x20] sm:$0xff]
        %v585 = vld [vmem:[%s250 + $0x28] sm:$0xff]
        %v586 = vld [vmem:[%s250 + $0x30] sm:$0xff]
        %v587 = vld [vmem:[%s250 + $0x38] sm:$0xff]
        %v588 = vld [vmem:[%s250 + $0x40] sm:$0xff]
        %v589 = vld [vmem:[%s250 + $0x48] sm:$0xff]
        %v590 = vld [vmem:[%s250 + $0x50] sm:$0xff]
        %v591 = vld [vmem:[%s250 + $0x58] sm:$0xff]
        %v592 = vld [vmem:[%s250 + $0x60] sm:$0xff]
        %v593 = vld [vmem:[%s250 + $0x68] sm:$0xff]
        %v594 = vld [vmem:[%s250 + $0x70] sm:$0xff]
        %v595 = vld [vmem:[%s250 + $0x78] sm:$0xff]
        %v596 = vcombine.low %v580, %v584
        %v597 = vcombine.high %v580, %v584
        %v599 = vunpack.c.l.s4 1983009808
        %v600 = vunpack.c.0.s8 %v599
        %v601 = vlaneseq
        %v602 = vshrl.u32 %v601, 7
        %v603 = vsub.s32 %v600, %v602
        %v604 = vrot.slane %v596, %v603
        %v606 = vunpack.c.l.s4 1983009808
        %v607 = vunpack.c.0.s8 %v606
        %v608 = vlaneseq
        %v609 = vshrl.u32 %v608, 7
        %v610 = vsub.s32 %v607, %v609
        %v611 = vrot.slane %v597, %v610
        %v612 = vcombine.low %v582, %v586
        %v613 = vcombine.high %v582, %v586
        %v615 = vunpack.c.l.s4 1983009808
        %v616 = vunpack.c.0.s8 %v615
        %v617 = vlaneseq
        %v618 = vshrl.u32 %v617, 7
        %v619 = vsub.s32 %v616, %v618
        %v620 = vrot.slane %v612, %v619
        %v622 = vunpack.c.l.s4 1983009808
        %v623 = vunpack.c.0.s8 %v622
        %v624 = vlaneseq
        %v625 = vshrl.u32 %v624, 7
        %v626 = vsub.s32 %v623, %v625
        %v627 = vrot.slane %v613, %v626
        %v628 = vcombine.low %v588, %v592
        %v629 = vcombine.high %v588, %v592
        %v631 = vunpack.c.l.s4 1983009808
        %v632 = vunpack.c.0.s8 %v631
        %v633 = vlaneseq
        %v634 = vshrl.u32 %v633, 7
        %v635 = vsub.s32 %v632, %v634
        %v636 = vrot.slane %v628, %v635
        %v638 = vunpack.c.l.s4 1983009808
        %v639 = vunpack.c.0.s8 %v638
        %v640 = vlaneseq
        %v641 = vshrl.u32 %v640, 7
        %v642 = vsub.s32 %v639, %v641
        %v643 = vrot.slane %v629, %v642
        %v644 = vcombine.low %v590, %v594
        %v645 = vcombine.high %v590, %v594
        %v647 = vunpack.c.l.s4 1983009808
        %v648 = vunpack.c.0.s8 %v647
        %v649 = vlaneseq
        %v650 = vshrl.u32 %v649, 7
        %v651 = vsub.s32 %v648, %v650
        %v652 = vrot.slane %v644, %v651
        %v654 = vunpack.c.l.s4 1983009808
        %v655 = vunpack.c.0.s8 %v654
        %v656 = vlaneseq
        %v657 = vshrl.u32 %v656, 7
        %v658 = vsub.s32 %v655, %v657
        %v659 = vrot.slane %v645, %v658
        %v660 = vcombine.low %v604, %v620
        %v661 = vcombine.high %v604, %v620
        %v663 = vunpack.c.l.s4 1934713408
        %v664 = vunpack.c.0.s8 %v663
        %v665 = vlaneseq
        %v666 = vshrl.u32 %v665, 7
        %v667 = vsub.s32 %v664, %v666
        %v668 = vrot.slane %v660, %v667
        %v670 = vunpack.c.l.s4 1934713408
        %v671 = vunpack.c.0.s8 %v670
        %v672 = vlaneseq
        %v673 = vshrl.u32 %v672, 7
        %v674 = vsub.s32 %v671, %v673
        %v675 = vrot.slane %v661, %v674
        %v676 = vcombine.low %v611, %v627
        %v677 = vcombine.high %v611, %v627
        %v679 = vunpack.c.l.s4 1934713408
        %v680 = vunpack.c.0.s8 %v679
        %v681 = vlaneseq
        %v682 = vshrl.u32 %v681, 7
        %v683 = vsub.s32 %v680, %v682
        %v684 = vrot.slane %v676, %v683
        %v686 = vunpack.c.l.s4 1934713408
        %v687 = vunpack.c.0.s8 %v686
        %v688 = vlaneseq
        %v689 = vshrl.u32 %v688, 7
        %v690 = vsub.s32 %v687, %v689
        %v691 = vrot.slane %v677, %v690
        %v692 = vcombine.low %v636, %v652
        %v693 = vcombine.high %v636, %v652
        %v695 = vunpack.c.l.s4 1934713408
        %v696 = vunpack.c.0.s8 %v695
        %v697 = vlaneseq
        %v698 = vshrl.u32 %v697, 7
        %v699 = vsub.s32 %v696, %v698
        %v700 = vrot.slane %v692, %v699
        %v702 = vunpack.c.l.s4 1934713408
        %v703 = vunpack.c.0.s8 %v702
        %v704 = vlaneseq
        %v705 = vshrl.u32 %v704, 7
        %v706 = vsub.s32 %v703, %v705
        %v707 = vrot.slane %v693, %v706
        %v708 = vcombine.low %v643, %v659
        %v709 = vcombine.high %v643, %v659
        %v711 = vunpack.c.l.s4 1934713408
        %v712 = vunpack.c.0.s8 %v711
        %v713 = vlaneseq
        %v714 = vshrl.u32 %v713, 7
        %v715 = vsub.s32 %v712, %v714
        %v716 = vrot.slane %v708, %v715
        %v718 = vunpack.c.l.s4 1934713408
        %v719 = vunpack.c.0.s8 %v718
        %v720 = vlaneseq
        %v721 = vshrl.u32 %v720, 7
        %v722 = vsub.s32 %v719, %v721
        %v723 = vrot.slane %v709, %v722
        %v724 = vcombine.low %v668, %v700
        %v725 = vcombine.high %v668, %v700
        %v726 = vcombine.low %v675, %v707
        %v727 = vcombine.high %v675, %v707
        %v728 = vcombine.low %v684, %v716
        %v729 = vcombine.high %v684, %v716
        %v730 = vcombine.low %v691, %v723
        %v731 = vcombine.high %v691, %v723
        %v732 = vcombine.low %v581, %v585
        %v733 = vcombine.high %v581, %v585
        %v735 = vunpack.c.l.s4 1983009808
        %v736 = vunpack.c.0.s8 %v735
        %v737 = vlaneseq
        %v738 = vshrl.u32 %v737, 7
        %v739 = vsub.s32 %v736, %v738
        %v740 = vrot.slane %v732, %v739
        %v742 = vunpack.c.l.s4 1983009808
        %v743 = vunpack.c.0.s8 %v742
        %v744 = vlaneseq
        %v745 = vshrl.u32 %v744, 7
        %v746 = vsub.s32 %v743, %v745
        %v747 = vrot.slane %v733, %v746
        %v748 = vcombine.low %v583, %v587
        %v749 = vcombine.high %v583, %v587
        %v751 = vunpack.c.l.s4 1983009808
        %v752 = vunpack.c.0.s8 %v751
        %v753 = vlaneseq
        %v754 = vshrl.u32 %v753, 7
        %v755 = vsub.s32 %v752, %v754
        %v756 = vrot.slane %v748, %v755
        %v758 = vunpack.c.l.s4 1983009808
        %v759 = vunpack.c.0.s8 %v758
        %v760 = vlaneseq
        %v761 = vshrl.u32 %v760, 7
        %v762 = vsub.s32 %v759, %v761
        %v763 = vrot.slane %v749, %v762
        %v764 = vcombine.low %v589, %v593
        %v765 = vcombine.high %v589, %v593
        %v767 = vunpack.c.l.s4 1983009808
        %v768 = vunpack.c.0.s8 %v767
        %v769 = vlaneseq
        %v770 = vshrl.u32 %v769, 7
        %v771 = vsub.s32 %v768, %v770
        %v772 = vrot.slane %v764, %v771
        %v774 = vunpack.c.l.s4 1983009808
        %v775 = vunpack.c.0.s8 %v774
        %v776 = vlaneseq
        %v777 = vshrl.u32 %v776, 7
        %v778 = vsub.s32 %v775, %v777
        %v779 = vrot.slane %v765, %v778
        %v780 = vcombine.low %v591, %v595
        %v781 = vcombine.high %v591, %v595
        %v783 = vunpack.c.l.s4 1983009808
        %v784 = vunpack.c.0.s8 %v783
        %v785 = vlaneseq
        %v786 = vshrl.u32 %v785, 7
        %v787 = vsub.s32 %v784, %v786
        %v788 = vrot.slane %v780, %v787
        %v790 = vunpack.c.l.s4 1983009808
        %v791 = vunpack.c.0.s8 %v790
        %v792 = vlaneseq
        %v793 = vshrl.u32 %v792, 7
        %v794 = vsub.s32 %v791, %v793
        %v795 = vrot.slane %v781, %v794
        %v796 = vcombine.low %v740, %v756
        %v797 = vcombine.high %v740, %v756
        %v799 = vunpack.c.l.s4 1934713408
        %v800 = vunpack.c.0.s8 %v799
        %v801 = vlaneseq
        %v802 = vshrl.u32 %v801, 7
        %v803 = vsub.s32 %v800, %v802
        %v804 = vrot.slane %v796, %v803
        %v806 = vunpack.c.l.s4 1934713408
        %v807 = vunpack.c.0.s8 %v806
        %v808 = vlaneseq
        %v809 = vshrl.u32 %v808, 7
        %v810 = vsub.s32 %v807, %v809
        %v811 = vrot.slane %v797, %v810
        %v812 = vcombine.low %v747, %v763
        %v813 = vcombine.high %v747, %v763
        %v815 = vunpack.c.l.s4 1934713408
        %v816 = vunpack.c.0.s8 %v815
        %v817 = vlaneseq
        %v818 = vshrl.u32 %v817, 7
        %v819 = vsub.s32 %v816, %v818
        %v820 = vrot.slane %v812, %v819
        %v822 = vunpack.c.l.s4 1934713408
        %v823 = vunpack.c.0.s8 %v822
        %v824 = vlaneseq
        %v825 = vshrl.u32 %v824, 7
        %v826 = vsub.s32 %v823, %v825
        %v827 = vrot.slane %v813, %v826
        %v828 = vcombine.low %v772, %v788
        %v829 = vcombine.high %v772, %v788
        %v831 = vunpack.c.l.s4 1934713408
        %v832 = vunpack.c.0.s8 %v831
        %v833 = vlaneseq
        %v834 = vshrl.u32 %v833, 7
        %v835 = vsub.s32 %v832, %v834
        %v836 = vrot.slane %v828, %v835
        %v838 = vunpack.c.l.s4 1934713408
        %v839 = vunpack.c.0.s8 %v838
        %v840 = vlaneseq
        %v841 = vshrl.u32 %v840, 7
        %v842 = vsub.s32 %v839, %v841
        %v843 = vrot.slane %v829, %v842
        %v844 = vcombine.low %v779, %v795
        %v845 = vcombine.high %v779, %v795
        %v847 = vunpack.c.l.s4 1934713408
        %v848 = vunpack.c.0.s8 %v847
        %v849 = vlaneseq
        %v850 = vshrl.u32 %v849, 7
        %v851 = vsub.s32 %v848, %v850
        %v852 = vrot.slane %v844, %v851
        %v854 = vunpack.c.l.s4 1934713408
        %v855 = vunpack.c.0.s8 %v854
        %v856 = vlaneseq
        %v857 = vshrl.u32 %v856, 7
        %v858 = vsub.s32 %v855, %v857
        %v859 = vrot.slane %v845, %v858
        %v860 = vcombine.low %v804, %v836
        %v861 = vcombine.high %v804, %v836
        %v862 = vcombine.low %v811, %v843
        %v863 = vcombine.high %v811, %v843
        %v864 = vcombine.low %v820, %v852
        %v865 = vcombine.high %v820, %v852
        %v866 = vcombine.low %v827, %v859
        %v867 = vcombine.high %v827, %v859
        %v868 = vld [vmem:[%s259] sm:$0xff]
        %v869 = vld [vmem:[%s259 + $0x8] sm:$0xff]
        %v870 = vld [vmem:[%s259 + $0x10] sm:$0xff]
        %v871 = vld [vmem:[%s259 + $0x18] sm:$0xff]
        %v872 = vld [vmem:[%s259 + $0x20] sm:$0xff]
        %v873 = vld [vmem:[%s259 + $0x28] sm:$0xff]
        %v874 = vld [vmem:[%s259 + $0x30] sm:$0xff]
        %v875 = vld [vmem:[%s259 + $0x38] sm:$0xff]
        %v876 = vld [vmem:[%s259 + $0x40] sm:$0xff]
        %v877 = vld [vmem:[%s259 + $0x48] sm:$0xff]
        %v878 = vld [vmem:[%s259 + $0x50] sm:$0xff]
        %v879 = vld [vmem:[%s259 + $0x58] sm:$0xff]
        %v880 = vld [vmem:[%s259 + $0x60] sm:$0xff]
        %v881 = vld [vmem:[%s259 + $0x68] sm:$0xff]
        %v882 = vld [vmem:[%s259 + $0x70] sm:$0xff]
        %v883 = vld [vmem:[%s259 + $0x78] sm:$0xff]
        %v884 = vcombine.low %v868, %v872
        %v885 = vcombine.high %v868, %v872
        %v887 = vunpack.c.l.s4 1983009808
        %v888 = vunpack.c.0.s8 %v887
        %v889 = vlaneseq
        %v890 = vshrl.u32 %v889, 7
        %v891 = vsub.s32 %v888, %v890
        %v892 = vrot.slane %v884, %v891
        %v894 = vunpack.c.l.s4 1983009808
        %v895 = vunpack.c.0.s8 %v894
        %v896 = vlaneseq
        %v897 = vshrl.u32 %v896, 7
        %v898 = vsub.s32 %v895, %v897
        %v899 = vrot.slane %v885, %v898
        %v900 = vcombine.low %v870, %v874
        %v901 = vcombine.high %v870, %v874
        %v903 = vunpack.c.l.s4 1983009808
        %v904 = vunpack.c.0.s8 %v903
        %v905 = vlaneseq
        %v906 = vshrl.u32 %v905, 7
        %v907 = vsub.s32 %v904, %v906
        %v908 = vrot.slane %v900, %v907
        %v910 = vunpack.c.l.s4 1983009808
        %v911 = vunpack.c.0.s8 %v910
        %v912 = vlaneseq
        %v913 = vshrl.u32 %v912, 7
        %v914 = vsub.s32 %v911, %v913
        %v915 = vrot.slane %v901, %v914
        %v916 = vcombine.low %v876, %v880
        %v917 = vcombine.high %v876, %v880
        %v919 = vunpack.c.l.s4 1983009808
        %v920 = vunpack.c.0.s8 %v919
        %v921 = vlaneseq
        %v922 = vshrl.u32 %v921, 7
        %v923 = vsub.s32 %v920, %v922
        %v924 = vrot.slane %v916, %v923
        %v926 = vunpack.c.l.s4 1983009808
        %v927 = vunpack.c.0.s8 %v926
        %v928 = vlaneseq
        %v929 = vshrl.u32 %v928, 7
        %v930 = vsub.s32 %v927, %v929
        %v931 = vrot.slane %v917, %v930
        %v932 = vcombine.low %v878, %v882
        %v933 = vcombine.high %v878, %v882
        %v935 = vunpack.c.l.s4 1983009808
        %v936 = vunpack.c.0.s8 %v935
        %v937 = vlaneseq
        %v938 = vshrl.u32 %v937, 7
        %v939 = vsub.s32 %v936, %v938
        %v940 = vrot.slane %v932, %v939
        %v942 = vunpack.c.l.s4 1983009808
        %v943 = vunpack.c.0.s8 %v942
        %v944 = vlaneseq
        %v945 = vshrl.u32 %v944, 7
        %v946 = vsub.s32 %v943, %v945
        %v947 = vrot.slane %v933, %v946
        %v948 = vcombine.low %v892, %v908
        %v949 = vcombine.high %v892, %v908
        %v951 = vunpack.c.l.s4 1934713408
        %v952 = vunpack.c.0.s8 %v951
        %v953 = vlaneseq
        %v954 = vshrl.u32 %v953, 7
        %v955 = vsub.s32 %v952, %v954
        %v956 = vrot.slane %v948, %v955
        %v958 = vunpack.c.l.s4 1934713408
        %v959 = vunpack.c.0.s8 %v958
        %v960 = vlaneseq
        %v961 = vshrl.u32 %v960, 7
        %v962 = vsub.s32 %v959, %v961
        %v963 = vrot.slane %v949, %v962
        %v964 = vcombine.low %v899, %v915
        %v965 = vcombine.high %v899, %v915
        %v967 = vunpack.c.l.s4 1934713408
        %v968 = vunpack.c.0.s8 %v967
        %v969 = vlaneseq
        %v970 = vshrl.u32 %v969, 7
        %v971 = vsub.s32 %v968, %v970
        %v972 = vrot.slane %v964, %v971
        %v974 = vunpack.c.l.s4 1934713408
        %v975 = vunpack.c.0.s8 %v974
        %v976 = vlaneseq
        %v977 = vshrl.u32 %v976, 7
        %v978 = vsub.s32 %v975, %v977
        %v979 = vrot.slane %v965, %v978
        %v980 = vcombine.low %v924, %v940
        %v981 = vcombine.high %v924, %v940
        %v983 = vunpack.c.l.s4 1934713408
        %v984 = vunpack.c.0.s8 %v983
        %v985 = vlaneseq
        %v986 = vshrl.u32 %v985, 7
        %v987 = vsub.s32 %v984, %v986
        %v988 = vrot.slane %v980, %v987
        %v990 = vunpack.c.l.s4 1934713408
        %v991 = vunpack.c.0.s8 %v990
        %v992 = vlaneseq
        %v993 = vshrl.u32 %v992, 7
        %v994 = vsub.s32 %v991, %v993
        %v995 = vrot.slane %v981, %v994
        %v996 = vcombine.low %v931, %v947
        %v997 = vcombine.high %v931, %v947
        %v999 = vunpack.c.l.s4 1934713408
        %v1000 = vunpack.c.0.s8 %v999
        %v1001 = vlaneseq
        %v1002 = vshrl.u32 %v1001, 7
        %v1003 = vsub.s32 %v1000, %v1002
        %v1004 = vrot.slane %v996, %v1003
        %v1006 = vunpack.c.l.s4 1934713408
        %v1007 = vunpack.c.0.s8 %v1006
        %v1008 = vlaneseq
        %v1009 = vshrl.u32 %v1008, 7
        %v1010 = vsub.s32 %v1007, %v1009
        %v1011 = vrot.slane %v997, %v1010
        %v1012 = vcombine.low %v956, %v988
        %v1013 = vcombine.high %v956, %v988
        %v1014 = vcombine.low %v963, %v995
        %v1015 = vcombine.high %v963, %v995
        %v1016 = vcombine.low %v972, %v1004
        %v1017 = vcombine.high %v972, %v1004
        %v1018 = vcombine.low %v979, %v1011
        %v1019 = vcombine.high %v979, %v1011
        %v1020 = vcombine.low %v869, %v873
        %v1021 = vcombine.high %v869, %v873
        %v1023 = vunpack.c.l.s4 1983009808
        %v1024 = vunpack.c.0.s8 %v1023
        %v1025 = vlaneseq
        %v1026 = vshrl.u32 %v1025, 7
        %v1027 = vsub.s32 %v1024, %v1026
        %v1028 = vrot.slane %v1020, %v1027
        %v1030 = vunpack.c.l.s4 1983009808
        %v1031 = vunpack.c.0.s8 %v1030
        %v1032 = vlaneseq
        %v1033 = vshrl.u32 %v1032, 7
        %v1034 = vsub.s32 %v1031, %v1033
        %v1035 = vrot.slane %v1021, %v1034
        %v1036 = vcombine.low %v871, %v875
        %v1037 = vcombine.high %v871, %v875
        %v1039 = vunpack.c.l.s4 1983009808
        %v1040 = vunpack.c.0.s8 %v1039
        %v1041 = vlaneseq
        %v1042 = vshrl.u32 %v1041, 7
        %v1043 = vsub.s32 %v1040, %v1042
        %v1044 = vrot.slane %v1036, %v1043
        %v1046 = vunpack.c.l.s4 1983009808
        %v1047 = vunpack.c.0.s8 %v1046
        %v1048 = vlaneseq
        %v1049 = vshrl.u32 %v1048, 7
        %v1050 = vsub.s32 %v1047, %v1049
        %v1051 = vrot.slane %v1037, %v1050
        %v1052 = vcombine.low %v877, %v881
        %v1053 = vcombine.high %v877, %v881
        %v1055 = vunpack.c.l.s4 1983009808
        %v1056 = vunpack.c.0.s8 %v1055
        %v1057 = vlaneseq
        %v1058 = vshrl.u32 %v1057, 7
        %v1059 = vsub.s32 %v1056, %v1058
        %v1060 = vrot.slane %v1052, %v1059
        %v1062 = vunpack.c.l.s4 1983009808
        %v1063 = vunpack.c.0.s8 %v1062
        %v1064 = vlaneseq
        %v1065 = vshrl.u32 %v1064, 7
        %v1066 = vsub.s32 %v1063, %v1065
        %v1067 = vrot.slane %v1053, %v1066
        %v1068 = vcombine.low %v879, %v883
        %v1069 = vcombine.high %v879, %v883
        %v1071 = vunpack.c.l.s4 1983009808
        %v1072 = vunpack.c.0.s8 %v1071
        %v1073 = vlaneseq
        %v1074 = vshrl.u32 %v1073, 7
        %v1075 = vsub.s32 %v1072, %v1074
        %v1076 = vrot.slane %v1068, %v1075
        %v1078 = vunpack.c.l.s4 1983009808
        %v1079 = vunpack.c.0.s8 %v1078
        %v1080 = vlaneseq
        %v1081 = vshrl.u32 %v1080, 7
        %v1082 = vsub.s32 %v1079, %v1081
        %v1083 = vrot.slane %v1069, %v1082
        %v1084 = vcombine.low %v1028, %v1044
        %v1085 = vcombine.high %v1028, %v1044
        %v1087 = vunpack.c.l.s4 1934713408
        %v1088 = vunpack.c.0.s8 %v1087
        %v1089 = vlaneseq
        %v1090 = vshrl.u32 %v1089, 7
        %v1091 = vsub.s32 %v1088, %v1090
        %v1092 = vrot.slane %v1084, %v1091
        %v1094 = vunpack.c.l.s4 1934713408
        %v1095 = vunpack.c.0.s8 %v1094
        %v1096 = vlaneseq
        %v1097 = vshrl.u32 %v1096, 7
        %v1098 = vsub.s32 %v1095, %v1097
        %v1099 = vrot.slane %v1085, %v1098
        %v1100 = vcombine.low %v1035, %v1051
        %v1101 = vcombine.high %v1035, %v1051
        %v1103 = vunpack.c.l.s4 1934713408
        %v1104 = vunpack.c.0.s8 %v1103
        %v1105 = vlaneseq
        %v1106 = vshrl.u32 %v1105, 7
        %v1107 = vsub.s32 %v1104, %v1106
        %v1108 = vrot.slane %v1100, %v1107
        %v1110 = vunpack.c.l.s4 1934713408
        %v1111 = vunpack.c.0.s8 %v1110
        %v1112 = vlaneseq
        %v1113 = vshrl.u32 %v1112, 7
        %v1114 = vsub.s32 %v1111, %v1113
        %v1115 = vrot.slane %v1101, %v1114
        %v1116 = vcombine.low %v1060, %v1076
        %v1117 = vcombine.high %v1060, %v1076
        %v1119 = vunpack.c.l.s4 1934713408
        %v1120 = vunpack.c.0.s8 %v1119
        %v1121 = vlaneseq
        %v1122 = vshrl.u32 %v1121, 7
        %v1123 = vsub.s32 %v1120, %v1122
        %v1124 = vrot.slane %v1116, %v1123
        %v1126 = vunpack.c.l.s4 1934713408
        %v1127 = vunpack.c.0.s8 %v1126
        %v1128 = vlaneseq
        %v1129 = vshrl.u32 %v1128, 7
        %v1130 = vsub.s32 %v1127, %v1129
        %v1131 = vrot.slane %v1117, %v1130
        %v1132 = vcombine.low %v1067, %v1083
        %v1133 = vcombine.high %v1067, %v1083
        %v1135 = vunpack.c.l.s4 1934713408
        %v1136 = vunpack.c.0.s8 %v1135
        %v1137 = vlaneseq
        %v1138 = vshrl.u32 %v1137, 7
        %v1139 = vsub.s32 %v1136, %v1138
        %v1140 = vrot.slane %v1132, %v1139
        %v1142 = vunpack.c.l.s4 1934713408
        %v1143 = vunpack.c.0.s8 %v1142
        %v1144 = vlaneseq
        %v1145 = vshrl.u32 %v1144, 7
        %v1146 = vsub.s32 %v1143, %v1145
        %v1147 = vrot.slane %v1133, %v1146
        %v1148 = vcombine.low %v1092, %v1124
        %v1149 = vcombine.high %v1092, %v1124
        %v1150 = vcombine.low %v1099, %v1131
        %v1151 = vcombine.high %v1099, %v1131
        %v1152 = vcombine.low %v1108, %v1140
        %v1153 = vcombine.high %v1108, %v1140
        %v1154 = vcombine.low %v1115, %v1147
        %v1155 = vcombine.high %v1115, %v1147
        %vm1156 = vcmask 261120
        %v1158 = vsel %vm1156, %v436, 0
        %v1161 = vsel %vm1156, %v724, 0
        %1163 = vmatprep.subr.mxu0 0.0
        %1164 = vmatpush1.xpose.msra.mxu0 0.0
        %1165 = vmatprep.subr.mxu0 0.0
        %1166 = vmatpush1.xpose.msra.mxu0 0.0
        %1167 = vmatprep.subr.mxu0 0.0
        %1168 = vmatpush1.xpose.msra.mxu0 0.0
        %1169 = vmatprep.subr.mxu0 0.0
        %1170 = vmatpush1.xpose.msra.mxu0 0.0
        %1171 = vmatprep.subr.mxu0 0.0
        %1172 = vmatpush1.xpose.msra.mxu0 0.0
        %1173 = vmatprep.subr.mxu0 0.0
        %1174 = vmatpush1.xpose.msra.mxu0 0.0
        %1175 = vmatprep.subr.mxu0 0.0
        %1176 = vmatpush1.xpose.msra.mxu0 0.0
        %1177 = vmatprep.subr.mxu0 0.0
        %1178 = vmatpush1.xpose.msra.mxu0 0.0
        %1179 = vmatprep.subr.mxu0 0.0
        %1180 = vmatpush1.xpose.msra.mxu0 0.0
        %1181 = vmatprep.subr.mxu0 0.0
        %1182 = vmatpush1.xpose.msra.mxu0 0.0
        %1183 = vmatprep.subr.mxu0 0.0
        %1184 = vmatpush1.xpose.msra.mxu0 0.0
        %1185 = vmatprep.subr.mxu0 0.0
        %1186 = vmatpush1.xpose.msra.mxu0 0.0
        %1187 = vmatprep.subr.mxu0 0.0
        %1188 = vmatpush1.xpose.msra.mxu0 0.0
        %1189 = vmatprep.subr.mxu0 0.0
        %1190 = vmatpush1.xpose.msra.mxu0 0.0
        %1191 = vmatprep.subr.mxu0 0.0
        %1192 = vmatpush1.xpose.msra.mxu0 0.0
        %1193 = vmatprep.subr.mxu0 0.0
        %1194 = vmatpush1.xpose.msra.mxu0 %v1161
        %1195 = vmatprep.subr.mxu0 0.0
        %1196 = vmatpush2.xpose.msra.mxu0 0.0
        %1197 = vmatprep.subr.mxu0 0.0
        %1198 = vmatpush2.xpose.msra.mxu0 0.0
        %1199 = vmatprep.subr.mxu0 0.0
        %1200 = vmatpush2.xpose.msra.mxu0 0.0
        %1201 = vmatprep.subr.mxu0 0.0
        %1202 = vmatpush2.xpose.msra.mxu0 0.0
        %1203 = vmatprep.subr.mxu0 0.0
        %1204 = vmatpush2.xpose.msra.mxu0 0.0
        %1205 = vmatprep.subr.mxu0 0.0
        %1206 = vmatpush2.xpose.msra.mxu0 0.0
        %1207 = vmatprep.subr.mxu0 0.0
        %1208 = vmatpush2.xpose.msra.mxu0 0.0
        %1209 = vmatprep.subr.mxu0 0.0
        %1210 = vmatpush2.xpose.msra.mxu0 0.0
        %1211 = vmatprep.subr.mxu0 0.0
        %1212 = vmatpush2.xpose.msra.mxu0 0.0
        %1213 = vmatprep.subr.mxu0 0.0
        %1214 = vmatpush2.xpose.msra.mxu0 0.0
        %1215 = vmatprep.subr.mxu0 0.0
        %1216 = vmatpush2.xpose.msra.mxu0 0.0
        %1217 = vmatprep.subr.mxu0 0.0
        %1218 = vmatpush2.xpose.msra.mxu0 0.0
        %1219 = vmatprep.subr.mxu0 0.0
        %1220 = vmatpush2.xpose.msra.mxu0 0.0
        %1221 = vmatprep.subr.mxu0 0.0
        %1222 = vmatpush2.xpose.msra.mxu0 0.0
        %1223 = vmatprep.subr.mxu0 0.0
        %1224 = vmatpush2.xpose.msra.mxu0 0.0
        %1225 = vmatprep.subr.mxu0 0.0
        %1226 = vmatpush2.xpose.msra.mxu0 0.0
        %1227 = vmatprep.mubr.f32.mxu0 0.0
        %1228 = vmatmul.mubr.f32.gmra.mxu0 %v1158
        %v1229 = vpop.f32.mrf.mxu0
        %v1230 = vadd.f32 0.0, %v1229
        %v1231 = vpop.f32.mrf.mxu0
        %1232 = vdwg.mxu0
        %v1234 = vsel %vm1156, %v437, 0
        %v1237 = vsel %vm1156, %v725, 0
        %1239 = vmatprep.subr.mxu0 0.0
        %1240 = vmatpush1.xpose.msra.mxu0 0.0
        %1241 = vmatprep.subr.mxu0 0.0
        %1242 = vmatpush1.xpose.msra.mxu0 0.0
        %1243 = vmatprep.subr.mxu0 0.0
        %1244 = vmatpush1.xpose.msra.mxu0 0.0
        %1245 = vmatprep.subr.mxu0 0.0
        %1246 = vmatpush1.xpose.msra.mxu0 0.0
        %1247 = vmatprep.subr.mxu0 0.0
        %1248 = vmatpush1.xpose.msra.mxu0 0.0
        %1249 = vmatprep.subr.mxu0 0.0
        %1250 = vmatpush1.xpose.msra.mxu0 0.0
        %1251 = vmatprep.subr.mxu0 0.0
        %1252 = vmatpush1.xpose.msra.mxu0 0.0
        %1253 = vmatprep.subr.mxu0 0.0
        %1254 = vmatpush1.xpose.msra.mxu0 0.0
        %1255 = vmatprep.subr.mxu0 0.0
        %1256 = vmatpush1.xpose.msra.mxu0 0.0
        %1257 = vmatprep.subr.mxu0 0.0
        %1258 = vmatpush1.xpose.msra.mxu0 0.0
        %1259 = vmatprep.subr.mxu0 0.0
        %1260 = vmatpush1.xpose.msra.mxu0 0.0
        %1261 = vmatprep.subr.mxu0 0.0
        %1262 = vmatpush1.xpose.msra.mxu0 0.0
        %1263 = vmatprep.subr.mxu0 0.0
        %1264 = vmatpush1.xpose.msra.mxu0 0.0
        %1265 = vmatprep.subr.mxu0 0.0
        %1266 = vmatpush1.xpose.msra.mxu0 0.0
        %1267 = vmatprep.subr.mxu0 0.0
        %1268 = vmatpush1.xpose.msra.mxu0 0.0
        %1269 = vmatprep.subr.mxu0 0.0
        %1270 = vmatpush1.xpose.msra.mxu0 %v1237
        %1271 = vmatprep.subr.mxu0 0.0
        %1272 = vmatpush2.xpose.msra.mxu0 0.0
        %1273 = vmatprep.subr.mxu0 0.0
        %1274 = vmatpush2.xpose.msra.mxu0 0.0
        %1275 = vmatprep.subr.mxu0 0.0
        %1276 = vmatpush2.xpose.msra.mxu0 0.0
        %1277 = vmatprep.subr.mxu0 0.0
        %1278 = vmatpush2.xpose.msra.mxu0 0.0
        %1279 = vmatprep.subr.mxu0 0.0
        %1280 = vmatpush2.xpose.msra.mxu0 0.0
        %1281 = vmatprep.subr.mxu0 0.0
        %1282 = vmatpush2.xpose.msra.mxu0 0.0
        %1283 = vmatprep.subr.mxu0 0.0
        %1284 = vmatpush2.xpose.msra.mxu0 0.0
        %1285 = vmatprep.subr.mxu0 0.0
        %1286 = vmatpush2.xpose.msra.mxu0 0.0
        %1287 = vmatprep.subr.mxu0 0.0
        %1288 = vmatpush2.xpose.msra.mxu0 0.0
        %1289 = vmatprep.subr.mxu0 0.0
        %1290 = vmatpush2.xpose.msra.mxu0 0.0
        %1291 = vmatprep.subr.mxu0 0.0
        %1292 = vmatpush2.xpose.msra.mxu0 0.0
        %1293 = vmatprep.subr.mxu0 0.0
        %1294 = vmatpush2.xpose.msra.mxu0 0.0
        %1295 = vmatprep.subr.mxu0 0.0
        %1296 = vmatpush2.xpose.msra.mxu0 0.0
        %1297 = vmatprep.subr.mxu0 0.0
        %1298 = vmatpush2.xpose.msra.mxu0 0.0
        %1299 = vmatprep.subr.mxu0 0.0
        %1300 = vmatpush2.xpose.msra.mxu0 0.0
        %1301 = vmatprep.subr.mxu0 0.0
        %1302 = vmatpush2.xpose.msra.mxu0 0.0
        %1303 = vmatprep.mubr.f32.mxu0 0.0
        %1304 = vmatmul.mubr.f32.gmra.mxu0 %v1234
        %v1305 = vpop.f32.mrf.mxu0
        %v1306 = vadd.f32 0.0, %v1305
        %v1307 = vpop.f32.mrf.mxu0
        %1308 = vdwg.mxu0
        %v1310 = vsel %vm1156, %v438, 0
        %v1313 = vsel %vm1156, %v726, 0
        %1315 = vmatprep.subr.mxu0 0.0
        %1316 = vmatpush1.xpose.msra.mxu0 0.0
        %1317 = vmatprep.subr.mxu0 0.0
        %1318 = vmatpush1.xpose.msra.mxu0 0.0
        %1319 = vmatprep.subr.mxu0 0.0
        %1320 = vmatpush1.xpose.msra.mxu0 0.0
        %1321 = vmatprep.subr.mxu0 0.0
        %1322 = vmatpush1.xpose.msra.mxu0 0.0
        %1323 = vmatprep.subr.mxu0 0.0
        %1324 = vmatpush1.xpose.msra.mxu0 0.0
        %1325 = vmatprep.subr.mxu0 0.0
        %1326 = vmatpush1.xpose.msra.mxu0 0.0
        %1327 = vmatprep.subr.mxu0 0.0
        %1328 = vmatpush1.xpose.msra.mxu0 0.0
        %1329 = vmatprep.subr.mxu0 0.0
        %1330 = vmatpush1.xpose.msra.mxu0 0.0
        %1331 = vmatprep.subr.mxu0 0.0
        %1332 = vmatpush1.xpose.msra.mxu0 0.0
        %1333 = vmatprep.subr.mxu0 0.0
        %1334 = vmatpush1.xpose.msra.mxu0 0.0
        %1335 = vmatprep.subr.mxu0 0.0
        %1336 = vmatpush1.xpose.msra.mxu0 0.0
        %1337 = vmatprep.subr.mxu0 0.0
        %1338 = vmatpush1.xpose.msra.mxu0 0.0
        %1339 = vmatprep.subr.mxu0 0.0
        %1340 = vmatpush1.xpose.msra.mxu0 0.0
        %1341 = vmatprep.subr.mxu0 0.0
        %1342 = vmatpush1.xpose.msra.mxu0 0.0
        %1343 = vmatprep.subr.mxu0 0.0
        %1344 = vmatpush1.xpose.msra.mxu0 0.0
        %1345 = vmatprep.subr.mxu0 0.0
        %1346 = vmatpush1.xpose.msra.mxu0 %v1313
        %1347 = vmatprep.subr.mxu0 0.0
        %1348 = vmatpush2.xpose.msra.mxu0 0.0
        %1349 = vmatprep.subr.mxu0 0.0
        %1350 = vmatpush2.xpose.msra.mxu0 0.0
        %1351 = vmatprep.subr.mxu0 0.0
        %1352 = vmatpush2.xpose.msra.mxu0 0.0
        %1353 = vmatprep.subr.mxu0 0.0
        %1354 = vmatpush2.xpose.msra.mxu0 0.0
        %1355 = vmatprep.subr.mxu0 0.0
        %1356 = vmatpush2.xpose.msra.mxu0 0.0
        %1357 = vmatprep.subr.mxu0 0.0
        %1358 = vmatpush2.xpose.msra.mxu0 0.0
        %1359 = vmatprep.subr.mxu0 0.0
        %1360 = vmatpush2.xpose.msra.mxu0 0.0
        %1361 = vmatprep.subr.mxu0 0.0
        %1362 = vmatpush2.xpose.msra.mxu0 0.0
        %1363 = vmatprep.subr.mxu0 0.0
        %1364 = vmatpush2.xpose.msra.mxu0 0.0
        %1365 = vmatprep.subr.mxu0 0.0
        %1366 = vmatpush2.xpose.msra.mxu0 0.0
        %1367 = vmatprep.subr.mxu0 0.0
        %1368 = vmatpush2.xpose.msra.mxu0 0.0
        %1369 = vmatprep.subr.mxu0 0.0
        %1370 = vmatpush2.xpose.msra.mxu0 0.0
        %1371 = vmatprep.subr.mxu0 0.0
        %1372 = vmatpush2.xpose.msra.mxu0 0.0
        %1373 = vmatprep.subr.mxu0 0.0
        %1374 = vmatpush2.xpose.msra.mxu0 0.0
        %1375 = vmatprep.subr.mxu0 0.0
        %1376 = vmatpush2.xpose.msra.mxu0 0.0
        %1377 = vmatprep.subr.mxu0 0.0
        %1378 = vmatpush2.xpose.msra.mxu0 0.0
        %1379 = vmatprep.mubr.f32.mxu0 0.0
        %1380 = vmatmul.mubr.f32.gmra.mxu0 %v1310
        %v1381 = vpop.f32.mrf.mxu0
        %v1382 = vadd.f32 0.0, %v1381
        %v1383 = vpop.f32.mrf.mxu0
        %1384 = vdwg.mxu0
        %v1386 = vsel %vm1156, %v439, 0
        %v1389 = vsel %vm1156, %v727, 0
        %1391 = vmatprep.subr.mxu0 0.0
        %1392 = vmatpush1.xpose.msra.mxu0 0.0
        %1393 = vmatprep.subr.mxu0 0.0
        %1394 = vmatpush1.xpose.msra.mxu0 0.0
        %1395 = vmatprep.subr.mxu0 0.0
        %1396 = vmatpush1.xpose.msra.mxu0 0.0
        %1397 = vmatprep.subr.mxu0 0.0
        %1398 = vmatpush1.xpose.msra.mxu0 0.0
        %1399 = vmatprep.subr.mxu0 0.0
        %1400 = vmatpush1.xpose.msra.mxu0 0.0
        %1401 = vmatprep.subr.mxu0 0.0
        %1402 = vmatpush1.xpose.msra.mxu0 0.0
        %1403 = vmatprep.subr.mxu0 0.0
        %1404 = vmatpush1.xpose.msra.mxu0 0.0
        %1405 = vmatprep.subr.mxu0 0.0
        %1406 = vmatpush1.xpose.msra.mxu0 0.0
        %1407 = vmatprep.subr.mxu0 0.0
        %1408 = vmatpush1.xpose.msra.mxu0 0.0
        %1409 = vmatprep.subr.mxu0 0.0
        %1410 = vmatpush1.xpose.msra.mxu0 0.0
        %1411 = vmatprep.subr.mxu0 0.0
        %1412 = vmatpush1.xpose.msra.mxu0 0.0
        %1413 = vmatprep.subr.mxu0 0.0
        %1414 = vmatpush1.xpose.msra.mxu0 0.0
        %1415 = vmatprep.subr.mxu0 0.0
        %1416 = vmatpush1.xpose.msra.mxu0 0.0
        %1417 = vmatprep.subr.mxu0 0.0
        %1418 = vmatpush1.xpose.msra.mxu0 0.0
        %1419 = vmatprep.subr.mxu0 0.0
        %1420 = vmatpush1.xpose.msra.mxu0 0.0
        %1421 = vmatprep.subr.mxu0 0.0
        %1422 = vmatpush1.xpose.msra.mxu0 %v1389
        %1423 = vmatprep.subr.mxu0 0.0
        %1424 = vmatpush2.xpose.msra.mxu0 0.0
        %1425 = vmatprep.subr.mxu0 0.0
        %1426 = vmatpush2.xpose.msra.mxu0 0.0
        %1427 = vmatprep.subr.mxu0 0.0
        %1428 = vmatpush2.xpose.msra.mxu0 0.0
        %1429 = vmatprep.subr.mxu0 0.0
        %1430 = vmatpush2.xpose.msra.mxu0 0.0
        %1431 = vmatprep.subr.mxu0 0.0
        %1432 = vmatpush2.xpose.msra.mxu0 0.0
        %1433 = vmatprep.subr.mxu0 0.0
        %1434 = vmatpush2.xpose.msra.mxu0 0.0
        %1435 = vmatprep.subr.mxu0 0.0
        %1436 = vmatpush2.xpose.msra.mxu0 0.0
        %1437 = vmatprep.subr.mxu0 0.0
        %1438 = vmatpush2.xpose.msra.mxu0 0.0
        %1439 = vmatprep.subr.mxu0 0.0
        %1440 = vmatpush2.xpose.msra.mxu0 0.0
        %1441 = vmatprep.subr.mxu0 0.0
        %1442 = vmatpush2.xpose.msra.mxu0 0.0
        %1443 = vmatprep.subr.mxu0 0.0
        %1444 = vmatpush2.xpose.msra.mxu0 0.0
        %1445 = vmatprep.subr.mxu0 0.0
        %1446 = vmatpush2.xpose.msra.mxu0 0.0
        %1447 = vmatprep.subr.mxu0 0.0
        %1448 = vmatpush2.xpose.msra.mxu0 0.0
        %1449 = vmatprep.subr.mxu0 0.0
        %1450 = vmatpush2.xpose.msra.mxu0 0.0
        %1451 = vmatprep.subr.mxu0 0.0
        %1452 = vmatpush2.xpose.msra.mxu0 0.0
        %1453 = vmatprep.subr.mxu0 0.0
        %1454 = vmatpush2.xpose.msra.mxu0 0.0
        %1455 = vmatprep.mubr.f32.mxu0 0.0
        %1456 = vmatmul.mubr.f32.gmra.mxu0 %v1386
        %v1457 = vpop.f32.mrf.mxu0
        %v1458 = vadd.f32 0.0, %v1457
        %v1459 = vpop.f32.mrf.mxu0
        %1460 = vdwg.mxu0
        %v1462 = vsel %vm1156, %v440, 0
        %v1465 = vsel %vm1156, %v728, 0
        %1467 = vmatprep.subr.mxu0 0.0
        %1468 = vmatpush1.xpose.msra.mxu0 0.0
        %1469 = vmatprep.subr.mxu0 0.0
        %1470 = vmatpush1.xpose.msra.mxu0 0.0
        %1471 = vmatprep.subr.mxu0 0.0
        %1472 = vmatpush1.xpose.msra.mxu0 0.0
        %1473 = vmatprep.subr.mxu0 0.0
        %1474 = vmatpush1.xpose.msra.mxu0 0.0
        %1475 = vmatprep.subr.mxu0 0.0
        %1476 = vmatpush1.xpose.msra.mxu0 0.0
        %1477 = vmatprep.subr.mxu0 0.0
        %1478 = vmatpush1.xpose.msra.mxu0 0.0
        %1479 = vmatprep.subr.mxu0 0.0
        %1480 = vmatpush1.xpose.msra.mxu0 0.0
        %1481 = vmatprep.subr.mxu0 0.0
        %1482 = vmatpush1.xpose.msra.mxu0 0.0
        %1483 = vmatprep.subr.mxu0 0.0
        %1484 = vmatpush1.xpose.msra.mxu0 0.0
        %1485 = vmatprep.subr.mxu0 0.0
        %1486 = vmatpush1.xpose.msra.mxu0 0.0
        %1487 = vmatprep.subr.mxu0 0.0
        %1488 = vmatpush1.xpose.msra.mxu0 0.0
        %1489 = vmatprep.subr.mxu0 0.0
        %1490 = vmatpush1.xpose.msra.mxu0 0.0
        %1491 = vmatprep.subr.mxu0 0.0
        %1492 = vmatpush1.xpose.msra.mxu0 0.0
        %1493 = vmatprep.subr.mxu0 0.0
        %1494 = vmatpush1.xpose.msra.mxu0 0.0
        %1495 = vmatprep.subr.mxu0 0.0
        %1496 = vmatpush1.xpose.msra.mxu0 0.0
        %1497 = vmatprep.subr.mxu0 0.0
        %1498 = vmatpush1.xpose.msra.mxu0 %v1465
        %1499 = vmatprep.subr.mxu0 0.0
        %1500 = vmatpush2.xpose.msra.mxu0 0.0
        %1501 = vmatprep.subr.mxu0 0.0
        %1502 = vmatpush2.xpose.msra.mxu0 0.0
        %1503 = vmatprep.subr.mxu0 0.0
        %1504 = vmatpush2.xpose.msra.mxu0 0.0
        %1505 = vmatprep.subr.mxu0 0.0
        %1506 = vmatpush2.xpose.msra.mxu0 0.0
        %1507 = vmatprep.subr.mxu0 0.0
        %1508 = vmatpush2.xpose.msra.mxu0 0.0
        %1509 = vmatprep.subr.mxu0 0.0
        %1510 = vmatpush2.xpose.msra.mxu0 0.0
        %1511 = vmatprep.subr.mxu0 0.0
        %1512 = vmatpush2.xpose.msra.mxu0 0.0
        %1513 = vmatprep.subr.mxu0 0.0
        %1514 = vmatpush2.xpose.msra.mxu0 0.0
        %1515 = vmatprep.subr.mxu0 0.0
        %1516 = vmatpush2.xpose.msra.mxu0 0.0
        %1517 = vmatprep.subr.mxu0 0.0
        %1518 = vmatpush2.xpose.msra.mxu0 0.0
        %1519 = vmatprep.subr.mxu0 0.0
        %1520 = vmatpush2.xpose.msra.mxu0 0.0
        %1521 = vmatprep.subr.mxu0 0.0
        %1522 = vmatpush2.xpose.msra.mxu0 0.0
        %1523 = vmatprep.subr.mxu0 0.0
        %1524 = vmatpush2.xpose.msra.mxu0 0.0
        %1525 = vmatprep.subr.mxu0 0.0
        %1526 = vmatpush2.xpose.msra.mxu0 0.0
        %1527 = vmatprep.subr.mxu0 0.0
        %1528 = vmatpush2.xpose.msra.mxu0 0.0
        %1529 = vmatprep.subr.mxu0 0.0
        %1530 = vmatpush2.xpose.msra.mxu0 0.0
        %1531 = vmatprep.mubr.f32.mxu0 0.0
        %1532 = vmatmul.mubr.f32.gmra.mxu0 %v1462
        %v1533 = vpop.f32.mrf.mxu0
        %v1534 = vadd.f32 0.0, %v1533
        %v1535 = vpop.f32.mrf.mxu0
        %1536 = vdwg.mxu0
        %v1538 = vsel %vm1156, %v441, 0
        %v1541 = vsel %vm1156, %v729, 0
        %1543 = vmatprep.subr.mxu0 0.0
        %1544 = vmatpush1.xpose.msra.mxu0 0.0
        %1545 = vmatprep.subr.mxu0 0.0
        %1546 = vmatpush1.xpose.msra.mxu0 0.0
        %1547 = vmatprep.subr.mxu0 0.0
        %1548 = vmatpush1.xpose.msra.mxu0 0.0
        %1549 = vmatprep.subr.mxu0 0.0
        %1550 = vmatpush1.xpose.msra.mxu0 0.0
        %1551 = vmatprep.subr.mxu0 0.0
        %1552 = vmatpush1.xpose.msra.mxu0 0.0
        %1553 = vmatprep.subr.mxu0 0.0
        %1554 = vmatpush1.xpose.msra.mxu0 0.0
        %1555 = vmatprep.subr.mxu0 0.0
        %1556 = vmatpush1.xpose.msra.mxu0 0.0
        %1557 = vmatprep.subr.mxu0 0.0
        %1558 = vmatpush1.xpose.msra.mxu0 0.0
        %1559 = vmatprep.subr.mxu0 0.0
        %1560 = vmatpush1.xpose.msra.mxu0 0.0
        %1561 = vmatprep.subr.mxu0 0.0
        %1562 = vmatpush1.xpose.msra.mxu0 0.0
        %1563 = vmatprep.subr.mxu0 0.0
        %1564 = vmatpush1.xpose.msra.mxu0 0.0
        %1565 = vmatprep.subr.mxu0 0.0
        %1566 = vmatpush1.xpose.msra.mxu0 0.0
        %1567 = vmatprep.subr.mxu0 0.0
        %1568 = vmatpush1.xpose.msra.mxu0 0.0
        %1569 = vmatprep.subr.mxu0 0.0
        %1570 = vmatpush1.xpose.msra.mxu0 0.0
        %1571 = vmatprep.subr.mxu0 0.0
        %1572 = vmatpush1.xpose.msra.mxu0 0.0
        %1573 = vmatprep.subr.mxu0 0.0
        %1574 = vmatpush1.xpose.msra.mxu0 %v1541
        %1575 = vmatprep.subr.mxu0 0.0
        %1576 = vmatpush2.xpose.msra.mxu0 0.0
        %1577 = vmatprep.subr.mxu0 0.0
        %1578 = vmatpush2.xpose.msra.mxu0 0.0
        %1579 = vmatprep.subr.mxu0 0.0
        %1580 = vmatpush2.xpose.msra.mxu0 0.0
        %1581 = vmatprep.subr.mxu0 0.0
        %1582 = vmatpush2.xpose.msra.mxu0 0.0
        %1583 = vmatprep.subr.mxu0 0.0
        %1584 = vmatpush2.xpose.msra.mxu0 0.0
        %1585 = vmatprep.subr.mxu0 0.0
        %1586 = vmatpush2.xpose.msra.mxu0 0.0
        %1587 = vmatprep.subr.mxu0 0.0
        %1588 = vmatpush2.xpose.msra.mxu0 0.0
        %1589 = vmatprep.subr.mxu0 0.0
        %1590 = vmatpush2.xpose.msra.mxu0 0.0
        %1591 = vmatprep.subr.mxu0 0.0
        %1592 = vmatpush2.xpose.msra.mxu0 0.0
        %1593 = vmatprep.subr.mxu0 0.0
        %1594 = vmatpush2.xpose.msra.mxu0 0.0
        %1595 = vmatprep.subr.mxu0 0.0
        %1596 = vmatpush2.xpose.msra.mxu0 0.0
        %1597 = vmatprep.subr.mxu0 0.0
        %1598 = vmatpush2.xpose.msra.mxu0 0.0
        %1599 = vmatprep.subr.mxu0 0.0
        %1600 = vmatpush2.xpose.msra.mxu0 0.0
        %1601 = vmatprep.subr.mxu0 0.0
        %1602 = vmatpush2.xpose.msra.mxu0 0.0
        %1603 = vmatprep.subr.mxu0 0.0
        %1604 = vmatpush2.xpose.msra.mxu0 0.0
        %1605 = vmatprep.subr.mxu0 0.0
        %1606 = vmatpush2.xpose.msra.mxu0 0.0
        %1607 = vmatprep.mubr.f32.mxu0 0.0
        %1608 = vmatmul.mubr.f32.gmra.mxu0 %v1538
        %v1609 = vpop.f32.mrf.mxu0
        %v1610 = vadd.f32 0.0, %v1609
        %v1611 = vpop.f32.mrf.mxu0
        %1612 = vdwg.mxu0
        %v1614 = vsel %vm1156, %v442, 0
        %v1617 = vsel %vm1156, %v730, 0
        %1619 = vmatprep.subr.mxu0 0.0
        %1620 = vmatpush1.xpose.msra.mxu0 0.0
        %1621 = vmatprep.subr.mxu0 0.0
        %1622 = vmatpush1.xpose.msra.mxu0 0.0
        %1623 = vmatprep.subr.mxu0 0.0
        %1624 = vmatpush1.xpose.msra.mxu0 0.0
        %1625 = vmatprep.subr.mxu0 0.0
        %1626 = vmatpush1.xpose.msra.mxu0 0.0
        %1627 = vmatprep.subr.mxu0 0.0
        %1628 = vmatpush1.xpose.msra.mxu0 0.0
        %1629 = vmatprep.subr.mxu0 0.0
        %1630 = vmatpush1.xpose.msra.mxu0 0.0
        %1631 = vmatprep.subr.mxu0 0.0
        %1632 = vmatpush1.xpose.msra.mxu0 0.0
        %1633 = vmatprep.subr.mxu0 0.0
        %1634 = vmatpush1.xpose.msra.mxu0 0.0
        %1635 = vmatprep.subr.mxu0 0.0
        %1636 = vmatpush1.xpose.msra.mxu0 0.0
        %1637 = vmatprep.subr.mxu0 0.0
        %1638 = vmatpush1.xpose.msra.mxu0 0.0
        %1639 = vmatprep.subr.mxu0 0.0
        %1640 = vmatpush1.xpose.msra.mxu0 0.0
        %1641 = vmatprep.subr.mxu0 0.0
        %1642 = vmatpush1.xpose.msra.mxu0 0.0
        %1643 = vmatprep.subr.mxu0 0.0
        %1644 = vmatpush1.xpose.msra.mxu0 0.0
        %1645 = vmatprep.subr.mxu0 0.0
        %1646 = vmatpush1.xpose.msra.mxu0 0.0
        %1647 = vmatprep.subr.mxu0 0.0
        %1648 = vmatpush1.xpose.msra.mxu0 0.0
        %1649 = vmatprep.subr.mxu0 0.0
        %1650 = vmatpush1.xpose.msra.mxu0 %v1617
        %1651 = vmatprep.subr.mxu0 0.0
        %1652 = vmatpush2.xpose.msra.mxu0 0.0
        %1653 = vmatprep.subr.mxu0 0.0
        %1654 = vmatpush2.xpose.msra.mxu0 0.0
        %1655 = vmatprep.subr.mxu0 0.0
        %1656 = vmatpush2.xpose.msra.mxu0 0.0
        %1657 = vmatprep.subr.mxu0 0.0
        %1658 = vmatpush2.xpose.msra.mxu0 0.0
        %1659 = vmatprep.subr.mxu0 0.0
        %1660 = vmatpush2.xpose.msra.mxu0 0.0
        %1661 = vmatprep.subr.mxu0 0.0
        %1662 = vmatpush2.xpose.msra.mxu0 0.0
        %1663 = vmatprep.subr.mxu0 0.0
        %1664 = vmatpush2.xpose.msra.mxu0 0.0
        %1665 = vmatprep.subr.mxu0 0.0
        %1666 = vmatpush2.xpose.msra.mxu0 0.0
        %1667 = vmatprep.subr.mxu0 0.0
        %1668 = vmatpush2.xpose.msra.mxu0 0.0
        %1669 = vmatprep.subr.mxu0 0.0
        %1670 = vmatpush2.xpose.msra.mxu0 0.0
        %1671 = vmatprep.subr.mxu0 0.0
        %1672 = vmatpush2.xpose.msra.mxu0 0.0
        %1673 = vmatprep.subr.mxu0 0.0
        %1674 = vmatpush2.xpose.msra.mxu0 0.0
        %1675 = vmatprep.subr.mxu0 0.0
        %1676 = vmatpush2.xpose.msra.mxu0 0.0
        %1677 = vmatprep.subr.mxu0 0.0
        %1678 = vmatpush2.xpose.msra.mxu0 0.0
        %1679 = vmatprep.subr.mxu0 0.0
        %1680 = vmatpush2.xpose.msra.mxu0 0.0
        %1681 = vmatprep.subr.mxu0 0.0
        %1682 = vmatpush2.xpose.msra.mxu0 0.0
        %1683 = vmatprep.mubr.f32.mxu0 0.0
        %1684 = vmatmul.mubr.f32.gmra.mxu0 %v1614
        %v1685 = vpop.f32.mrf.mxu0
        %v1686 = vadd.f32 0.0, %v1685
        %v1687 = vpop.f32.mrf.mxu0
        %1688 = vdwg.mxu0
        %v1690 = vsel %vm1156, %v443, 0
        %v1693 = vsel %vm1156, %v731, 0
        %1695 = vmatprep.subr.mxu0 0.0
        %1696 = vmatpush1.xpose.msra.mxu0 0.0
        %1697 = vmatprep.subr.mxu0 0.0
        %1698 = vmatpush1.xpose.msra.mxu0 0.0
        %1699 = vmatprep.subr.mxu0 0.0
        %1700 = vmatpush1.xpose.msra.mxu0 0.0
        %1701 = vmatprep.subr.mxu0 0.0
        %1702 = vmatpush1.xpose.msra.mxu0 0.0
        %1703 = vmatprep.subr.mxu0 0.0
        %1704 = vmatpush1.xpose.msra.mxu0 0.0
        %1705 = vmatprep.subr.mxu0 0.0
        %1706 = vmatpush1.xpose.msra.mxu0 0.0
        %1707 = vmatprep.subr.mxu0 0.0
        %1708 = vmatpush1.xpose.msra.mxu0 0.0
        %1709 = vmatprep.subr.mxu0 0.0
        %1710 = vmatpush1.xpose.msra.mxu0 0.0
        %1711 = vmatprep.subr.mxu0 0.0
        %1712 = vmatpush1.xpose.msra.mxu0 0.0
        %1713 = vmatprep.subr.mxu0 0.0
        %1714 = vmatpush1.xpose.msra.mxu0 0.0
        %1715 = vmatprep.subr.mxu0 0.0
        %1716 = vmatpush1.xpose.msra.mxu0 0.0
        %1717 = vmatprep.subr.mxu0 0.0
        %1718 = vmatpush1.xpose.msra.mxu0 0.0
        %1719 = vmatprep.subr.mxu0 0.0
        %1720 = vmatpush1.xpose.msra.mxu0 0.0
        %1721 = vmatprep.subr.mxu0 0.0
        %1722 = vmatpush1.xpose.msra.mxu0 0.0
        %1723 = vmatprep.subr.mxu0 0.0
        %1724 = vmatpush1.xpose.msra.mxu0 0.0
        %1725 = vmatprep.subr.mxu0 0.0
        %1726 = vmatpush1.xpose.msra.mxu0 %v1693
        %1727 = vmatprep.subr.mxu0 0.0
        %1728 = vmatpush2.xpose.msra.mxu0 0.0
        %1729 = vmatprep.subr.mxu0 0.0
        %1730 = vmatpush2.xpose.msra.mxu0 0.0
        %1731 = vmatprep.subr.mxu0 0.0
        %1732 = vmatpush2.xpose.msra.mxu0 0.0
        %1733 = vmatprep.subr.mxu0 0.0
        %1734 = vmatpush2.xpose.msra.mxu0 0.0
        %1735 = vmatprep.subr.mxu0 0.0
        %1736 = vmatpush2.xpose.msra.mxu0 0.0
        %1737 = vmatprep.subr.mxu0 0.0
        %1738 = vmatpush2.xpose.msra.mxu0 0.0
        %1739 = vmatprep.subr.mxu0 0.0
        %1740 = vmatpush2.xpose.msra.mxu0 0.0
        %1741 = vmatprep.subr.mxu0 0.0
        %1742 = vmatpush2.xpose.msra.mxu0 0.0
        %1743 = vmatprep.subr.mxu0 0.0
        %1744 = vmatpush2.xpose.msra.mxu0 0.0
        %1745 = vmatprep.subr.mxu0 0.0
        %1746 = vmatpush2.xpose.msra.mxu0 0.0
        %1747 = vmatprep.subr.mxu0 0.0
        %1748 = vmatpush2.xpose.msra.mxu0 0.0
        %1749 = vmatprep.subr.mxu0 0.0
        %1750 = vmatpush2.xpose.msra.mxu0 0.0
        %1751 = vmatprep.subr.mxu0 0.0
        %1752 = vmatpush2.xpose.msra.mxu0 0.0
        %1753 = vmatprep.subr.mxu0 0.0
        %1754 = vmatpush2.xpose.msra.mxu0 0.0
        %1755 = vmatprep.subr.mxu0 0.0
        %1756 = vmatpush2.xpose.msra.mxu0 0.0
        %1757 = vmatprep.subr.mxu0 0.0
        %1758 = vmatpush2.xpose.msra.mxu0 0.0
        %1759 = vmatprep.mubr.f32.mxu0 0.0
        %1760 = vmatmul.mubr.f32.gmra.mxu0 %v1690
        %v1761 = vpop.f32.mrf.mxu0
        %v1762 = vadd.f32 0.0, %v1761
        %v1763 = vpop.f32.mrf.mxu0
        %1764 = vdwg.mxu0
        %v1766 = vsel %vm1156, %v572, 0
        %v1769 = vsel %vm1156, %v860, 0
        %1771 = vmatprep.subr.mxu0 0.0
        %1772 = vmatpush1.xpose.msra.mxu0 0.0
        %1773 = vmatprep.subr.mxu0 0.0
        %1774 = vmatpush1.xpose.msra.mxu0 0.0
        %1775 = vmatprep.subr.mxu0 0.0
        %1776 = vmatpush1.xpose.msra.mxu0 0.0
        %1777 = vmatprep.subr.mxu0 0.0
        %1778 = vmatpush1.xpose.msra.mxu0 0.0
        %1779 = vmatprep.subr.mxu0 0.0
        %1780 = vmatpush1.xpose.msra.mxu0 0.0
        %1781 = vmatprep.subr.mxu0 0.0
        %1782 = vmatpush1.xpose.msra.mxu0 0.0
        %1783 = vmatprep.subr.mxu0 0.0
        %1784 = vmatpush1.xpose.msra.mxu0 0.0
        %1785 = vmatprep.subr.mxu0 0.0
        %1786 = vmatpush1.xpose.msra.mxu0 0.0
        %1787 = vmatprep.subr.mxu0 0.0
        %1788 = vmatpush1.xpose.msra.mxu0 0.0
        %1789 = vmatprep.subr.mxu0 0.0
        %1790 = vmatpush1.xpose.msra.mxu0 0.0
        %1791 = vmatprep.subr.mxu0 0.0
        %1792 = vmatpush1.xpose.msra.mxu0 0.0
        %1793 = vmatprep.subr.mxu0 0.0
        %1794 = vmatpush1.xpose.msra.mxu0 0.0
        %1795 = vmatprep.subr.mxu0 0.0
        %1796 = vmatpush1.xpose.msra.mxu0 0.0
        %1797 = vmatprep.subr.mxu0 0.0
        %1798 = vmatpush1.xpose.msra.mxu0 0.0
        %1799 = vmatprep.subr.mxu0 0.0
        %1800 = vmatpush1.xpose.msra.mxu0 0.0
        %1801 = vmatprep.subr.mxu0 0.0
        %1802 = vmatpush1.xpose.msra.mxu0 %v1769
        %1803 = vmatprep.subr.mxu0 0.0
        %1804 = vmatpush2.xpose.msra.mxu0 0.0
        %1805 = vmatprep.subr.mxu0 0.0
        %1806 = vmatpush2.xpose.msra.mxu0 0.0
        %1807 = vmatprep.subr.mxu0 0.0
        %1808 = vmatpush2.xpose.msra.mxu0 0.0
        %1809 = vmatprep.subr.mxu0 0.0
        %1810 = vmatpush2.xpose.msra.mxu0 0.0
        %1811 = vmatprep.subr.mxu0 0.0
        %1812 = vmatpush2.xpose.msra.mxu0 0.0
        %1813 = vmatprep.subr.mxu0 0.0
        %1814 = vmatpush2.xpose.msra.mxu0 0.0
        %1815 = vmatprep.subr.mxu0 0.0
        %1816 = vmatpush2.xpose.msra.mxu0 0.0
        %1817 = vmatprep.subr.mxu0 0.0
        %1818 = vmatpush2.xpose.msra.mxu0 0.0
        %1819 = vmatprep.subr.mxu0 0.0
        %1820 = vmatpush2.xpose.msra.mxu0 0.0
        %1821 = vmatprep.subr.mxu0 0.0
        %1822 = vmatpush2.xpose.msra.mxu0 0.0
        %1823 = vmatprep.subr.mxu0 0.0
        %1824 = vmatpush2.xpose.msra.mxu0 0.0
        %1825 = vmatprep.subr.mxu0 0.0
        %1826 = vmatpush2.xpose.msra.mxu0 0.0
        %1827 = vmatprep.subr.mxu0 0.0
        %1828 = vmatpush2.xpose.msra.mxu0 0.0
        %1829 = vmatprep.subr.mxu0 0.0
        %1830 = vmatpush2.xpose.msra.mxu0 0.0
        %1831 = vmatprep.subr.mxu0 0.0
        %1832 = vmatpush2.xpose.msra.mxu0 0.0
        %1833 = vmatprep.subr.mxu0 0.0
        %1834 = vmatpush2.xpose.msra.mxu0 0.0
        %1835 = vmatprep.mubr.f32.mxu0 0.0
        %1836 = vmatmul.mubr.f32.gmra.mxu0 %v1766
        %v1837 = vpop.f32.mrf.mxu0
        %v1838 = vadd.f32 0.0, %v1837
        %v1839 = vpop.f32.mrf.mxu0
        %1840 = vdwg.mxu0
        %v1842 = vsel %vm1156, %v573, 0
        %v1845 = vsel %vm1156, %v861, 0
        %1847 = vmatprep.subr.mxu0 0.0
        %1848 = vmatpush1.xpose.msra.mxu0 0.0
        %1849 = vmatprep.subr.mxu0 0.0
        %1850 = vmatpush1.xpose.msra.mxu0 0.0
        %1851 = vmatprep.subr.mxu0 0.0
        %1852 = vmatpush1.xpose.msra.mxu0 0.0
        %1853 = vmatprep.subr.mxu0 0.0
        %1854 = vmatpush1.xpose.msra.mxu0 0.0
        %1855 = vmatprep.subr.mxu0 0.0
        %1856 = vmatpush1.xpose.msra.mxu0 0.0
        %1857 = vmatprep.subr.mxu0 0.0
        %1858 = vmatpush1.xpose.msra.mxu0 0.0
        %1859 = vmatprep.subr.mxu0 0.0
        %1860 = vmatpush1.xpose.msra.mxu0 0.0
        %1861 = vmatprep.subr.mxu0 0.0
        %1862 = vmatpush1.xpose.msra.mxu0 0.0
        %1863 = vmatprep.subr.mxu0 0.0
        %1864 = vmatpush1.xpose.msra.mxu0 0.0
        %1865 = vmatprep.subr.mxu0 0.0
        %1866 = vmatpush1.xpose.msra.mxu0 0.0
        %1867 = vmatprep.subr.mxu0 0.0
        %1868 = vmatpush1.xpose.msra.mxu0 0.0
        %1869 = vmatprep.subr.mxu0 0.0
        %1870 = vmatpush1.xpose.msra.mxu0 0.0
        %1871 = vmatprep.subr.mxu0 0.0
        %1872 = vmatpush1.xpose.msra.mxu0 0.0
        %1873 = vmatprep.subr.mxu0 0.0
        %1874 = vmatpush1.xpose.msra.mxu0 0.0
        %1875 = vmatprep.subr.mxu0 0.0
        %1876 = vmatpush1.xpose.msra.mxu0 0.0
        %1877 = vmatprep.subr.mxu0 0.0
        %1878 = vmatpush1.xpose.msra.mxu0 %v1845
        %1879 = vmatprep.subr.mxu0 0.0
        %1880 = vmatpush2.xpose.msra.mxu0 0.0
        %1881 = vmatprep.subr.mxu0 0.0
        %1882 = vmatpush2.xpose.msra.mxu0 0.0
        %1883 = vmatprep.subr.mxu0 0.0
        %1884 = vmatpush2.xpose.msra.mxu0 0.0
        %1885 = vmatprep.subr.mxu0 0.0
        %1886 = vmatpush2.xpose.msra.mxu0 0.0
        %1887 = vmatprep.subr.mxu0 0.0
        %1888 = vmatpush2.xpose.msra.mxu0 0.0
        %1889 = vmatprep.subr.mxu0 0.0
        %1890 = vmatpush2.xpose.msra.mxu0 0.0
        %1891 = vmatprep.subr.mxu0 0.0
        %1892 = vmatpush2.xpose.msra.mxu0 0.0
        %1893 = vmatprep.subr.mxu0 0.0
        %1894 = vmatpush2.xpose.msra.mxu0 0.0
        %1895 = vmatprep.subr.mxu0 0.0
        %1896 = vmatpush2.xpose.msra.mxu0 0.0
        %1897 = vmatprep.subr.mxu0 0.0
        %1898 = vmatpush2.xpose.msra.mxu0 0.0
        %1899 = vmatprep.subr.mxu0 0.0
        %1900 = vmatpush2.xpose.msra.mxu0 0.0
        %1901 = vmatprep.subr.mxu0 0.0
        %1902 = vmatpush2.xpose.msra.mxu0 0.0
        %1903 = vmatprep.subr.mxu0 0.0
        %1904 = vmatpush2.xpose.msra.mxu0 0.0
        %1905 = vmatprep.subr.mxu0 0.0
        %1906 = vmatpush2.xpose.msra.mxu0 0.0
        %1907 = vmatprep.subr.mxu0 0.0
        %1908 = vmatpush2.xpose.msra.mxu0 0.0
        %1909 = vmatprep.subr.mxu0 0.0
        %1910 = vmatpush2.xpose.msra.mxu0 0.0
        %1911 = vmatprep.mubr.f32.mxu0 0.0
        %1912 = vmatmul.mubr.f32.gmra.mxu0 %v1842
        %v1913 = vpop.f32.mrf.mxu0
        %v1914 = vadd.f32 0.0, %v1913
        %v1915 = vpop.f32.mrf.mxu0
        %1916 = vdwg.mxu0
        %v1918 = vsel %vm1156, %v574, 0
        %v1921 = vsel %vm1156, %v862, 0
        %1923 = vmatprep.subr.mxu0 0.0
        %1924 = vmatpush1.xpose.msra.mxu0 0.0
        %1925 = vmatprep.subr.mxu0 0.0
        %1926 = vmatpush1.xpose.msra.mxu0 0.0
        %1927 = vmatprep.subr.mxu0 0.0
        %1928 = vmatpush1.xpose.msra.mxu0 0.0
        %1929 = vmatprep.subr.mxu0 0.0
        %1930 = vmatpush1.xpose.msra.mxu0 0.0
        %1931 = vmatprep.subr.mxu0 0.0
        %1932 = vmatpush1.xpose.msra.mxu0 0.0
        %1933 = vmatprep.subr.mxu0 0.0
        %1934 = vmatpush1.xpose.msra.mxu0 0.0
        %1935 = vmatprep.subr.mxu0 0.0
        %1936 = vmatpush1.xpose.msra.mxu0 0.0
        %1937 = vmatprep.subr.mxu0 0.0
        %1938 = vmatpush1.xpose.msra.mxu0 0.0
        %1939 = vmatprep.subr.mxu0 0.0
        %1940 = vmatpush1.xpose.msra.mxu0 0.0
        %1941 = vmatprep.subr.mxu0 0.0
        %1942 = vmatpush1.xpose.msra.mxu0 0.0
        %1943 = vmatprep.subr.mxu0 0.0
        %1944 = vmatpush1.xpose.msra.mxu0 0.0
        %1945 = vmatprep.subr.mxu0 0.0
        %1946 = vmatpush1.xpose.msra.mxu0 0.0
        %1947 = vmatprep.subr.mxu0 0.0
        %1948 = vmatpush1.xpose.msra.mxu0 0.0
        %1949 = vmatprep.subr.mxu0 0.0
        %1950 = vmatpush1.xpose.msra.mxu0 0.0
        %1951 = vmatprep.subr.mxu0 0.0
        %1952 = vmatpush1.xpose.msra.mxu0 0.0
        %1953 = vmatprep.subr.mxu0 0.0
        %1954 = vmatpush1.xpose.msra.mxu0 %v1921
        %1955 = vmatprep.subr.mxu0 0.0
        %1956 = vmatpush2.xpose.msra.mxu0 0.0
        %1957 = vmatprep.subr.mxu0 0.0
        %1958 = vmatpush2.xpose.msra.mxu0 0.0
        %1959 = vmatprep.subr.mxu0 0.0
        %1960 = vmatpush2.xpose.msra.mxu0 0.0
        %1961 = vmatprep.subr.mxu0 0.0
        %1962 = vmatpush2.xpose.msra.mxu0 0.0
        %1963 = vmatprep.subr.mxu0 0.0
        %1964 = vmatpush2.xpose.msra.mxu0 0.0
        %1965 = vmatprep.subr.mxu0 0.0
        %1966 = vmatpush2.xpose.msra.mxu0 0.0
        %1967 = vmatprep.subr.mxu0 0.0
        %1968 = vmatpush2.xpose.msra.mxu0 0.0
        %1969 = vmatprep.subr.mxu0 0.0
        %1970 = vmatpush2.xpose.msra.mxu0 0.0
        %1971 = vmatprep.subr.mxu0 0.0
        %1972 = vmatpush2.xpose.msra.mxu0 0.0
        %1973 = vmatprep.subr.mxu0 0.0
        %1974 = vmatpush2.xpose.msra.mxu0 0.0
        %1975 = vmatprep.subr.mxu0 0.0
        %1976 = vmatpush2.xpose.msra.mxu0 0.0
        %1977 = vmatprep.subr.mxu0 0.0
        %1978 = vmatpush2.xpose.msra.mxu0 0.0
        %1979 = vmatprep.subr.mxu0 0.0
        %1980 = vmatpush2.xpose.msra.mxu0 0.0
        %1981 = vmatprep.subr.mxu0 0.0
        %1982 = vmatpush2.xpose.msra.mxu0 0.0
        %1983 = vmatprep.subr.mxu0 0.0
        %1984 = vmatpush2.xpose.msra.mxu0 0.0
        %1985 = vmatprep.subr.mxu0 0.0
        %1986 = vmatpush2.xpose.msra.mxu0 0.0
        %1987 = vmatprep.mubr.f32.mxu0 0.0
        %1988 = vmatmul.mubr.f32.gmra.mxu0 %v1918
        %v1989 = vpop.f32.mrf.mxu0
        %v1990 = vadd.f32 0.0, %v1989
        %v1991 = vpop.f32.mrf.mxu0
        %1992 = vdwg.mxu0
        %v1994 = vsel %vm1156, %v575, 0
        %v1997 = vsel %vm1156, %v863, 0
        %1999 = vmatprep.subr.mxu0 0.0
        %2000 = vmatpush1.xpose.msra.mxu0 0.0
        %2001 = vmatprep.subr.mxu0 0.0
        %2002 = vmatpush1.xpose.msra.mxu0 0.0
        %2003 = vmatprep.subr.mxu0 0.0
        %2004 = vmatpush1.xpose.msra.mxu0 0.0
        %2005 = vmatprep.subr.mxu0 0.0
        %2006 = vmatpush1.xpose.msra.mxu0 0.0
        %2007 = vmatprep.subr.mxu0 0.0
        %2008 = vmatpush1.xpose.msra.mxu0 0.0
        %2009 = vmatprep.subr.mxu0 0.0
        %2010 = vmatpush1.xpose.msra.mxu0 0.0
        %2011 = vmatprep.subr.mxu0 0.0
        %2012 = vmatpush1.xpose.msra.mxu0 0.0
        %2013 = vmatprep.subr.mxu0 0.0
        %2014 = vmatpush1.xpose.msra.mxu0 0.0
        %2015 = vmatprep.subr.mxu0 0.0
        %2016 = vmatpush1.xpose.msra.mxu0 0.0
        %2017 = vmatprep.subr.mxu0 0.0
        %2018 = vmatpush1.xpose.msra.mxu0 0.0
        %2019 = vmatprep.subr.mxu0 0.0
        %2020 = vmatpush1.xpose.msra.mxu0 0.0
        %2021 = vmatprep.subr.mxu0 0.0
        %2022 = vmatpush1.xpose.msra.mxu0 0.0
        %2023 = vmatprep.subr.mxu0 0.0
        %2024 = vmatpush1.xpose.msra.mxu0 0.0
        %2025 = vmatprep.subr.mxu0 0.0
        %2026 = vmatpush1.xpose.msra.mxu0 0.0
        %2027 = vmatprep.subr.mxu0 0.0
        %2028 = vmatpush1.xpose.msra.mxu0 0.0
        %2029 = vmatprep.subr.mxu0 0.0
        %2030 = vmatpush1.xpose.msra.mxu0 %v1997
        %2031 = vmatprep.subr.mxu0 0.0
        %2032 = vmatpush2.xpose.msra.mxu0 0.0
        %2033 = vmatprep.subr.mxu0 0.0
        %2034 = vmatpush2.xpose.msra.mxu0 0.0
        %2035 = vmatprep.subr.mxu0 0.0
        %2036 = vmatpush2.xpose.msra.mxu0 0.0
        %2037 = vmatprep.subr.mxu0 0.0
        %2038 = vmatpush2.xpose.msra.mxu0 0.0
        %2039 = vmatprep.subr.mxu0 0.0
        %2040 = vmatpush2.xpose.msra.mxu0 0.0
        %2041 = vmatprep.subr.mxu0 0.0
        %2042 = vmatpush2.xpose.msra.mxu0 0.0
        %2043 = vmatprep.subr.mxu0 0.0
        %2044 = vmatpush2.xpose.msra.mxu0 0.0
        %2045 = vmatprep.subr.mxu0 0.0
        %2046 = vmatpush2.xpose.msra.mxu0 0.0
        %2047 = vmatprep.subr.mxu0 0.0
        %2048 = vmatpush2.xpose.msra.mxu0 0.0
        %2049 = vmatprep.subr.mxu0 0.0
        %2050 = vmatpush2.xpose.msra.mxu0 0.0
        %2051 = vmatprep.subr.mxu0 0.0
        %2052 = vmatpush2.xpose.msra.mxu0 0.0
        %2053 = vmatprep.subr.mxu0 0.0
        %2054 = vmatpush2.xpose.msra.mxu0 0.0
        %2055 = vmatprep.subr.mxu0 0.0
        %2056 = vmatpush2.xpose.msra.mxu0 0.0
        %2057 = vmatprep.subr.mxu0 0.0
        %2058 = vmatpush2.xpose.msra.mxu0 0.0
        %2059 = vmatprep.subr.mxu0 0.0
        %2060 = vmatpush2.xpose.msra.mxu0 0.0
        %2061 = vmatprep.subr.mxu0 0.0
        %2062 = vmatpush2.xpose.msra.mxu0 0.0
        %2063 = vmatprep.mubr.f32.mxu0 0.0
        %2064 = vmatmul.mubr.f32.gmra.mxu0 %v1994
        %v2065 = vpop.f32.mrf.mxu0
        %v2066 = vadd.f32 0.0, %v2065
        %v2067 = vpop.f32.mrf.mxu0
        %2068 = vdwg.mxu0
        %v2070 = vsel %vm1156, %v576, 0
        %v2073 = vsel %vm1156, %v864, 0
        %2075 = vmatprep.subr.mxu0 0.0
        %2076 = vmatpush1.xpose.msra.mxu0 0.0
        %2077 = vmatprep.subr.mxu0 0.0
        %2078 = vmatpush1.xpose.msra.mxu0 0.0
        %2079 = vmatprep.subr.mxu0 0.0
        %2080 = vmatpush1.xpose.msra.mxu0 0.0
        %2081 = vmatprep.subr.mxu0 0.0
        %2082 = vmatpush1.xpose.msra.mxu0 0.0
        %2083 = vmatprep.subr.mxu0 0.0
        %2084 = vmatpush1.xpose.msra.mxu0 0.0
        %2085 = vmatprep.subr.mxu0 0.0
        %2086 = vmatpush1.xpose.msra.mxu0 0.0
        %2087 = vmatprep.subr.mxu0 0.0
        %2088 = vmatpush1.xpose.msra.mxu0 0.0
        %2089 = vmatprep.subr.mxu0 0.0
        %2090 = vmatpush1.xpose.msra.mxu0 0.0
        %2091 = vmatprep.subr.mxu0 0.0
        %2092 = vmatpush1.xpose.msra.mxu0 0.0
        %2093 = vmatprep.subr.mxu0 0.0
        %2094 = vmatpush1.xpose.msra.mxu0 0.0
        %2095 = vmatprep.subr.mxu0 0.0
        %2096 = vmatpush1.xpose.msra.mxu0 0.0
        %2097 = vmatprep.subr.mxu0 0.0
        %2098 = vmatpush1.xpose.msra.mxu0 0.0
        %2099 = vmatprep.subr.mxu0 0.0
        %2100 = vmatpush1.xpose.msra.mxu0 0.0
        %2101 = vmatprep.subr.mxu0 0.0
        %2102 = vmatpush1.xpose.msra.mxu0 0.0
        %2103 = vmatprep.subr.mxu0 0.0
        %2104 = vmatpush1.xpose.msra.mxu0 0.0
        %2105 = vmatprep.subr.mxu0 0.0
        %2106 = vmatpush1.xpose.msra.mxu0 %v2073
        %2107 = vmatprep.subr.mxu0 0.0
        %2108 = vmatpush2.xpose.msra.mxu0 0.0
        %2109 = vmatprep.subr.mxu0 0.0
        %2110 = vmatpush2.xpose.msra.mxu0 0.0
        %2111 = vmatprep.subr.mxu0 0.0
        %2112 = vmatpush2.xpose.msra.mxu0 0.0
        %2113 = vmatprep.subr.mxu0 0.0
        %2114 = vmatpush2.xpose.msra.mxu0 0.0
        %2115 = vmatprep.subr.mxu0 0.0
        %2116 = vmatpush2.xpose.msra.mxu0 0.0
        %2117 = vmatprep.subr.mxu0 0.0
        %2118 = vmatpush2.xpose.msra.mxu0 0.0
        %2119 = vmatprep.subr.mxu0 0.0
        %2120 = vmatpush2.xpose.msra.mxu0 0.0
        %2121 = vmatprep.subr.mxu0 0.0
        %2122 = vmatpush2.xpose.msra.mxu0 0.0
        %2123 = vmatprep.subr.mxu0 0.0
        %2124 = vmatpush2.xpose.msra.mxu0 0.0
        %2125 = vmatprep.subr.mxu0 0.0
        %2126 = vmatpush2.xpose.msra.mxu0 0.0
        %2127 = vmatprep.subr.mxu0 0.0
        %2128 = vmatpush2.xpose.msra.mxu0 0.0
        %2129 = vmatprep.subr.mxu0 0.0
        %2130 = vmatpush2.xpose.msra.mxu0 0.0
        %2131 = vmatprep.subr.mxu0 0.0
        %2132 = vmatpush2.xpose.msra.mxu0 0.0
        %2133 = vmatprep.subr.mxu0 0.0
        %2134 = vmatpush2.xpose.msra.mxu0 0.0
        %2135 = vmatprep.subr.mxu0 0.0
        %2136 = vmatpush2.xpose.msra.mxu0 0.0
        %2137 = vmatprep.subr.mxu0 0.0
        %2138 = vmatpush2.xpose.msra.mxu0 0.0
        %2139 = vmatprep.mubr.f32.mxu0 0.0
        %2140 = vmatmul.mubr.f32.gmra.mxu0 %v2070
        %v2141 = vpop.f32.mrf.mxu0
        %v2142 = vadd.f32 0.0, %v2141
        %v2143 = vpop.f32.mrf.mxu0
        %2144 = vdwg.mxu0
        %v2146 = vsel %vm1156, %v577, 0
        %v2149 = vsel %vm1156, %v865, 0
        %2151 = vmatprep.subr.mxu0 0.0
        %2152 = vmatpush1.xpose.msra.mxu0 0.0
        %2153 = vmatprep.subr.mxu0 0.0
        %2154 = vmatpush1.xpose.msra.mxu0 0.0
        %2155 = vmatprep.subr.mxu0 0.0
        %2156 = vmatpush1.xpose.msra.mxu0 0.0
        %2157 = vmatprep.subr.mxu0 0.0
        %2158 = vmatpush1.xpose.msra.mxu0 0.0
        %2159 = vmatprep.subr.mxu0 0.0
        %2160 = vmatpush1.xpose.msra.mxu0 0.0
        %2161 = vmatprep.subr.mxu0 0.0
        %2162 = vmatpush1.xpose.msra.mxu0 0.0
        %2163 = vmatprep.subr.mxu0 0.0
        %2164 = vmatpush1.xpose.msra.mxu0 0.0
        %2165 = vmatprep.subr.mxu0 0.0
        %2166 = vmatpush1.xpose.msra.mxu0 0.0
        %2167 = vmatprep.subr.mxu0 0.0
        %2168 = vmatpush1.xpose.msra.mxu0 0.0
        %2169 = vmatprep.subr.mxu0 0.0
        %2170 = vmatpush1.xpose.msra.mxu0 0.0
        %2171 = vmatprep.subr.mxu0 0.0
        %2172 = vmatpush1.xpose.msra.mxu0 0.0
        %2173 = vmatprep.subr.mxu0 0.0
        %2174 = vmatpush1.xpose.msra.mxu0 0.0
        %2175 = vmatprep.subr.mxu0 0.0
        %2176 = vmatpush1.xpose.msra.mxu0 0.0
        %2177 = vmatprep.subr.mxu0 0.0
        %2178 = vmatpush1.xpose.msra.mxu0 0.0
        %2179 = vmatprep.subr.mxu0 0.0
        %2180 = vmatpush1.xpose.msra.mxu0 0.0
        %2181 = vmatprep.subr.mxu0 0.0
        %2182 = vmatpush1.xpose.msra.mxu0 %v2149
        %2183 = vmatprep.subr.mxu0 0.0
        %2184 = vmatpush2.xpose.msra.mxu0 0.0
        %2185 = vmatprep.subr.mxu0 0.0
        %2186 = vmatpush2.xpose.msra.mxu0 0.0
        %2187 = vmatprep.subr.mxu0 0.0
        %2188 = vmatpush2.xpose.msra.mxu0 0.0
        %2189 = vmatprep.subr.mxu0 0.0
        %2190 = vmatpush2.xpose.msra.mxu0 0.0
        %2191 = vmatprep.subr.mxu0 0.0
        %2192 = vmatpush2.xpose.msra.mxu0 0.0
        %2193 = vmatprep.subr.mxu0 0.0
        %2194 = vmatpush2.xpose.msra.mxu0 0.0
        %2195 = vmatprep.subr.mxu0 0.0
        %2196 = vmatpush2.xpose.msra.mxu0 0.0
        %2197 = vmatprep.subr.mxu0 0.0
        %2198 = vmatpush2.xpose.msra.mxu0 0.0
        %2199 = vmatprep.subr.mxu0 0.0
        %2200 = vmatpush2.xpose.msra.mxu0 0.0
        %2201 = vmatprep.subr.mxu0 0.0
        %2202 = vmatpush2.xpose.msra.mxu0 0.0
        %2203 = vmatprep.subr.mxu0 0.0
        %2204 = vmatpush2.xpose.msra.mxu0 0.0
        %2205 = vmatprep.subr.mxu0 0.0
        %2206 = vmatpush2.xpose.msra.mxu0 0.0
        %2207 = vmatprep.subr.mxu0 0.0
        %2208 = vmatpush2.xpose.msra.mxu0 0.0
        %2209 = vmatprep.subr.mxu0 0.0
        %2210 = vmatpush2.xpose.msra.mxu0 0.0
        %2211 = vmatprep.subr.mxu0 0.0
        %2212 = vmatpush2.xpose.msra.mxu0 0.0
        %2213 = vmatprep.subr.mxu0 0.0
        %2214 = vmatpush2.xpose.msra.mxu0 0.0
        %2215 = vmatprep.mubr.f32.mxu0 0.0
        %2216 = vmatmul.mubr.f32.gmra.mxu0 %v2146
        %v2217 = vpop.f32.mrf.mxu0
        %v2218 = vadd.f32 0.0, %v2217
        %v2219 = vpop.f32.mrf.mxu0
        %2220 = vdwg.mxu0
        %v2222 = vsel %vm1156, %v578, 0
        %v2225 = vsel %vm1156, %v866, 0
        %2227 = vmatprep.subr.mxu0 0.0
        %2228 = vmatpush1.xpose.msra.mxu0 0.0
        %2229 = vmatprep.subr.mxu0 0.0
        %2230 = vmatpush1.xpose.msra.mxu0 0.0
        %2231 = vmatprep.subr.mxu0 0.0
        %2232 = vmatpush1.xpose.msra.mxu0 0.0
        %2233 = vmatprep.subr.mxu0 0.0
        %2234 = vmatpush1.xpose.msra.mxu0 0.0
        %2235 = vmatprep.subr.mxu0 0.0
        %2236 = vmatpush1.xpose.msra.mxu0 0.0
        %2237 = vmatprep.subr.mxu0 0.0
        %2238 = vmatpush1.xpose.msra.mxu0 0.0
        %2239 = vmatprep.subr.mxu0 0.0
        %2240 = vmatpush1.xpose.msra.mxu0 0.0
        %2241 = vmatprep.subr.mxu0 0.0
        %2242 = vmatpush1.xpose.msra.mxu0 0.0
        %2243 = vmatprep.subr.mxu0 0.0
        %2244 = vmatpush1.xpose.msra.mxu0 0.0
        %2245 = vmatprep.subr.mxu0 0.0
        %2246 = vmatpush1.xpose.msra.mxu0 0.0
        %2247 = vmatprep.subr.mxu0 0.0
        %2248 = vmatpush1.xpose.msra.mxu0 0.0
        %2249 = vmatprep.subr.mxu0 0.0
        %2250 = vmatpush1.xpose.msra.mxu0 0.0
        %2251 = vmatprep.subr.mxu0 0.0
        %2252 = vmatpush1.xpose.msra.mxu0 0.0
        %2253 = vmatprep.subr.mxu0 0.0
        %2254 = vmatpush1.xpose.msra.mxu0 0.0
        %2255 = vmatprep.subr.mxu0 0.0
        %2256 = vmatpush1.xpose.msra.mxu0 0.0
        %2257 = vmatprep.subr.mxu0 0.0
        %2258 = vmatpush1.xpose.msra.mxu0 %v2225
        %2259 = vmatprep.subr.mxu0 0.0
        %2260 = vmatpush2.xpose.msra.mxu0 0.0
        %2261 = vmatprep.subr.mxu0 0.0
        %2262 = vmatpush2.xpose.msra.mxu0 0.0
        %2263 = vmatprep.subr.mxu0 0.0
        %2264 = vmatpush2.xpose.msra.mxu0 0.0
        %2265 = vmatprep.subr.mxu0 0.0
        %2266 = vmatpush2.xpose.msra.mxu0 0.0
        %2267 = vmatprep.subr.mxu0 0.0
        %2268 = vmatpush2.xpose.msra.mxu0 0.0
        %2269 = vmatprep.subr.mxu0 0.0
        %2270 = vmatpush2.xpose.msra.mxu0 0.0
        %2271 = vmatprep.subr.mxu0 0.0
        %2272 = vmatpush2.xpose.msra.mxu0 0.0
        %2273 = vmatprep.subr.mxu0 0.0
        %2274 = vmatpush2.xpose.msra.mxu0 0.0
        %2275 = vmatprep.subr.mxu0 0.0
        %2276 = vmatpush2.xpose.msra.mxu0 0.0
        %2277 = vmatprep.subr.mxu0 0.0
        %2278 = vmatpush2.xpose.msra.mxu0 0.0
        %2279 = vmatprep.subr.mxu0 0.0
        %2280 = vmatpush2.xpose.msra.mxu0 0.0
        %2281 = vmatprep.subr.mxu0 0.0
        %2282 = vmatpush2.xpose.msra.mxu0 0.0
        %2283 = vmatprep.subr.mxu0 0.0
        %2284 = vmatpush2.xpose.msra.mxu0 0.0
        %2285 = vmatprep.subr.mxu0 0.0
        %2286 = vmatpush2.xpose.msra.mxu0 0.0
        %2287 = vmatprep.subr.mxu0 0.0
        %2288 = vmatpush2.xpose.msra.mxu0 0.0
        %2289 = vmatprep.subr.mxu0 0.0
        %2290 = vmatpush2.xpose.msra.mxu0 0.0
        %2291 = vmatprep.mubr.f32.mxu0 0.0
        %2292 = vmatmul.mubr.f32.gmra.mxu0 %v2222
        %v2293 = vpop.f32.mrf.mxu0
        %v2294 = vadd.f32 0.0, %v2293
        %v2295 = vpop.f32.mrf.mxu0
        %2296 = vdwg.mxu0
        %v2298 = vsel %vm1156, %v579, 0
        %v2301 = vsel %vm1156, %v867, 0
        %2303 = vmatprep.subr.mxu0 0.0
        %2304 = vmatpush1.xpose.msra.mxu0 0.0
        %2305 = vmatprep.subr.mxu0 0.0
        %2306 = vmatpush1.xpose.msra.mxu0 0.0
        %2307 = vmatprep.subr.mxu0 0.0
        %2308 = vmatpush1.xpose.msra.mxu0 0.0
        %2309 = vmatprep.subr.mxu0 0.0
        %2310 = vmatpush1.xpose.msra.mxu0 0.0
        %2311 = vmatprep.subr.mxu0 0.0
        %2312 = vmatpush1.xpose.msra.mxu0 0.0
        %2313 = vmatprep.subr.mxu0 0.0
        %2314 = vmatpush1.xpose.msra.mxu0 0.0
        %2315 = vmatprep.subr.mxu0 0.0
        %2316 = vmatpush1.xpose.msra.mxu0 0.0
        %2317 = vmatprep.subr.mxu0 0.0
        %2318 = vmatpush1.xpose.msra.mxu0 0.0
        %2319 = vmatprep.subr.mxu0 0.0
        %2320 = vmatpush1.xpose.msra.mxu0 0.0
        %2321 = vmatprep.subr.mxu0 0.0
        %2322 = vmatpush1.xpose.msra.mxu0 0.0
        %2323 = vmatprep.subr.mxu0 0.0
        %2324 = vmatpush1.xpose.msra.mxu0 0.0
        %2325 = vmatprep.subr.mxu0 0.0
        %2326 = vmatpush1.xpose.msra.mxu0 0.0
        %2327 = vmatprep.subr.mxu0 0.0
        %2328 = vmatpush1.xpose.msra.mxu0 0.0
        %2329 = vmatprep.subr.mxu0 0.0
        %2330 = vmatpush1.xpose.msra.mxu0 0.0
        %2331 = vmatprep.subr.mxu0 0.0
        %2332 = vmatpush1.xpose.msra.mxu0 0.0
        %2333 = vmatprep.subr.mxu0 0.0
        %2334 = vmatpush1.xpose.msra.mxu0 %v2301
        %2335 = vmatprep.subr.mxu0 0.0
        %2336 = vmatpush2.xpose.msra.mxu0 0.0
        %2337 = vmatprep.subr.mxu0 0.0
        %2338 = vmatpush2.xpose.msra.mxu0 0.0
        %2339 = vmatprep.subr.mxu0 0.0
        %2340 = vmatpush2.xpose.msra.mxu0 0.0
        %2341 = vmatprep.subr.mxu0 0.0
        %2342 = vmatpush2.xpose.msra.mxu0 0.0
        %2343 = vmatprep.subr.mxu0 0.0
        %2344 = vmatpush2.xpose.msra.mxu0 0.0
        %2345 = vmatprep.subr.mxu0 0.0
        %2346 = vmatpush2.xpose.msra.mxu0 0.0
        %2347 = vmatprep.subr.mxu0 0.0
        %2348 = vmatpush2.xpose.msra.mxu0 0.0
        %2349 = vmatprep.subr.mxu0 0.0
        %2350 = vmatpush2.xpose.msra.mxu0 0.0
        %2351 = vmatprep.subr.mxu0 0.0
        %2352 = vmatpush2.xpose.msra.mxu0 0.0
        %2353 = vmatprep.subr.mxu0 0.0
        %2354 = vmatpush2.xpose.msra.mxu0 0.0
        %2355 = vmatprep.subr.mxu0 0.0
        %2356 = vmatpush2.xpose.msra.mxu0 0.0
        %2357 = vmatprep.subr.mxu0 0.0
        %2358 = vmatpush2.xpose.msra.mxu0 0.0
        %2359 = vmatprep.subr.mxu0 0.0
        %2360 = vmatpush2.xpose.msra.mxu0 0.0
        %2361 = vmatprep.subr.mxu0 0.0
        %2362 = vmatpush2.xpose.msra.mxu0 0.0
        %2363 = vmatprep.subr.mxu0 0.0
        %2364 = vmatpush2.xpose.msra.mxu0 0.0
        %2365 = vmatprep.subr.mxu0 0.0
        %2366 = vmatpush2.xpose.msra.mxu0 0.0
        %2367 = vmatprep.mubr.f32.mxu0 0.0
        %2368 = vmatmul.mubr.f32.gmra.mxu0 %v2298
        %v2369 = vpop.f32.mrf.mxu0
        %v2370 = vadd.f32 0.0, %v2369
        %v2371 = vpop.f32.mrf.mxu0
        %2372 = vdwg.mxu0
        %v2373 = vmul.f32 %v1230, 0.17677669
        %v2374 = vmul.f32 %v1306, 0.17677669
        %v2375 = vmul.f32 %v1382, 0.17677669
        %v2376 = vmul.f32 %v1458, 0.17677669
        %v2377 = vmul.f32 %v1534, 0.17677669
        %v2378 = vmul.f32 %v1610, 0.17677669
        %v2379 = vmul.f32 %v1686, 0.17677669
        %v2380 = vmul.f32 %v1762, 0.17677669
        %v2381 = vmul.f32 %v1838, 0.17677669
        %v2382 = vmul.f32 %v1914, 0.17677669
        %v2383 = vmul.f32 %v1990, 0.17677669
        %v2384 = vmul.f32 %v2066, 0.17677669
        %v2385 = vmul.f32 %v2142, 0.17677669
        %v2386 = vmul.f32 %v2218, 0.17677669
        %v2387 = vmul.f32 %v2294, 0.17677669
        %v2388 = vmul.f32 %v2370, 0.17677669
        %vm2389 = vcmask 64512
        %v2390 = vsel %vm2389, %v2373, -inf
        %2391 = vmax.xlane.f32.xlu0 %v2390
        %v2392 = vpop.xlane.xlu0 %2391
        %v2393 = vsel %vm2389, %v2374, -inf
        %2394 = vmax.xlane.f32.xlu0 %v2393
        %v2395 = vpop.xlane.xlu0 %2394
        %v2396 = vsel %vm2389, %v2375, -inf
        %2397 = vmax.xlane.f32.xlu0 %v2396
        %v2398 = vpop.xlane.xlu0 %2397
        %v2399 = vsel %vm2389, %v2376, -inf
        %2400 = vmax.xlane.f32.xlu0 %v2399
        %v2401 = vpop.xlane.xlu0 %2400
        %v2402 = vsel %vm2389, %v2377, -inf
        %2403 = vmax.xlane.f32.xlu0 %v2402
        %v2404 = vpop.xlane.xlu0 %2403
        %v2405 = vsel %vm2389, %v2378, -inf
        %2406 = vmax.xlane.f32.xlu0 %v2405
        %v2407 = vpop.xlane.xlu0 %2406
        %v2408 = vsel %vm2389, %v2379, -inf
        %2409 = vmax.xlane.f32.xlu0 %v2408
        %v2410 = vpop.xlane.xlu0 %2409
        %v2411 = vsel %vm2389, %v2380, -inf
        %2412 = vmax.xlane.f32.xlu0 %v2411
        %v2413 = vpop.xlane.xlu0 %2412
        %v2414 = vsel %vm2389, %v2381, -inf
        %2415 = vmax.xlane.f32.xlu0 %v2414
        %v2416 = vpop.xlane.xlu0 %2415
        %v2417 = vsel %vm2389, %v2382, -inf
        %2418 = vmax.xlane.f32.xlu0 %v2417
        %v2419 = vpop.xlane.xlu0 %2418
        %v2420 = vsel %vm2389, %v2383, -inf
        %2421 = vmax.xlane.f32.xlu0 %v2420
        %v2422 = vpop.xlane.xlu0 %2421
        %v2423 = vsel %vm2389, %v2384, -inf
        %2424 = vmax.xlane.f32.xlu0 %v2423
        %v2425 = vpop.xlane.xlu0 %2424
        %v2426 = vsel %vm2389, %v2385, -inf
        %2427 = vmax.xlane.f32.xlu0 %v2426
        %v2428 = vpop.xlane.xlu0 %2427
        %v2429 = vsel %vm2389, %v2386, -inf
        %2430 = vmax.xlane.f32.xlu0 %v2429
        %v2431 = vpop.xlane.xlu0 %2430
        %v2432 = vsel %vm2389, %v2387, -inf
        %2433 = vmax.xlane.f32.xlu0 %v2432
        %v2434 = vpop.xlane.xlu0 %2433
        %v2435 = vsel %vm2389, %v2388, -inf
        %2436 = vmax.xlane.f32.xlu0 %v2435
        %v2437 = vpop.xlane.xlu0 %2436
        %v2438 = vsub.f32 %v2373, %v2392
        %v2439 = vsub.f32 %v2374, %v2395
        %v2440 = vsub.f32 %v2375, %v2398
        %v2441 = vsub.f32 %v2376, %v2401
        %v2442 = vsub.f32 %v2377, %v2404
        %v2443 = vsub.f32 %v2378, %v2407
        %v2444 = vsub.f32 %v2379, %v2410
        %v2445 = vsub.f32 %v2380, %v2413
        %v2446 = vsub.f32 %v2381, %v2416
        %v2447 = vsub.f32 %v2382, %v2419
        %v2448 = vsub.f32 %v2383, %v2422
        %v2449 = vsub.f32 %v2384, %v2425
        %v2450 = vsub.f32 %v2385, %v2428
        %v2451 = vsub.f32 %v2386, %v2431
        %v2452 = vsub.f32 %v2387, %v2434
        %v2453 = vsub.f32 %v2388, %v2437
        %v2454 = vmul.f32 %v2438, 1.442695
        %v2455 = vpow.pop %v2454
        %v2456 = vmul.f32 %v2439, 1.442695
        %v2457 = vpow.pop %v2456
        %v2458 = vmul.f32 %v2440, 1.442695
        %v2459 = vpow.pop %v2458
        %v2460 = vmul.f32 %v2441, 1.442695
        %v2461 = vpow.pop %v2460
        %v2462 = vmul.f32 %v2442, 1.442695
        %v2463 = vpow.pop %v2462
        %v2464 = vmul.f32 %v2443, 1.442695
        %v2465 = vpow.pop %v2464
        %v2466 = vmul.f32 %v2444, 1.442695
        %v2467 = vpow.pop %v2466
        %v2468 = vmul.f32 %v2445, 1.442695
        %v2469 = vpow.pop %v2468
        %v2470 = vmul.f32 %v2446, 1.442695
        %v2471 = vpow.pop %v2470
        %v2472 = vmul.f32 %v2447, 1.442695
        %v2473 = vpow.pop %v2472
        %v2474 = vmul.f32 %v2448, 1.442695
        %v2475 = vpow.pop %v2474
        %v2476 = vmul.f32 %v2449, 1.442695
        %v2477 = vpow.pop %v2476
        %v2478 = vmul.f32 %v2450, 1.442695
        %v2479 = vpow.pop %v2478
        %v2480 = vmul.f32 %v2451, 1.442695
        %v2481 = vpow.pop %v2480
        %v2482 = vmul.f32 %v2452, 1.442695
        %v2483 = vpow.pop %v2482
        %v2484 = vmul.f32 %v2453, 1.442695
        %v2485 = vpow.pop %v2484
        %v2486 = vsel %vm2389, %v2455, 0.0
        %2487 = vadd.xlane.f32.xlu0 %v2486
        %v2488 = vpop.xlane.xlu0 %2487
        %v2489 = vsel %vm2389, %v2457, 0.0
        %2490 = vadd.xlane.f32.xlu0 %v2489
        %v2491 = vpop.xlane.xlu0 %2490
        %v2492 = vsel %vm2389, %v2459, 0.0
        %2493 = vadd.xlane.f32.xlu0 %v2492
        %v2494 = vpop.xlane.xlu0 %2493
        %v2495 = vsel %vm2389, %v2461, 0.0
        %2496 = vadd.xlane.f32.xlu0 %v2495
        %v2497 = vpop.xlane.xlu0 %2496
        %v2498 = vsel %vm2389, %v2463, 0.0
        %2499 = vadd.xlane.f32.xlu0 %v2498
        %v2500 = vpop.xlane.xlu0 %2499
        %v2501 = vsel %vm2389, %v2465, 0.0
        %2502 = vadd.xlane.f32.xlu0 %v2501
        %v2503 = vpop.xlane.xlu0 %2502
        %v2504 = vsel %vm2389, %v2467, 0.0
        %2505 = vadd.xlane.f32.xlu0 %v2504
        %v2506 = vpop.xlane.xlu0 %2505
        %v2507 = vsel %vm2389, %v2469, 0.0
        %2508 = vadd.xlane.f32.xlu0 %v2507
        %v2509 = vpop.xlane.xlu0 %2508
        %v2510 = vsel %vm2389, %v2471, 0.0
        %2511 = vadd.xlane.f32.xlu0 %v2510
        %v2512 = vpop.xlane.xlu0 %2511
        %v2513 = vsel %vm2389, %v2473, 0.0
        %2514 = vadd.xlane.f32.xlu0 %v2513
        %v2515 = vpop.xlane.xlu0 %2514
        %v2516 = vsel %vm2389, %v2475, 0.0
        %2517 = vadd.xlane.f32.xlu0 %v2516
        %v2518 = vpop.xlane.xlu0 %2517
        %v2519 = vsel %vm2389, %v2477, 0.0
        %2520 = vadd.xlane.f32.xlu0 %v2519
        %v2521 = vpop.xlane.xlu0 %2520
        %v2522 = vsel %vm2389, %v2479, 0.0
        %2523 = vadd.xlane.f32.xlu0 %v2522
        %v2524 = vpop.xlane.xlu0 %2523
        %v2525 = vsel %vm2389, %v2481, 0.0
        %2526 = vadd.xlane.f32.xlu0 %v2525
        %v2527 = vpop.xlane.xlu0 %2526
        %v2528 = vsel %vm2389, %v2483, 0.0
        %2529 = vadd.xlane.f32.xlu0 %v2528
        %v2530 = vpop.xlane.xlu0 %2529
        %v2531 = vsel %vm2389, %v2485, 0.0
        %2532 = vadd.xlane.f32.xlu0 %v2531
        %v2533 = vpop.xlane.xlu0 %2532
        %v2534 = vrcp.pop %v2488
        %v2535 = vrcp.pop %v2491
        %v2536 = vrcp.pop %v2494
        %v2537 = vrcp.pop %v2497
        %v2538 = vrcp.pop %v2500
        %v2539 = vrcp.pop %v2503
        %v2540 = vrcp.pop %v2506
        %v2541 = vrcp.pop %v2509
        %v2542 = vrcp.pop %v2512
        %v2543 = vrcp.pop %v2515
        %v2544 = vrcp.pop %v2518
        %v2545 = vrcp.pop %v2521
        %v2546 = vrcp.pop %v2524
        %v2547 = vrcp.pop %v2527
        %v2548 = vrcp.pop %v2530
        %v2549 = vrcp.pop %v2533
        %v2550 = vmul.f32 %v2455, %v2534
        %v2551 = vmul.f32 %v2457, %v2535
        %v2552 = vmul.f32 %v2459, %v2536
        %v2553 = vmul.f32 %v2461, %v2537
        %v2554 = vmul.f32 %v2463, %v2538
        %v2555 = vmul.f32 %v2465, %v2539
        %v2556 = vmul.f32 %v2467, %v2540
        %v2557 = vmul.f32 %v2469, %v2541
        %v2558 = vmul.f32 %v2471, %v2542
        %v2559 = vmul.f32 %v2473, %v2543
        %v2560 = vmul.f32 %v2475, %v2544
        %v2561 = vmul.f32 %v2477, %v2545
        %v2562 = vmul.f32 %v2479, %v2546
        %v2563 = vmul.f32 %v2481, %v2547
        %v2564 = vmul.f32 %v2483, %v2548
        %v2565 = vmul.f32 %v2485, %v2549
        %v2567 = vsel %vm2389, %v2550, 0
        %2569 = vmatprep.subr.mxu0 0.0
        %2570 = vmatpush1.msra.mxu0 0.0
        %2571 = vmatprep.subr.mxu0 0.0
        %2572 = vmatpush1.msra.mxu0 0.0
        %2573 = vmatprep.subr.mxu0 0.0
        %2574 = vmatpush1.msra.mxu0 0.0
        %2575 = vmatprep.subr.mxu0 0.0
        %2576 = vmatpush1.msra.mxu0 0.0
        %2577 = vmatprep.subr.mxu0 0.0
        %2578 = vmatpush1.msra.mxu0 0.0
        %2579 = vmatprep.subr.mxu0 0.0
        %2580 = vmatpush1.msra.mxu0 0.0
        %2581 = vmatprep.subr.mxu0 0.0
        %2582 = vmatpush1.msra.mxu0 0.0
        %2583 = vmatprep.subr.mxu0 0.0
        %2584 = vmatpush1.msra.mxu0 0.0
        %2585 = vmatprep.subr.mxu0 0.0
        %2586 = vmatpush1.msra.mxu0 0.0
        %2587 = vmatprep.subr.mxu0 0.0
        %2588 = vmatpush1.msra.mxu0 0.0
        %2589 = vmatprep.subr.mxu0 0.0
        %2590 = vmatpush1.msra.mxu0 0.0
        %2591 = vmatprep.subr.mxu0 0.0
        %2592 = vmatpush1.msra.mxu0 0.0
        %2593 = vmatprep.subr.mxu0 0.0
        %2594 = vmatpush1.msra.mxu0 0.0
        %2595 = vmatprep.subr.mxu0 0.0
        %2596 = vmatpush1.msra.mxu0 0.0
        %2597 = vmatprep.subr.mxu0 0.0
        %2598 = vmatpush1.msra.mxu0 0.0
        %2599 = vmatprep.subr.mxu0 0.0
        %2600 = vmatpush1.msra.mxu0 %v1012
        %2601 = vmatprep.subr.mxu0 0.0
        %2602 = vmatpush2.msra.mxu0 0.0
        %2603 = vmatprep.subr.mxu0 0.0
        %2604 = vmatpush2.msra.mxu0 0.0
        %2605 = vmatprep.subr.mxu0 0.0
        %2606 = vmatpush2.msra.mxu0 0.0
        %2607 = vmatprep.subr.mxu0 0.0
        %2608 = vmatpush2.msra.mxu0 0.0
        %2609 = vmatprep.subr.mxu0 0.0
        %2610 = vmatpush2.msra.mxu0 0.0
        %2611 = vmatprep.subr.mxu0 0.0
        %2612 = vmatpush2.msra.mxu0 0.0
        %2613 = vmatprep.subr.mxu0 0.0
        %2614 = vmatpush2.msra.mxu0 0.0
        %2615 = vmatprep.subr.mxu0 0.0
        %2616 = vmatpush2.msra.mxu0 0.0
        %2617 = vmatprep.subr.mxu0 0.0
        %2618 = vmatpush2.msra.mxu0 0.0
        %2619 = vmatprep.subr.mxu0 0.0
        %2620 = vmatpush2.msra.mxu0 0.0
        %2621 = vmatprep.subr.mxu0 0.0
        %2622 = vmatpush2.msra.mxu0 0.0
        %2623 = vmatprep.subr.mxu0 0.0
        %2624 = vmatpush2.msra.mxu0 0.0
        %2625 = vmatprep.subr.mxu0 0.0
        %2626 = vmatpush2.msra.mxu0 0.0
        %2627 = vmatprep.subr.mxu0 0.0
        %2628 = vmatpush2.msra.mxu0 0.0
        %2629 = vmatprep.subr.mxu0 0.0
        %2630 = vmatpush2.msra.mxu0 0.0
        %2631 = vmatprep.subr.mxu0 0.0
        %2632 = vmatpush2.msra.mxu0 0.0
        %2633 = vmatprep.mubr.f32.mxu0 0.0
        %2634 = vmatmul.mubr.f32.gmra.mxu0 %v2567
        %v2635 = vpop.f32.mrf.mxu0
        %v2636 = vadd.f32 0.0, %v2635
        %v2637 = vpop.f32.mrf.mxu0
        %2638 = vdwg.mxu0
        %v2640 = vsel %vm2389, %v2551, 0
        %2642 = vmatprep.subr.mxu0 0.0
        %2643 = vmatpush1.msra.mxu0 0.0
        %2644 = vmatprep.subr.mxu0 0.0
        %2645 = vmatpush1.msra.mxu0 0.0
        %2646 = vmatprep.subr.mxu0 0.0
        %2647 = vmatpush1.msra.mxu0 0.0
        %2648 = vmatprep.subr.mxu0 0.0
        %2649 = vmatpush1.msra.mxu0 0.0
        %2650 = vmatprep.subr.mxu0 0.0
        %2651 = vmatpush1.msra.mxu0 0.0
        %2652 = vmatprep.subr.mxu0 0.0
        %2653 = vmatpush1.msra.mxu0 0.0
        %2654 = vmatprep.subr.mxu0 0.0
        %2655 = vmatpush1.msra.mxu0 0.0
        %2656 = vmatprep.subr.mxu0 0.0
        %2657 = vmatpush1.msra.mxu0 0.0
        %2658 = vmatprep.subr.mxu0 0.0
        %2659 = vmatpush1.msra.mxu0 0.0
        %2660 = vmatprep.subr.mxu0 0.0
        %2661 = vmatpush1.msra.mxu0 0.0
        %2662 = vmatprep.subr.mxu0 0.0
        %2663 = vmatpush1.msra.mxu0 0.0
        %2664 = vmatprep.subr.mxu0 0.0
        %2665 = vmatpush1.msra.mxu0 0.0
        %2666 = vmatprep.subr.mxu0 0.0
        %2667 = vmatpush1.msra.mxu0 0.0
        %2668 = vmatprep.subr.mxu0 0.0
        %2669 = vmatpush1.msra.mxu0 0.0
        %2670 = vmatprep.subr.mxu0 0.0
        %2671 = vmatpush1.msra.mxu0 0.0
        %2672 = vmatprep.subr.mxu0 0.0
        %2673 = vmatpush1.msra.mxu0 %v1013
        %2674 = vmatprep.subr.mxu0 0.0
        %2675 = vmatpush2.msra.mxu0 0.0
        %2676 = vmatprep.subr.mxu0 0.0
        %2677 = vmatpush2.msra.mxu0 0.0
        %2678 = vmatprep.subr.mxu0 0.0
        %2679 = vmatpush2.msra.mxu0 0.0
        %2680 = vmatprep.subr.mxu0 0.0
        %2681 = vmatpush2.msra.mxu0 0.0
        %2682 = vmatprep.subr.mxu0 0.0
        %2683 = vmatpush2.msra.mxu0 0.0
        %2684 = vmatprep.subr.mxu0 0.0
        %2685 = vmatpush2.msra.mxu0 0.0
        %2686 = vmatprep.subr.mxu0 0.0
        %2687 = vmatpush2.msra.mxu0 0.0
        %2688 = vmatprep.subr.mxu0 0.0
        %2689 = vmatpush2.msra.mxu0 0.0
        %2690 = vmatprep.subr.mxu0 0.0
        %2691 = vmatpush2.msra.mxu0 0.0
        %2692 = vmatprep.subr.mxu0 0.0
        %2693 = vmatpush2.msra.mxu0 0.0
        %2694 = vmatprep.subr.mxu0 0.0
        %2695 = vmatpush2.msra.mxu0 0.0
        %2696 = vmatprep.subr.mxu0 0.0
        %2697 = vmatpush2.msra.mxu0 0.0
        %2698 = vmatprep.subr.mxu0 0.0
        %2699 = vmatpush2.msra.mxu0 0.0
        %2700 = vmatprep.subr.mxu0 0.0
        %2701 = vmatpush2.msra.mxu0 0.0
        %2702 = vmatprep.subr.mxu0 0.0
        %2703 = vmatpush2.msra.mxu0 0.0
        %2704 = vmatprep.subr.mxu0 0.0
        %2705 = vmatpush2.msra.mxu0 0.0
        %2706 = vmatprep.mubr.f32.mxu0 0.0
        %2707 = vmatmul.mubr.f32.gmra.mxu0 %v2640
        %v2708 = vpop.f32.mrf.mxu0
        %v2709 = vadd.f32 0.0, %v2708
        %v2710 = vpop.f32.mrf.mxu0
        %2711 = vdwg.mxu0
        %v2713 = vsel %vm2389, %v2552, 0
        %2715 = vmatprep.subr.mxu0 0.0
        %2716 = vmatpush1.msra.mxu0 0.0
        %2717 = vmatprep.subr.mxu0 0.0
        %2718 = vmatpush1.msra.mxu0 0.0
        %2719 = vmatprep.subr.mxu0 0.0
        %2720 = vmatpush1.msra.mxu0 0.0
        %2721 = vmatprep.subr.mxu0 0.0
        %2722 = vmatpush1.msra.mxu0 0.0
        %2723 = vmatprep.subr.mxu0 0.0
        %2724 = vmatpush1.msra.mxu0 0.0
        %2725 = vmatprep.subr.mxu0 0.0
        %2726 = vmatpush1.msra.mxu0 0.0
        %2727 = vmatprep.subr.mxu0 0.0
        %2728 = vmatpush1.msra.mxu0 0.0
        %2729 = vmatprep.subr.mxu0 0.0
        %2730 = vmatpush1.msra.mxu0 0.0
        %2731 = vmatprep.subr.mxu0 0.0
        %2732 = vmatpush1.msra.mxu0 0.0
        %2733 = vmatprep.subr.mxu0 0.0
        %2734 = vmatpush1.msra.mxu0 0.0
        %2735 = vmatprep.subr.mxu0 0.0
        %2736 = vmatpush1.msra.mxu0 0.0
        %2737 = vmatprep.subr.mxu0 0.0
        %2738 = vmatpush1.msra.mxu0 0.0
        %2739 = vmatprep.subr.mxu0 0.0
        %2740 = vmatpush1.msra.mxu0 0.0
        %2741 = vmatprep.subr.mxu0 0.0
        %2742 = vmatpush1.msra.mxu0 0.0
        %2743 = vmatprep.subr.mxu0 0.0
        %2744 = vmatpush1.msra.mxu0 0.0
        %2745 = vmatprep.subr.mxu0 0.0
        %2746 = vmatpush1.msra.mxu0 %v1014
        %2747 = vmatprep.subr.mxu0 0.0
        %2748 = vmatpush2.msra.mxu0 0.0
        %2749 = vmatprep.subr.mxu0 0.0
        %2750 = vmatpush2.msra.mxu0 0.0
        %2751 = vmatprep.subr.mxu0 0.0
        %2752 = vmatpush2.msra.mxu0 0.0
        %2753 = vmatprep.subr.mxu0 0.0
        %2754 = vmatpush2.msra.mxu0 0.0
        %2755 = vmatprep.subr.mxu0 0.0
        %2756 = vmatpush2.msra.mxu0 0.0
        %2757 = vmatprep.subr.mxu0 0.0
        %2758 = vmatpush2.msra.mxu0 0.0
        %2759 = vmatprep.subr.mxu0 0.0
        %2760 = vmatpush2.msra.mxu0 0.0
        %2761 = vmatprep.subr.mxu0 0.0
        %2762 = vmatpush2.msra.mxu0 0.0
        %2763 = vmatprep.subr.mxu0 0.0
        %2764 = vmatpush2.msra.mxu0 0.0
        %2765 = vmatprep.subr.mxu0 0.0
        %2766 = vmatpush2.msra.mxu0 0.0
        %2767 = vmatprep.subr.mxu0 0.0
        %2768 = vmatpush2.msra.mxu0 0.0
        %2769 = vmatprep.subr.mxu0 0.0
        %2770 = vmatpush2.msra.mxu0 0.0
        %2771 = vmatprep.subr.mxu0 0.0
        %2772 = vmatpush2.msra.mxu0 0.0
        %2773 = vmatprep.subr.mxu0 0.0
        %2774 = vmatpush2.msra.mxu0 0.0
        %2775 = vmatprep.subr.mxu0 0.0
        %2776 = vmatpush2.msra.mxu0 0.0
        %2777 = vmatprep.subr.mxu0 0.0
        %2778 = vmatpush2.msra.mxu0 0.0
        %2779 = vmatprep.mubr.f32.mxu0 0.0
        %2780 = vmatmul.mubr.f32.gmra.mxu0 %v2713
        %v2781 = vpop.f32.mrf.mxu0
        %v2782 = vadd.f32 0.0, %v2781
        %v2783 = vpop.f32.mrf.mxu0
        %2784 = vdwg.mxu0
        %v2786 = vsel %vm2389, %v2553, 0
        %2788 = vmatprep.subr.mxu0 0.0
        %2789 = vmatpush1.msra.mxu0 0.0
        %2790 = vmatprep.subr.mxu0 0.0
        %2791 = vmatpush1.msra.mxu0 0.0
        %2792 = vmatprep.subr.mxu0 0.0
        %2793 = vmatpush1.msra.mxu0 0.0
        %2794 = vmatprep.subr.mxu0 0.0
        %2795 = vmatpush1.msra.mxu0 0.0
        %2796 = vmatprep.subr.mxu0 0.0
        %2797 = vmatpush1.msra.mxu0 0.0
        %2798 = vmatprep.subr.mxu0 0.0
        %2799 = vmatpush1.msra.mxu0 0.0
        %2800 = vmatprep.subr.mxu0 0.0
        %2801 = vmatpush1.msra.mxu0 0.0
        %2802 = vmatprep.subr.mxu0 0.0
        %2803 = vmatpush1.msra.mxu0 0.0
        %2804 = vmatprep.subr.mxu0 0.0
        %2805 = vmatpush1.msra.mxu0 0.0
        %2806 = vmatprep.subr.mxu0 0.0
        %2807 = vmatpush1.msra.mxu0 0.0
        %2808 = vmatprep.subr.mxu0 0.0
        %2809 = vmatpush1.msra.mxu0 0.0
        %2810 = vmatprep.subr.mxu0 0.0
        %2811 = vmatpush1.msra.mxu0 0.0
        %2812 = vmatprep.subr.mxu0 0.0
        %2813 = vmatpush1.msra.mxu0 0.0
        %2814 = vmatprep.subr.mxu0 0.0
        %2815 = vmatpush1.msra.mxu0 0.0
        %2816 = vmatprep.subr.mxu0 0.0
        %2817 = vmatpush1.msra.mxu0 0.0
        %2818 = vmatprep.subr.mxu0 0.0
        %2819 = vmatpush1.msra.mxu0 %v1015
        %2820 = vmatprep.subr.mxu0 0.0
        %2821 = vmatpush2.msra.mxu0 0.0
        %2822 = vmatprep.subr.mxu0 0.0
        %2823 = vmatpush2.msra.mxu0 0.0
        %2824 = vmatprep.subr.mxu0 0.0
        %2825 = vmatpush2.msra.mxu0 0.0
        %2826 = vmatprep.subr.mxu0 0.0
        %2827 = vmatpush2.msra.mxu0 0.0
        %2828 = vmatprep.subr.mxu0 0.0
        %2829 = vmatpush2.msra.mxu0 0.0
        %2830 = vmatprep.subr.mxu0 0.0
        %2831 = vmatpush2.msra.mxu0 0.0
        %2832 = vmatprep.subr.mxu0 0.0
        %2833 = vmatpush2.msra.mxu0 0.0
        %2834 = vmatprep.subr.mxu0 0.0
        %2835 = vmatpush2.msra.mxu0 0.0
        %2836 = vmatprep.subr.mxu0 0.0
        %2837 = vmatpush2.msra.mxu0 0.0
        %2838 = vmatprep.subr.mxu0 0.0
        %2839 = vmatpush2.msra.mxu0 0.0
        %2840 = vmatprep.subr.mxu0 0.0
        %2841 = vmatpush2.msra.mxu0 0.0
        %2842 = vmatprep.subr.mxu0 0.0
        %2843 = vmatpush2.msra.mxu0 0.0
        %2844 = vmatprep.subr.mxu0 0.0
        %2845 = vmatpush2.msra.mxu0 0.0
        %2846 = vmatprep.subr.mxu0 0.0
        %2847 = vmatpush2.msra.mxu0 0.0
        %2848 = vmatprep.subr.mxu0 0.0
        %2849 = vmatpush2.msra.mxu0 0.0
        %2850 = vmatprep.subr.mxu0 0.0
        %2851 = vmatpush2.msra.mxu0 0.0
        %2852 = vmatprep.mubr.f32.mxu0 0.0
        %2853 = vmatmul.mubr.f32.gmra.mxu0 %v2786
        %v2854 = vpop.f32.mrf.mxu0
        %v2855 = vadd.f32 0.0, %v2854
        %v2856 = vpop.f32.mrf.mxu0
        %2857 = vdwg.mxu0
        %v2859 = vsel %vm2389, %v2554, 0
        %2861 = vmatprep.subr.mxu0 0.0
        %2862 = vmatpush1.msra.mxu0 0.0
        %2863 = vmatprep.subr.mxu0 0.0
        %2864 = vmatpush1.msra.mxu0 0.0
        %2865 = vmatprep.subr.mxu0 0.0
        %2866 = vmatpush1.msra.mxu0 0.0
        %2867 = vmatprep.subr.mxu0 0.0
        %2868 = vmatpush1.msra.mxu0 0.0
        %2869 = vmatprep.subr.mxu0 0.0
        %2870 = vmatpush1.msra.mxu0 0.0
        %2871 = vmatprep.subr.mxu0 0.0
        %2872 = vmatpush1.msra.mxu0 0.0
        %2873 = vmatprep.subr.mxu0 0.0
        %2874 = vmatpush1.msra.mxu0 0.0
        %2875 = vmatprep.subr.mxu0 0.0
        %2876 = vmatpush1.msra.mxu0 0.0
        %2877 = vmatprep.subr.mxu0 0.0
        %2878 = vmatpush1.msra.mxu0 0.0
        %2879 = vmatprep.subr.mxu0 0.0
        %2880 = vmatpush1.msra.mxu0 0.0
        %2881 = vmatprep.subr.mxu0 0.0
        %2882 = vmatpush1.msra.mxu0 0.0
        %2883 = vmatprep.subr.mxu0 0.0
        %2884 = vmatpush1.msra.mxu0 0.0
        %2885 = vmatprep.subr.mxu0 0.0
        %2886 = vmatpush1.msra.mxu0 0.0
        %2887 = vmatprep.subr.mxu0 0.0
        %2888 = vmatpush1.msra.mxu0 0.0
        %2889 = vmatprep.subr.mxu0 0.0
        %2890 = vmatpush1.msra.mxu0 0.0
        %2891 = vmatprep.subr.mxu0 0.0
        %2892 = vmatpush1.msra.mxu0 %v1016
        %2893 = vmatprep.subr.mxu0 0.0
        %2894 = vmatpush2.msra.mxu0 0.0
        %2895 = vmatprep.subr.mxu0 0.0
        %2896 = vmatpush2.msra.mxu0 0.0
        %2897 = vmatprep.subr.mxu0 0.0
        %2898 = vmatpush2.msra.mxu0 0.0
        %2899 = vmatprep.subr.mxu0 0.0
        %2900 = vmatpush2.msra.mxu0 0.0
        %2901 = vmatprep.subr.mxu0 0.0
        %2902 = vmatpush2.msra.mxu0 0.0
        %2903 = vmatprep.subr.mxu0 0.0
        %2904 = vmatpush2.msra.mxu0 0.0
        %2905 = vmatprep.subr.mxu0 0.0
        %2906 = vmatpush2.msra.mxu0 0.0
        %2907 = vmatprep.subr.mxu0 0.0
        %2908 = vmatpush2.msra.mxu0 0.0
        %2909 = vmatprep.subr.mxu0 0.0
        %2910 = vmatpush2.msra.mxu0 0.0
        %2911 = vmatprep.subr.mxu0 0.0
        %2912 = vmatpush2.msra.mxu0 0.0
        %2913 = vmatprep.subr.mxu0 0.0
        %2914 = vmatpush2.msra.mxu0 0.0
        %2915 = vmatprep.subr.mxu0 0.0
        %2916 = vmatpush2.msra.mxu0 0.0
        %2917 = vmatprep.subr.mxu0 0.0
        %2918 = vmatpush2.msra.mxu0 0.0
        %2919 = vmatprep.subr.mxu0 0.0
        %2920 = vmatpush2.msra.mxu0 0.0
        %2921 = vmatprep.subr.mxu0 0.0
        %2922 = vmatpush2.msra.mxu0 0.0
        %2923 = vmatprep.subr.mxu0 0.0
        %2924 = vmatpush2.msra.mxu0 0.0
        %2925 = vmatprep.mubr.f32.mxu0 0.0
        %2926 = vmatmul.mubr.f32.gmra.mxu0 %v2859
        %v2927 = vpop.f32.mrf.mxu0
        %v2928 = vadd.f32 0.0, %v2927
        %v2929 = vpop.f32.mrf.mxu0
        %2930 = vdwg.mxu0
        %v2932 = vsel %vm2389, %v2555, 0
        %2934 = vmatprep.subr.mxu0 0.0
        %2935 = vmatpush1.msra.mxu0 0.0
        %2936 = vmatprep.subr.mxu0 0.0
        %2937 = vmatpush1.msra.mxu0 0.0
        %2938 = vmatprep.subr.mxu0 0.0
        %2939 = vmatpush1.msra.mxu0 0.0
        %2940 = vmatprep.subr.mxu0 0.0
        %2941 = vmatpush1.msra.mxu0 0.0
        %2942 = vmatprep.subr.mxu0 0.0
        %2943 = vmatpush1.msra.mxu0 0.0
        %2944 = vmatprep.subr.mxu0 0.0
        %2945 = vmatpush1.msra.mxu0 0.0
        %2946 = vmatprep.subr.mxu0 0.0
        %2947 = vmatpush1.msra.mxu0 0.0
        %2948 = vmatprep.subr.mxu0 0.0
        %2949 = vmatpush1.msra.mxu0 0.0
        %2950 = vmatprep.subr.mxu0 0.0
        %2951 = vmatpush1.msra.mxu0 0.0
        %2952 = vmatprep.subr.mxu0 0.0
        %2953 = vmatpush1.msra.mxu0 0.0
        %2954 = vmatprep.subr.mxu0 0.0
        %2955 = vmatpush1.msra.mxu0 0.0
        %2956 = vmatprep.subr.mxu0 0.0
        %2957 = vmatpush1.msra.mxu0 0.0
        %2958 = vmatprep.subr.mxu0 0.0
        %2959 = vmatpush1.msra.mxu0 0.0
        %2960 = vmatprep.subr.mxu0 0.0
        %2961 = vmatpush1.msra.mxu0 0.0
        %2962 = vmatprep.subr.mxu0 0.0
        %2963 = vmatpush1.msra.mxu0 0.0
        %2964 = vmatprep.subr.mxu0 0.0
        %2965 = vmatpush1.msra.mxu0 %v1017
        %2966 = vmatprep.subr.mxu0 0.0
        %2967 = vmatpush2.msra.mxu0 0.0
        %2968 = vmatprep.subr.mxu0 0.0
        %2969 = vmatpush2.msra.mxu0 0.0
        %2970 = vmatprep.subr.mxu0 0.0
        %2971 = vmatpush2.msra.mxu0 0.0
        %2972 = vmatprep.subr.mxu0 0.0
        %2973 = vmatpush2.msra.mxu0 0.0
        %2974 = vmatprep.subr.mxu0 0.0
        %2975 = vmatpush2.msra.mxu0 0.0
        %2976 = vmatprep.subr.mxu0 0.0
        %2977 = vmatpush2.msra.mxu0 0.0
        %2978 = vmatprep.subr.mxu0 0.0
        %2979 = vmatpush2.msra.mxu0 0.0
        %2980 = vmatprep.subr.mxu0 0.0
        %2981 = vmatpush2.msra.mxu0 0.0
        %2982 = vmatprep.subr.mxu0 0.0
        %2983 = vmatpush2.msra.mxu0 0.0
        %2984 = vmatprep.subr.mxu0 0.0
        %2985 = vmatpush2.msra.mxu0 0.0
        %2986 = vmatprep.subr.mxu0 0.0
        %2987 = vmatpush2.msra.mxu0 0.0
        %2988 = vmatprep.subr.mxu0 0.0
        %2989 = vmatpush2.msra.mxu0 0.0
        %2990 = vmatprep.subr.mxu0 0.0
        %2991 = vmatpush2.msra.mxu0 0.0
        %2992 = vmatprep.subr.mxu0 0.0
        %2993 = vmatpush2.msra.mxu0 0.0
        %2994 = vmatprep.subr.mxu0 0.0
        %2995 = vmatpush2.msra.mxu0 0.0
        %2996 = vmatprep.subr.mxu0 0.0
        %2997 = vmatpush2.msra.mxu0 0.0
        %2998 = vmatprep.mubr.f32.mxu0 0.0
        %2999 = vmatmul.mubr.f32.gmra.mxu0 %v2932
        %v3000 = vpop.f32.mrf.mxu0
        %v3001 = vadd.f32 0.0, %v3000
        %v3002 = vpop.f32.mrf.mxu0
        %3003 = vdwg.mxu0
        %v3005 = vsel %vm2389, %v2556, 0
        %3007 = vmatprep.subr.mxu0 0.0
        %3008 = vmatpush1.msra.mxu0 0.0
        %3009 = vmatprep.subr.mxu0 0.0
        %3010 = vmatpush1.msra.mxu0 0.0
        %3011 = vmatprep.subr.mxu0 0.0
        %3012 = vmatpush1.msra.mxu0 0.0
        %3013 = vmatprep.subr.mxu0 0.0
        %3014 = vmatpush1.msra.mxu0 0.0
        %3015 = vmatprep.subr.mxu0 0.0
        %3016 = vmatpush1.msra.mxu0 0.0
        %3017 = vmatprep.subr.mxu0 0.0
        %3018 = vmatpush1.msra.mxu0 0.0
        %3019 = vmatprep.subr.mxu0 0.0
        %3020 = vmatpush1.msra.mxu0 0.0
        %3021 = vmatprep.subr.mxu0 0.0
        %3022 = vmatpush1.msra.mxu0 0.0
        %3023 = vmatprep.subr.mxu0 0.0
        %3024 = vmatpush1.msra.mxu0 0.0
        %3025 = vmatprep.subr.mxu0 0.0
        %3026 = vmatpush1.msra.mxu0 0.0
        %3027 = vmatprep.subr.mxu0 0.0
        %3028 = vmatpush1.msra.mxu0 0.0
        %3029 = vmatprep.subr.mxu0 0.0
        %3030 = vmatpush1.msra.mxu0 0.0
        %3031 = vmatprep.subr.mxu0 0.0
        %3032 = vmatpush1.msra.mxu0 0.0
        %3033 = vmatprep.subr.mxu0 0.0
        %3034 = vmatpush1.msra.mxu0 0.0
        %3035 = vmatprep.subr.mxu0 0.0
        %3036 = vmatpush1.msra.mxu0 0.0
        %3037 = vmatprep.subr.mxu0 0.0
        %3038 = vmatpush1.msra.mxu0 %v1018
        %3039 = vmatprep.subr.mxu0 0.0
        %3040 = vmatpush2.msra.mxu0 0.0
        %3041 = vmatprep.subr.mxu0 0.0
        %3042 = vmatpush2.msra.mxu0 0.0
        %3043 = vmatprep.subr.mxu0 0.0
        %3044 = vmatpush2.msra.mxu0 0.0
        %3045 = vmatprep.subr.mxu0 0.0
        %3046 = vmatpush2.msra.mxu0 0.0
        %3047 = vmatprep.subr.mxu0 0.0
        %3048 = vmatpush2.msra.mxu0 0.0
        %3049 = vmatprep.subr.mxu0 0.0
        %3050 = vmatpush2.msra.mxu0 0.0
        %3051 = vmatprep.subr.mxu0 0.0
        %3052 = vmatpush2.msra.mxu0 0.0
        %3053 = vmatprep.subr.mxu0 0.0
        %3054 = vmatpush2.msra.mxu0 0.0
        %3055 = vmatprep.subr.mxu0 0.0
        %3056 = vmatpush2.msra.mxu0 0.0
        %3057 = vmatprep.subr.mxu0 0.0
        %3058 = vmatpush2.msra.mxu0 0.0
        %3059 = vmatprep.subr.mxu0 0.0
        %3060 = vmatpush2.msra.mxu0 0.0
        %3061 = vmatprep.subr.mxu0 0.0
        %3062 = vmatpush2.msra.mxu0 0.0
        %3063 = vmatprep.subr.mxu0 0.0
        %3064 = vmatpush2.msra.mxu0 0.0
        %3065 = vmatprep.subr.mxu0 0.0
        %3066 = vmatpush2.msra.mxu0 0.0
        %3067 = vmatprep.subr.mxu0 0.0
        %3068 = vmatpush2.msra.mxu0 0.0
        %3069 = vmatprep.subr.mxu0 0.0
        %3070 = vmatpush2.msra.mxu0 0.0
        %3071 = vmatprep.mubr.f32.mxu0 0.0
        %3072 = vmatmul.mubr.f32.gmra.mxu0 %v3005
        %v3073 = vpop.f32.mrf.mxu0
        %v3074 = vadd.f32 0.0, %v3073
        %v3075 = vpop.f32.mrf.mxu0
        %3076 = vdwg.mxu0
        %v3078 = vsel %vm2389, %v2557, 0
        %3080 = vmatprep.subr.mxu0 0.0
        %3081 = vmatpush1.msra.mxu0 0.0
        %3082 = vmatprep.subr.mxu0 0.0
        %3083 = vmatpush1.msra.mxu0 0.0
        %3084 = vmatprep.subr.mxu0 0.0
        %3085 = vmatpush1.msra.mxu0 0.0
        %3086 = vmatprep.subr.mxu0 0.0
        %3087 = vmatpush1.msra.mxu0 0.0
        %3088 = vmatprep.subr.mxu0 0.0
        %3089 = vmatpush1.msra.mxu0 0.0
        %3090 = vmatprep.subr.mxu0 0.0
        %3091 = vmatpush1.msra.mxu0 0.0
        %3092 = vmatprep.subr.mxu0 0.0
        %3093 = vmatpush1.msra.mxu0 0.0
        %3094 = vmatprep.subr.mxu0 0.0
        %3095 = vmatpush1.msra.mxu0 0.0
        %3096 = vmatprep.subr.mxu0 0.0
        %3097 = vmatpush1.msra.mxu0 0.0
        %3098 = vmatprep.subr.mxu0 0.0
        %3099 = vmatpush1.msra.mxu0 0.0
        %3100 = vmatprep.subr.mxu0 0.0
        %3101 = vmatpush1.msra.mxu0 0.0
        %3102 = vmatprep.subr.mxu0 0.0
        %3103 = vmatpush1.msra.mxu0 0.0
        %3104 = vmatprep.subr.mxu0 0.0
        %3105 = vmatpush1.msra.mxu0 0.0
        %3106 = vmatprep.subr.mxu0 0.0
        %3107 = vmatpush1.msra.mxu0 0.0
        %3108 = vmatprep.subr.mxu0 0.0
        %3109 = vmatpush1.msra.mxu0 0.0
        %3110 = vmatprep.subr.mxu0 0.0
        %3111 = vmatpush1.msra.mxu0 %v1019
        %3112 = vmatprep.subr.mxu0 0.0
        %3113 = vmatpush2.msra.mxu0 0.0
        %3114 = vmatprep.subr.mxu0 0.0
        %3115 = vmatpush2.msra.mxu0 0.0
        %3116 = vmatprep.subr.mxu0 0.0
        %3117 = vmatpush2.msra.mxu0 0.0
        %3118 = vmatprep.subr.mxu0 0.0
        %3119 = vmatpush2.msra.mxu0 0.0
        %3120 = vmatprep.subr.mxu0 0.0
        %3121 = vmatpush2.msra.mxu0 0.0
        %3122 = vmatprep.subr.mxu0 0.0
        %3123 = vmatpush2.msra.mxu0 0.0
        %3124 = vmatprep.subr.mxu0 0.0
        %3125 = vmatpush2.msra.mxu0 0.0
        %3126 = vmatprep.subr.mxu0 0.0
        %3127 = vmatpush2.msra.mxu0 0.0
        %3128 = vmatprep.subr.mxu0 0.0
        %3129 = vmatpush2.msra.mxu0 0.0
        %3130 = vmatprep.subr.mxu0 0.0
        %3131 = vmatpush2.msra.mxu0 0.0
        %3132 = vmatprep.subr.mxu0 0.0
        %3133 = vmatpush2.msra.mxu0 0.0
        %3134 = vmatprep.subr.mxu0 0.0
        %3135 = vmatpush2.msra.mxu0 0.0
        %3136 = vmatprep.subr.mxu0 0.0
        %3137 = vmatpush2.msra.mxu0 0.0
        %3138 = vmatprep.subr.mxu0 0.0
        %3139 = vmatpush2.msra.mxu0 0.0
        %3140 = vmatprep.subr.mxu0 0.0
        %3141 = vmatpush2.msra.mxu0 0.0
        %3142 = vmatprep.subr.mxu0 0.0
        %3143 = vmatpush2.msra.mxu0 0.0
        %3144 = vmatprep.mubr.f32.mxu0 0.0
        %3145 = vmatmul.mubr.f32.gmra.mxu0 %v3078
        %v3146 = vpop.f32.mrf.mxu0
        %v3147 = vadd.f32 0.0, %v3146
        %v3148 = vpop.f32.mrf.mxu0
        %3149 = vdwg.mxu0
        %v3151 = vsel %vm2389, %v2558, 0
        %3153 = vmatprep.subr.mxu0 0.0
        %3154 = vmatpush1.msra.mxu0 0.0
        %3155 = vmatprep.subr.mxu0 0.0
        %3156 = vmatpush1.msra.mxu0 0.0
        %3157 = vmatprep.subr.mxu0 0.0
        %3158 = vmatpush1.msra.mxu0 0.0
        %3159 = vmatprep.subr.mxu0 0.0
        %3160 = vmatpush1.msra.mxu0 0.0
        %3161 = vmatprep.subr.mxu0 0.0
        %3162 = vmatpush1.msra.mxu0 0.0
        %3163 = vmatprep.subr.mxu0 0.0
        %3164 = vmatpush1.msra.mxu0 0.0
        %3165 = vmatprep.subr.mxu0 0.0
        %3166 = vmatpush1.msra.mxu0 0.0
        %3167 = vmatprep.subr.mxu0 0.0
        %3168 = vmatpush1.msra.mxu0 0.0
        %3169 = vmatprep.subr.mxu0 0.0
        %3170 = vmatpush1.msra.mxu0 0.0
        %3171 = vmatprep.subr.mxu0 0.0
        %3172 = vmatpush1.msra.mxu0 0.0
        %3173 = vmatprep.subr.mxu0 0.0
        %3174 = vmatpush1.msra.mxu0 0.0
        %3175 = vmatprep.subr.mxu0 0.0
        %3176 = vmatpush1.msra.mxu0 0.0
        %3177 = vmatprep.subr.mxu0 0.0
        %3178 = vmatpush1.msra.mxu0 0.0
        %3179 = vmatprep.subr.mxu0 0.0
        %3180 = vmatpush1.msra.mxu0 0.0
        %3181 = vmatprep.subr.mxu0 0.0
        %3182 = vmatpush1.msra.mxu0 0.0
        %3183 = vmatprep.subr.mxu0 0.0
        %3184 = vmatpush1.msra.mxu0 %v1148
        %3185 = vmatprep.subr.mxu0 0.0
        %3186 = vmatpush2.msra.mxu0 0.0
        %3187 = vmatprep.subr.mxu0 0.0
        %3188 = vmatpush2.msra.mxu0 0.0
        %3189 = vmatprep.subr.mxu0 0.0
        %3190 = vmatpush2.msra.mxu0 0.0
        %3191 = vmatprep.subr.mxu0 0.0
        %3192 = vmatpush2.msra.mxu0 0.0
        %3193 = vmatprep.subr.mxu0 0.0
        %3194 = vmatpush2.msra.mxu0 0.0
        %3195 = vmatprep.subr.mxu0 0.0
        %3196 = vmatpush2.msra.mxu0 0.0
        %3197 = vmatprep.subr.mxu0 0.0
        %3198 = vmatpush2.msra.mxu0 0.0
        %3199 = vmatprep.subr.mxu0 0.0
        %3200 = vmatpush2.msra.mxu0 0.0
        %3201 = vmatprep.subr.mxu0 0.0
        %3202 = vmatpush2.msra.mxu0 0.0
        %3203 = vmatprep.subr.mxu0 0.0
        %3204 = vmatpush2.msra.mxu0 0.0
        %3205 = vmatprep.subr.mxu0 0.0
        %3206 = vmatpush2.msra.mxu0 0.0
        %3207 = vmatprep.subr.mxu0 0.0
        %3208 = vmatpush2.msra.mxu0 0.0
        %3209 = vmatprep.subr.mxu0 0.0
        %3210 = vmatpush2.msra.mxu0 0.0
        %3211 = vmatprep.subr.mxu0 0.0
        %3212 = vmatpush2.msra.mxu0 0.0
        %3213 = vmatprep.subr.mxu0 0.0
        %3214 = vmatpush2.msra.mxu0 0.0
        %3215 = vmatprep.subr.mxu0 0.0
        %3216 = vmatpush2.msra.mxu0 0.0
        %3217 = vmatprep.mubr.f32.mxu0 0.0
        %3218 = vmatmul.mubr.f32.gmra.mxu0 %v3151
        %v3219 = vpop.f32.mrf.mxu0
        %v3220 = vadd.f32 0.0, %v3219
        %v3221 = vpop.f32.mrf.mxu0
        %3222 = vdwg.mxu0
        %v3224 = vsel %vm2389, %v2559, 0
        %3226 = vmatprep.subr.mxu0 0.0
        %3227 = vmatpush1.msra.mxu0 0.0
        %3228 = vmatprep.subr.mxu0 0.0
        %3229 = vmatpush1.msra.mxu0 0.0
        %3230 = vmatprep.subr.mxu0 0.0
        %3231 = vmatpush1.msra.mxu0 0.0
        %3232 = vmatprep.subr.mxu0 0.0
        %3233 = vmatpush1.msra.mxu0 0.0
        %3234 = vmatprep.subr.mxu0 0.0
        %3235 = vmatpush1.msra.mxu0 0.0
        %3236 = vmatprep.subr.mxu0 0.0
        %3237 = vmatpush1.msra.mxu0 0.0
        %3238 = vmatprep.subr.mxu0 0.0
        %3239 = vmatpush1.msra.mxu0 0.0
        %3240 = vmatprep.subr.mxu0 0.0
        %3241 = vmatpush1.msra.mxu0 0.0
        %3242 = vmatprep.subr.mxu0 0.0
        %3243 = vmatpush1.msra.mxu0 0.0
        %3244 = vmatprep.subr.mxu0 0.0
        %3245 = vmatpush1.msra.mxu0 0.0
        %3246 = vmatprep.subr.mxu0 0.0
        %3247 = vmatpush1.msra.mxu0 0.0
        %3248 = vmatprep.subr.mxu0 0.0
        %3249 = vmatpush1.msra.mxu0 0.0
        %3250 = vmatprep.subr.mxu0 0.0
        %3251 = vmatpush1.msra.mxu0 0.0
        %3252 = vmatprep.subr.mxu0 0.0
        %3253 = vmatpush1.msra.mxu0 0.0
        %3254 = vmatprep.subr.mxu0 0.0
        %3255 = vmatpush1.msra.mxu0 0.0
        %3256 = vmatprep.subr.mxu0 0.0
        %3257 = vmatpush1.msra.mxu0 %v1149
        %3258 = vmatprep.subr.mxu0 0.0
        %3259 = vmatpush2.msra.mxu0 0.0
        %3260 = vmatprep.subr.mxu0 0.0
        %3261 = vmatpush2.msra.mxu0 0.0
        %3262 = vmatprep.subr.mxu0 0.0
        %3263 = vmatpush2.msra.mxu0 0.0
        %3264 = vmatprep.subr.mxu0 0.0
        %3265 = vmatpush2.msra.mxu0 0.0
        %3266 = vmatprep.subr.mxu0 0.0
        %3267 = vmatpush2.msra.mxu0 0.0
        %3268 = vmatprep.subr.mxu0 0.0
        %3269 = vmatpush2.msra.mxu0 0.0
        %3270 = vmatprep.subr.mxu0 0.0
        %3271 = vmatpush2.msra.mxu0 0.0
        %3272 = vmatprep.subr.mxu0 0.0
        %3273 = vmatpush2.msra.mxu0 0.0
        %3274 = vmatprep.subr.mxu0 0.0
        %3275 = vmatpush2.msra.mxu0 0.0
        %3276 = vmatprep.subr.mxu0 0.0
        %3277 = vmatpush2.msra.mxu0 0.0
        %3278 = vmatprep.subr.mxu0 0.0
        %3279 = vmatpush2.msra.mxu0 0.0
        %3280 = vmatprep.subr.mxu0 0.0
        %3281 = vmatpush2.msra.mxu0 0.0
        %3282 = vmatprep.subr.mxu0 0.0
        %3283 = vmatpush2.msra.mxu0 0.0
        %3284 = vmatprep.subr.mxu0 0.0
        %3285 = vmatpush2.msra.mxu0 0.0
        %3286 = vmatprep.subr.mxu0 0.0
        %3287 = vmatpush2.msra.mxu0 0.0
        %3288 = vmatprep.subr.mxu0 0.0
        %3289 = vmatpush2.msra.mxu0 0.0
        %3290 = vmatprep.mubr.f32.mxu0 0.0
        %3291 = vmatmul.mubr.f32.gmra.mxu0 %v3224
        %v3292 = vpop.f32.mrf.mxu0
        %v3293 = vadd.f32 0.0, %v3292
        %v3294 = vpop.f32.mrf.mxu0
        %3295 = vdwg.mxu0
        %v3297 = vsel %vm2389, %v2560, 0
        %3299 = vmatprep.subr.mxu0 0.0
        %3300 = vmatpush1.msra.mxu0 0.0
        %3301 = vmatprep.subr.mxu0 0.0
        %3302 = vmatpush1.msra.mxu0 0.0
        %3303 = vmatprep.subr.mxu0 0.0
        %3304 = vmatpush1.msra.mxu0 0.0
        %3305 = vmatprep.subr.mxu0 0.0
        %3306 = vmatpush1.msra.mxu0 0.0
        %3307 = vmatprep.subr.mxu0 0.0
        %3308 = vmatpush1.msra.mxu0 0.0
        %3309 = vmatprep.subr.mxu0 0.0
        %3310 = vmatpush1.msra.mxu0 0.0
        %3311 = vmatprep.subr.mxu0 0.0
        %3312 = vmatpush1.msra.mxu0 0.0
        %3313 = vmatprep.subr.mxu0 0.0
        %3314 = vmatpush1.msra.mxu0 0.0
        %3315 = vmatprep.subr.mxu0 0.0
        %3316 = vmatpush1.msra.mxu0 0.0
        %3317 = vmatprep.subr.mxu0 0.0
        %3318 = vmatpush1.msra.mxu0 0.0
        %3319 = vmatprep.subr.mxu0 0.0
        %3320 = vmatpush1.msra.mxu0 0.0
        %3321 = vmatprep.subr.mxu0 0.0
        %3322 = vmatpush1.msra.mxu0 0.0
        %3323 = vmatprep.subr.mxu0 0.0
        %3324 = vmatpush1.msra.mxu0 0.0
        %3325 = vmatprep.subr.mxu0 0.0
        %3326 = vmatpush1.msra.mxu0 0.0
        %3327 = vmatprep.subr.mxu0 0.0
        %3328 = vmatpush1.msra.mxu0 0.0
        %3329 = vmatprep.subr.mxu0 0.0
        %3330 = vmatpush1.msra.mxu0 %v1150
        %3331 = vmatprep.subr.mxu0 0.0
        %3332 = vmatpush2.msra.mxu0 0.0
        %3333 = vmatprep.subr.mxu0 0.0
        %3334 = vmatpush2.msra.mxu0 0.0
        %3335 = vmatprep.subr.mxu0 0.0
        %3336 = vmatpush2.msra.mxu0 0.0
        %3337 = vmatprep.subr.mxu0 0.0
        %3338 = vmatpush2.msra.mxu0 0.0
        %3339 = vmatprep.subr.mxu0 0.0
        %3340 = vmatpush2.msra.mxu0 0.0
        %3341 = vmatprep.subr.mxu0 0.0
        %3342 = vmatpush2.msra.mxu0 0.0
        %3343 = vmatprep.subr.mxu0 0.0
        %3344 = vmatpush2.msra.mxu0 0.0
        %3345 = vmatprep.subr.mxu0 0.0
        %3346 = vmatpush2.msra.mxu0 0.0
        %3347 = vmatprep.subr.mxu0 0.0
        %3348 = vmatpush2.msra.mxu0 0.0
        %3349 = vmatprep.subr.mxu0 0.0
        %3350 = vmatpush2.msra.mxu0 0.0
        %3351 = vmatprep.subr.mxu0 0.0
        %3352 = vmatpush2.msra.mxu0 0.0
        %3353 = vmatprep.subr.mxu0 0.0
        %3354 = vmatpush2.msra.mxu0 0.0
        %3355 = vmatprep.subr.mxu0 0.0
        %3356 = vmatpush2.msra.mxu0 0.0
        %3357 = vmatprep.subr.mxu0 0.0
        %3358 = vmatpush2.msra.mxu0 0.0
        %3359 = vmatprep.subr.mxu0 0.0
        %3360 = vmatpush2.msra.mxu0 0.0
        %3361 = vmatprep.subr.mxu0 0.0
        %3362 = vmatpush2.msra.mxu0 0.0
        %3363 = vmatprep.mubr.f32.mxu0 0.0
        %3364 = vmatmul.mubr.f32.gmra.mxu0 %v3297
        %v3365 = vpop.f32.mrf.mxu0
        %v3366 = vadd.f32 0.0, %v3365
        %v3367 = vpop.f32.mrf.mxu0
        %3368 = vdwg.mxu0
        %v3370 = vsel %vm2389, %v2561, 0
        %3372 = vmatprep.subr.mxu0 0.0
        %3373 = vmatpush1.msra.mxu0 0.0
        %3374 = vmatprep.subr.mxu0 0.0
        %3375 = vmatpush1.msra.mxu0 0.0
        %3376 = vmatprep.subr.mxu0 0.0
        %3377 = vmatpush1.msra.mxu0 0.0
        %3378 = vmatprep.subr.mxu0 0.0
        %3379 = vmatpush1.msra.mxu0 0.0
        %3380 = vmatprep.subr.mxu0 0.0
        %3381 = vmatpush1.msra.mxu0 0.0
        %3382 = vmatprep.subr.mxu0 0.0
        %3383 = vmatpush1.msra.mxu0 0.0
        %3384 = vmatprep.subr.mxu0 0.0
        %3385 = vmatpush1.msra.mxu0 0.0
        %3386 = vmatprep.subr.mxu0 0.0
        %3387 = vmatpush1.msra.mxu0 0.0
        %3388 = vmatprep.subr.mxu0 0.0
        %3389 = vmatpush1.msra.mxu0 0.0
        %3390 = vmatprep.subr.mxu0 0.0
        %3391 = vmatpush1.msra.mxu0 0.0
        %3392 = vmatprep.subr.mxu0 0.0
        %3393 = vmatpush1.msra.mxu0 0.0
        %3394 = vmatprep.subr.mxu0 0.0
        %3395 = vmatpush1.msra.mxu0 0.0
        %3396 = vmatprep.subr.mxu0 0.0
        %3397 = vmatpush1.msra.mxu0 0.0
        %3398 = vmatprep.subr.mxu0 0.0
        %3399 = vmatpush1.msra.mxu0 0.0
        %3400 = vmatprep.subr.mxu0 0.0
        %3401 = vmatpush1.msra.mxu0 0.0
        %3402 = vmatprep.subr.mxu0 0.0
        %3403 = vmatpush1.msra.mxu0 %v1151
        %3404 = vmatprep.subr.mxu0 0.0
        %3405 = vmatpush2.msra.mxu0 0.0
        %3406 = vmatprep.subr.mxu0 0.0
        %3407 = vmatpush2.msra.mxu0 0.0
        %3408 = vmatprep.subr.mxu0 0.0
        %3409 = vmatpush2.msra.mxu0 0.0
        %3410 = vmatprep.subr.mxu0 0.0
        %3411 = vmatpush2.msra.mxu0 0.0
        %3412 = vmatprep.subr.mxu0 0.0
        %3413 = vmatpush2.msra.mxu0 0.0
        %3414 = vmatprep.subr.mxu0 0.0
        %3415 = vmatpush2.msra.mxu0 0.0
        %3416 = vmatprep.subr.mxu0 0.0
        %3417 = vmatpush2.msra.mxu0 0.0
        %3418 = vmatprep.subr.mxu0 0.0
        %3419 = vmatpush2.msra.mxu0 0.0
        %3420 = vmatprep.subr.mxu0 0.0
        %3421 = vmatpush2.msra.mxu0 0.0
        %3422 = vmatprep.subr.mxu0 0.0
        %3423 = vmatpush2.msra.mxu0 0.0
        %3424 = vmatprep.subr.mxu0 0.0
        %3425 = vmatpush2.msra.mxu0 0.0
        %3426 = vmatprep.subr.mxu0 0.0
        %3427 = vmatpush2.msra.mxu0 0.0
        %3428 = vmatprep.subr.mxu0 0.0
        %3429 = vmatpush2.msra.mxu0 0.0
        %3430 = vmatprep.subr.mxu0 0.0
        %3431 = vmatpush2.msra.mxu0 0.0
        %3432 = vmatprep.subr.mxu0 0.0
        %3433 = vmatpush2.msra.mxu0 0.0
        %3434 = vmatprep.subr.mxu0 0.0
        %3435 = vmatpush2.msra.mxu0 0.0
        %3436 = vmatprep.mubr.f32.mxu0 0.0
        %3437 = vmatmul.mubr.f32.gmra.mxu0 %v3370
        %v3438 = vpop.f32.mrf.mxu0
        %v3439 = vadd.f32 0.0, %v3438
        %v3440 = vpop.f32.mrf.mxu0
        %3441 = vdwg.mxu0
        %v3443 = vsel %vm2389, %v2562, 0
        %3445 = vmatprep.subr.mxu0 0.0
        %3446 = vmatpush1.msra.mxu0 0.0
        %3447 = vmatprep.subr.mxu0 0.0
        %3448 = vmatpush1.msra.mxu0 0.0
        %3449 = vmatprep.subr.mxu0 0.0
        %3450 = vmatpush1.msra.mxu0 0.0
        %3451 = vmatprep.subr.mxu0 0.0
        %3452 = vmatpush1.msra.mxu0 0.0
        %3453 = vmatprep.subr.mxu0 0.0
        %3454 = vmatpush1.msra.mxu0 0.0
        %3455 = vmatprep.subr.mxu0 0.0
        %3456 = vmatpush1.msra.mxu0 0.0
        %3457 = vmatprep.subr.mxu0 0.0
        %3458 = vmatpush1.msra.mxu0 0.0
        %3459 = vmatprep.subr.mxu0 0.0
        %3460 = vmatpush1.msra.mxu0 0.0
        %3461 = vmatprep.subr.mxu0 0.0
        %3462 = vmatpush1.msra.mxu0 0.0
        %3463 = vmatprep.subr.mxu0 0.0
        %3464 = vmatpush1.msra.mxu0 0.0
        %3465 = vmatprep.subr.mxu0 0.0
        %3466 = vmatpush1.msra.mxu0 0.0
        %3467 = vmatprep.subr.mxu0 0.0
        %3468 = vmatpush1.msra.mxu0 0.0
        %3469 = vmatprep.subr.mxu0 0.0
        %3470 = vmatpush1.msra.mxu0 0.0
        %3471 = vmatprep.subr.mxu0 0.0
        %3472 = vmatpush1.msra.mxu0 0.0
        %3473 = vmatprep.subr.mxu0 0.0
        %3474 = vmatpush1.msra.mxu0 0.0
        %3475 = vmatprep.subr.mxu0 0.0
        %3476 = vmatpush1.msra.mxu0 %v1152
        %3477 = vmatprep.subr.mxu0 0.0
        %3478 = vmatpush2.msra.mxu0 0.0
        %3479 = vmatprep.subr.mxu0 0.0
        %3480 = vmatpush2.msra.mxu0 0.0
        %3481 = vmatprep.subr.mxu0 0.0
        %3482 = vmatpush2.msra.mxu0 0.0
        %3483 = vmatprep.subr.mxu0 0.0
        %3484 = vmatpush2.msra.mxu0 0.0
        %3485 = vmatprep.subr.mxu0 0.0
        %3486 = vmatpush2.msra.mxu0 0.0
        %3487 = vmatprep.subr.mxu0 0.0
        %3488 = vmatpush2.msra.mxu0 0.0
        %3489 = vmatprep.subr.mxu0 0.0
        %3490 = vmatpush2.msra.mxu0 0.0
        %3491 = vmatprep.subr.mxu0 0.0
        %3492 = vmatpush2.msra.mxu0 0.0
        %3493 = vmatprep.subr.mxu0 0.0
        %3494 = vmatpush2.msra.mxu0 0.0
        %3495 = vmatprep.subr.mxu0 0.0
        %3496 = vmatpush2.msra.mxu0 0.0
        %3497 = vmatprep.subr.mxu0 0.0
        %3498 = vmatpush2.msra.mxu0 0.0
        %3499 = vmatprep.subr.mxu0 0.0
        %3500 = vmatpush2.msra.mxu0 0.0
        %3501 = vmatprep.subr.mxu0 0.0
        %3502 = vmatpush2.msra.mxu0 0.0
        %3503 = vmatprep.subr.mxu0 0.0
        %3504 = vmatpush2.msra.mxu0 0.0
        %3505 = vmatprep.subr.mxu0 0.0
        %3506 = vmatpush2.msra.mxu0 0.0
        %3507 = vmatprep.subr.mxu0 0.0
        %3508 = vmatpush2.msra.mxu0 0.0
        %3509 = vmatprep.mubr.f32.mxu0 0.0
        %3510 = vmatmul.mubr.f32.gmra.mxu0 %v3443
        %v3511 = vpop.f32.mrf.mxu0
        %v3512 = vadd.f32 0.0, %v3511
        %v3513 = vpop.f32.mrf.mxu0
        %3514 = vdwg.mxu0
        %v3516 = vsel %vm2389, %v2563, 0
        %3518 = vmatprep.subr.mxu0 0.0
        %3519 = vmatpush1.msra.mxu0 0.0
        %3520 = vmatprep.subr.mxu0 0.0
        %3521 = vmatpush1.msra.mxu0 0.0
        %3522 = vmatprep.subr.mxu0 0.0
        %3523 = vmatpush1.msra.mxu0 0.0
        %3524 = vmatprep.subr.mxu0 0.0
        %3525 = vmatpush1.msra.mxu0 0.0
        %3526 = vmatprep.subr.mxu0 0.0
        %3527 = vmatpush1.msra.mxu0 0.0
        %3528 = vmatprep.subr.mxu0 0.0
        %3529 = vmatpush1.msra.mxu0 0.0
        %3530 = vmatprep.subr.mxu0 0.0
        %3531 = vmatpush1.msra.mxu0 0.0
        %3532 = vmatprep.subr.mxu0 0.0
        %3533 = vmatpush1.msra.mxu0 0.0
        %3534 = vmatprep.subr.mxu0 0.0
        %3535 = vmatpush1.msra.mxu0 0.0
        %3536 = vmatprep.subr.mxu0 0.0
        %3537 = vmatpush1.msra.mxu0 0.0
        %3538 = vmatprep.subr.mxu0 0.0
        %3539 = vmatpush1.msra.mxu0 0.0
        %3540 = vmatprep.subr.mxu0 0.0
        %3541 = vmatpush1.msra.mxu0 0.0
        %3542 = vmatprep.subr.mxu0 0.0
        %3543 = vmatpush1.msra.mxu0 0.0
        %3544 = vmatprep.subr.mxu0 0.0
        %3545 = vmatpush1.msra.mxu0 0.0
        %3546 = vmatprep.subr.mxu0 0.0
        %3547 = vmatpush1.msra.mxu0 0.0
        %3548 = vmatprep.subr.mxu0 0.0
        %3549 = vmatpush1.msra.mxu0 %v1153
        %3550 = vmatprep.subr.mxu0 0.0
        %3551 = vmatpush2.msra.mxu0 0.0
        %3552 = vmatprep.subr.mxu0 0.0
        %3553 = vmatpush2.msra.mxu0 0.0
        %3554 = vmatprep.subr.mxu0 0.0
        %3555 = vmatpush2.msra.mxu0 0.0
        %3556 = vmatprep.subr.mxu0 0.0
        %3557 = vmatpush2.msra.mxu0 0.0
        %3558 = vmatprep.subr.mxu0 0.0
        %3559 = vmatpush2.msra.mxu0 0.0
        %3560 = vmatprep.subr.mxu0 0.0
        %3561 = vmatpush2.msra.mxu0 0.0
        %3562 = vmatprep.subr.mxu0 0.0
        %3563 = vmatpush2.msra.mxu0 0.0
        %3564 = vmatprep.subr.mxu0 0.0
        %3565 = vmatpush2.msra.mxu0 0.0
        %3566 = vmatprep.subr.mxu0 0.0
        %3567 = vmatpush2.msra.mxu0 0.0
        %3568 = vmatprep.subr.mxu0 0.0
        %3569 = vmatpush2.msra.mxu0 0.0
        %3570 = vmatprep.subr.mxu0 0.0
        %3571 = vmatpush2.msra.mxu0 0.0
        %3572 = vmatprep.subr.mxu0 0.0
        %3573 = vmatpush2.msra.mxu0 0.0
        %3574 = vmatprep.subr.mxu0 0.0
        %3575 = vmatpush2.msra.mxu0 0.0
        %3576 = vmatprep.subr.mxu0 0.0
        %3577 = vmatpush2.msra.mxu0 0.0
        %3578 = vmatprep.subr.mxu0 0.0
        %3579 = vmatpush2.msra.mxu0 0.0
        %3580 = vmatprep.subr.mxu0 0.0
        %3581 = vmatpush2.msra.mxu0 0.0
        %3582 = vmatprep.mubr.f32.mxu0 0.0
        %3583 = vmatmul.mubr.f32.gmra.mxu0 %v3516
        %v3584 = vpop.f32.mrf.mxu0
        %v3585 = vadd.f32 0.0, %v3584
        %v3586 = vpop.f32.mrf.mxu0
        %3587 = vdwg.mxu0
        %v3589 = vsel %vm2389, %v2564, 0
        %3591 = vmatprep.subr.mxu0 0.0
        %3592 = vmatpush1.msra.mxu0 0.0
        %3593 = vmatprep.subr.mxu0 0.0
        %3594 = vmatpush1.msra.mxu0 0.0
        %3595 = vmatprep.subr.mxu0 0.0
        %3596 = vmatpush1.msra.mxu0 0.0
        %3597 = vmatprep.subr.mxu0 0.0
        %3598 = vmatpush1.msra.mxu0 0.0
        %3599 = vmatprep.subr.mxu0 0.0
        %3600 = vmatpush1.msra.mxu0 0.0
        %3601 = vmatprep.subr.mxu0 0.0
        %3602 = vmatpush1.msra.mxu0 0.0
        %3603 = vmatprep.subr.mxu0 0.0
        %3604 = vmatpush1.msra.mxu0 0.0
        %3605 = vmatprep.subr.mxu0 0.0
        %3606 = vmatpush1.msra.mxu0 0.0
        %3607 = vmatprep.subr.mxu0 0.0
        %3608 = vmatpush1.msra.mxu0 0.0
        %3609 = vmatprep.subr.mxu0 0.0
        %3610 = vmatpush1.msra.mxu0 0.0
        %3611 = vmatprep.subr.mxu0 0.0
        %3612 = vmatpush1.msra.mxu0 0.0
        %3613 = vmatprep.subr.mxu0 0.0
        %3614 = vmatpush1.msra.mxu0 0.0
        %3615 = vmatprep.subr.mxu0 0.0
        %3616 = vmatpush1.msra.mxu0 0.0
        %3617 = vmatprep.subr.mxu0 0.0
        %3618 = vmatpush1.msra.mxu0 0.0
        %3619 = vmatprep.subr.mxu0 0.0
        %3620 = vmatpush1.msra.mxu0 0.0
        %3621 = vmatprep.subr.mxu0 0.0
        %3622 = vmatpush1.msra.mxu0 %v1154
        %3623 = vmatprep.subr.mxu0 0.0
        %3624 = vmatpush2.msra.mxu0 0.0
        %3625 = vmatprep.subr.mxu0 0.0
        %3626 = vmatpush2.msra.mxu0 0.0
        %3627 = vmatprep.subr.mxu0 0.0
        %3628 = vmatpush2.msra.mxu0 0.0
        %3629 = vmatprep.subr.mxu0 0.0
        %3630 = vmatpush2.msra.mxu0 0.0
        %3631 = vmatprep.subr.mxu0 0.0
        %3632 = vmatpush2.msra.mxu0 0.0
        %3633 = vmatprep.subr.mxu0 0.0
        %3634 = vmatpush2.msra.mxu0 0.0
        %3635 = vmatprep.subr.mxu0 0.0
        %3636 = vmatpush2.msra.mxu0 0.0
        %3637 = vmatprep.subr.mxu0 0.0
        %3638 = vmatpush2.msra.mxu0 0.0
        %3639 = vmatprep.subr.mxu0 0.0
        %3640 = vmatpush2.msra.mxu0 0.0
        %3641 = vmatprep.subr.mxu0 0.0
        %3642 = vmatpush2.msra.mxu0 0.0
        %3643 = vmatprep.subr.mxu0 0.0
        %3644 = vmatpush2.msra.mxu0 0.0
        %3645 = vmatprep.subr.mxu0 0.0
        %3646 = vmatpush2.msra.mxu0 0.0
        %3647 = vmatprep.subr.mxu0 0.0
        %3648 = vmatpush2.msra.mxu0 0.0
        %3649 = vmatprep.subr.mxu0 0.0
        %3650 = vmatpush2.msra.mxu0 0.0
        %3651 = vmatprep.subr.mxu0 0.0
        %3652 = vmatpush2.msra.mxu0 0.0
        %3653 = vmatprep.subr.mxu0 0.0
        %3654 = vmatpush2.msra.mxu0 0.0
        %3655 = vmatprep.mubr.f32.mxu0 0.0
        %3656 = vmatmul.mubr.f32.gmra.mxu0 %v3589
        %v3657 = vpop.f32.mrf.mxu0
        %v3658 = vadd.f32 0.0, %v3657
        %v3659 = vpop.f32.mrf.mxu0
        %3660 = vdwg.mxu0
        %v3662 = vsel %vm2389, %v2565, 0
        %3664 = vmatprep.subr.mxu0 0.0
        %3665 = vmatpush1.msra.mxu0 0.0
        %3666 = vmatprep.subr.mxu0 0.0
        %3667 = vmatpush1.msra.mxu0 0.0
        %3668 = vmatprep.subr.mxu0 0.0
        %3669 = vmatpush1.msra.mxu0 0.0
        %3670 = vmatprep.subr.mxu0 0.0
        %3671 = vmatpush1.msra.mxu0 0.0
        %3672 = vmatprep.subr.mxu0 0.0
        %3673 = vmatpush1.msra.mxu0 0.0
        %3674 = vmatprep.subr.mxu0 0.0
        %3675 = vmatpush1.msra.mxu0 0.0
        %3676 = vmatprep.subr.mxu0 0.0
        %3677 = vmatpush1.msra.mxu0 0.0
        %3678 = vmatprep.subr.mxu0 0.0
        %3679 = vmatpush1.msra.mxu0 0.0
        %3680 = vmatprep.subr.mxu0 0.0
        %3681 = vmatpush1.msra.mxu0 0.0
        %3682 = vmatprep.subr.mxu0 0.0
        %3683 = vmatpush1.msra.mxu0 0.0
        %3684 = vmatprep.subr.mxu0 0.0
        %3685 = vmatpush1.msra.mxu0 0.0
        %3686 = vmatprep.subr.mxu0 0.0
        %3687 = vmatpush1.msra.mxu0 0.0
        %3688 = vmatprep.subr.mxu0 0.0
        %3689 = vmatpush1.msra.mxu0 0.0
        %3690 = vmatprep.subr.mxu0 0.0
        %3691 = vmatpush1.msra.mxu0 0.0
        %3692 = vmatprep.subr.mxu0 0.0
        %3693 = vmatpush1.msra.mxu0 0.0
        %3694 = vmatprep.subr.mxu0 0.0
        %3695 = vmatpush1.msra.mxu0 %v1155
        %3696 = vmatprep.subr.mxu0 0.0
        %3697 = vmatpush2.msra.mxu0 0.0
        %3698 = vmatprep.subr.mxu0 0.0
        %3699 = vmatpush2.msra.mxu0 0.0
        %3700 = vmatprep.subr.mxu0 0.0
        %3701 = vmatpush2.msra.mxu0 0.0
        %3702 = vmatprep.subr.mxu0 0.0
        %3703 = vmatpush2.msra.mxu0 0.0
        %3704 = vmatprep.subr.mxu0 0.0
        %3705 = vmatpush2.msra.mxu0 0.0
        %3706 = vmatprep.subr.mxu0 0.0
        %3707 = vmatpush2.msra.mxu0 0.0
        %3708 = vmatprep.subr.mxu0 0.0
        %3709 = vmatpush2.msra.mxu0 0.0
        %3710 = vmatprep.subr.mxu0 0.0
        %3711 = vmatpush2.msra.mxu0 0.0
        %3712 = vmatprep.subr.mxu0 0.0
        %3713 = vmatpush2.msra.mxu0 0.0
        %3714 = vmatprep.subr.mxu0 0.0
        %3715 = vmatpush2.msra.mxu0 0.0
        %3716 = vmatprep.subr.mxu0 0.0
        %3717 = vmatpush2.msra.mxu0 0.0
        %3718 = vmatprep.subr.mxu0 0.0
        %3719 = vmatpush2.msra.mxu0 0.0
        %3720 = vmatprep.subr.mxu0 0.0
        %3721 = vmatpush2.msra.mxu0 0.0
        %3722 = vmatprep.subr.mxu0 0.0
        %3723 = vmatpush2.msra.mxu0 0.0
        %3724 = vmatprep.subr.mxu0 0.0
        %3725 = vmatpush2.msra.mxu0 0.0
        %3726 = vmatprep.subr.mxu0 0.0
        %3727 = vmatpush2.msra.mxu0 0.0
        %3728 = vmatprep.mubr.f32.mxu0 0.0
        %3729 = vmatmul.mubr.f32.gmra.mxu0 %v3662
        %v3730 = vpop.f32.mrf.mxu0
        %v3731 = vadd.f32 0.0, %v3730
        %v3732 = vpop.f32.mrf.mxu0
        %3733 = vdwg.mxu0
        %v3734 = vcombine.low %v2636, %v2782
        %v3735 = vcombine.high %v2636, %v2782
        %v3737 = vunpack.c.l.s4 1983009808
        %v3738 = vunpack.c.0.s8 %v3737
        %v3739 = vlaneseq
        %v3740 = vshrl.u32 %v3739, 7
        %v3741 = vsub.s32 %v3738, %v3740
        %v3742 = vrot.slane %v3734, %v3741
        %v3744 = vunpack.c.l.s4 1983009808
        %v3745 = vunpack.c.0.s8 %v3744
        %v3746 = vlaneseq
        %v3747 = vshrl.u32 %v3746, 7
        %v3748 = vsub.s32 %v3745, %v3747
        %v3749 = vrot.slane %v3735, %v3748
        %v3750 = vcombine.low %v2709, %v2855
        %v3751 = vcombine.high %v2709, %v2855
        %v3753 = vunpack.c.l.s4 1983009808
        %v3754 = vunpack.c.0.s8 %v3753
        %v3755 = vlaneseq
        %v3756 = vshrl.u32 %v3755, 7
        %v3757 = vsub.s32 %v3754, %v3756
        %v3758 = vrot.slane %v3750, %v3757
        %v3760 = vunpack.c.l.s4 1983009808
        %v3761 = vunpack.c.0.s8 %v3760
        %v3762 = vlaneseq
        %v3763 = vshrl.u32 %v3762, 7
        %v3764 = vsub.s32 %v3761, %v3763
        %v3765 = vrot.slane %v3751, %v3764
        %v3766 = vcombine.low %v2928, %v3074
        %v3767 = vcombine.high %v2928, %v3074
        %v3769 = vunpack.c.l.s4 1983009808
        %v3770 = vunpack.c.0.s8 %v3769
        %v3771 = vlaneseq
        %v3772 = vshrl.u32 %v3771, 7
        %v3773 = vsub.s32 %v3770, %v3772
        %v3774 = vrot.slane %v3766, %v3773
        %v3776 = vunpack.c.l.s4 1983009808
        %v3777 = vunpack.c.0.s8 %v3776
        %v3778 = vlaneseq
        %v3779 = vshrl.u32 %v3778, 7
        %v3780 = vsub.s32 %v3777, %v3779
        %v3781 = vrot.slane %v3767, %v3780
        %v3782 = vcombine.low %v3001, %v3147
        %v3783 = vcombine.high %v3001, %v3147
        %v3785 = vunpack.c.l.s4 1983009808
        %v3786 = vunpack.c.0.s8 %v3785
        %v3787 = vlaneseq
        %v3788 = vshrl.u32 %v3787, 7
        %v3789 = vsub.s32 %v3786, %v3788
        %v3790 = vrot.slane %v3782, %v3789
        %v3792 = vunpack.c.l.s4 1983009808
        %v3793 = vunpack.c.0.s8 %v3792
        %v3794 = vlaneseq
        %v3795 = vshrl.u32 %v3794, 7
        %v3796 = vsub.s32 %v3793, %v3795
        %v3797 = vrot.slane %v3783, %v3796
        %v3798 = vcombine.low %v3742, %v3758
        %v3799 = vcombine.high %v3742, %v3758
        %v3801 = vunpack.c.l.s4 1934713408
        %v3802 = vunpack.c.0.s8 %v3801
        %v3803 = vlaneseq
        %v3804 = vshrl.u32 %v3803, 7
        %v3805 = vsub.s32 %v3802, %v3804
        %v3806 = vrot.slane %v3798, %v3805
        %v3808 = vunpack.c.l.s4 1934713408
        %v3809 = vunpack.c.0.s8 %v3808
        %v3810 = vlaneseq
        %v3811 = vshrl.u32 %v3810, 7
        %v3812 = vsub.s32 %v3809, %v3811
        %v3813 = vrot.slane %v3799, %v3812
        %v3814 = vcombine.low %v3749, %v3765
        %v3815 = vcombine.high %v3749, %v3765
        %v3817 = vunpack.c.l.s4 1934713408
        %v3818 = vunpack.c.0.s8 %v3817
        %v3819 = vlaneseq
        %v3820 = vshrl.u32 %v3819, 7
        %v3821 = vsub.s32 %v3818, %v3820
        %v3822 = vrot.slane %v3814, %v3821
        %v3824 = vunpack.c.l.s4 1934713408
        %v3825 = vunpack.c.0.s8 %v3824
        %v3826 = vlaneseq
        %v3827 = vshrl.u32 %v3826, 7
        %v3828 = vsub.s32 %v3825, %v3827
        %v3829 = vrot.slane %v3815, %v3828
        %v3830 = vcombine.low %v3774, %v3790
        %v3831 = vcombine.high %v3774, %v3790
        %v3833 = vunpack.c.l.s4 1934713408
        %v3834 = vunpack.c.0.s8 %v3833
        %v3835 = vlaneseq
        %v3836 = vshrl.u32 %v3835, 7
        %v3837 = vsub.s32 %v3834, %v3836
        %v3838 = vrot.slane %v3830, %v3837
        %v3840 = vunpack.c.l.s4 1934713408
        %v3841 = vunpack.c.0.s8 %v3840
        %v3842 = vlaneseq
        %v3843 = vshrl.u32 %v3842, 7
        %v3844 = vsub.s32 %v3841, %v3843
        %v3845 = vrot.slane %v3831, %v3844
        %v3846 = vcombine.low %v3781, %v3797
        %v3847 = vcombine.high %v3781, %v3797
        %v3849 = vunpack.c.l.s4 1934713408
        %v3850 = vunpack.c.0.s8 %v3849
        %v3851 = vlaneseq
        %v3852 = vshrl.u32 %v3851, 7
        %v3853 = vsub.s32 %v3850, %v3852
        %v3854 = vrot.slane %v3846, %v3853
        %v3856 = vunpack.c.l.s4 1934713408
        %v3857 = vunpack.c.0.s8 %v3856
        %v3858 = vlaneseq
        %v3859 = vshrl.u32 %v3858, 7
        %v3860 = vsub.s32 %v3857, %v3859
        %v3861 = vrot.slane %v3847, %v3860
        %v3862 = vcombine.low %v3806, %v3838
        %v3863 = vcombine.high %v3806, %v3838
        %v3864 = vcombine.low %v3813, %v3845
        %v3865 = vcombine.high %v3813, %v3845
        %v3866 = vcombine.low %v3822, %v3854
        %v3867 = vcombine.high %v3822, %v3854
        %v3868 = vcombine.low %v3829, %v3861
        %v3869 = vcombine.high %v3829, %v3861
        %v3870 = vcombine.low %v3220, %v3366
        %v3871 = vcombine.high %v3220, %v3366
        %v3873 = vunpack.c.l.s4 1983009808
        %v3874 = vunpack.c.0.s8 %v3873
        %v3875 = vlaneseq
        %v3876 = vshrl.u32 %v3875, 7
        %v3877 = vsub.s32 %v3874, %v3876
        %v3878 = vrot.slane %v3870, %v3877
        %v3880 = vunpack.c.l.s4 1983009808
        %v3881 = vunpack.c.0.s8 %v3880
        %v3882 = vlaneseq
        %v3883 = vshrl.u32 %v3882, 7
        %v3884 = vsub.s32 %v3881, %v3883
        %v3885 = vrot.slane %v3871, %v3884
        %v3886 = vcombine.low %v3293, %v3439
        %v3887 = vcombine.high %v3293, %v3439
        %v3889 = vunpack.c.l.s4 1983009808
        %v3890 = vunpack.c.0.s8 %v3889
        %v3891 = vlaneseq
        %v3892 = vshrl.u32 %v3891, 7
        %v3893 = vsub.s32 %v3890, %v3892
        %v3894 = vrot.slane %v3886, %v3893
        %v3896 = vunpack.c.l.s4 1983009808
        %v3897 = vunpack.c.0.s8 %v3896
        %v3898 = vlaneseq
        %v3899 = vshrl.u32 %v3898, 7
        %v3900 = vsub.s32 %v3897, %v3899
        %v3901 = vrot.slane %v3887, %v3900
        %v3902 = vcombine.low %v3512, %v3658
        %v3903 = vcombine.high %v3512, %v3658
        %v3905 = vunpack.c.l.s4 1983009808
        %v3906 = vunpack.c.0.s8 %v3905
        %v3907 = vlaneseq
        %v3908 = vshrl.u32 %v3907, 7
        %v3909 = vsub.s32 %v3906, %v3908
        %v3910 = vrot.slane %v3902, %v3909
        %v3912 = vunpack.c.l.s4 1983009808
        %v3913 = vunpack.c.0.s8 %v3912
        %v3914 = vlaneseq
        %v3915 = vshrl.u32 %v3914, 7
        %v3916 = vsub.s32 %v3913, %v3915
        %v3917 = vrot.slane %v3903, %v3916
        %v3918 = vcombine.low %v3585, %v3731
        %v3919 = vcombine.high %v3585, %v3731
        %v3921 = vunpack.c.l.s4 1983009808
        %v3922 = vunpack.c.0.s8 %v3921
        %v3923 = vlaneseq
        %v3924 = vshrl.u32 %v3923, 7
        %v3925 = vsub.s32 %v3922, %v3924
        %v3926 = vrot.slane %v3918, %v3925
        %v3928 = vunpack.c.l.s4 1983009808
        %v3929 = vunpack.c.0.s8 %v3928
        %v3930 = vlaneseq
        %v3931 = vshrl.u32 %v3930, 7
        %v3932 = vsub.s32 %v3929, %v3931
        %v3933 = vrot.slane %v3919, %v3932
        %v3934 = vcombine.low %v3878, %v3894
        %v3935 = vcombine.high %v3878, %v3894
        %v3937 = vunpack.c.l.s4 1934713408
        %v3938 = vunpack.c.0.s8 %v3937
        %v3939 = vlaneseq
        %v3940 = vshrl.u32 %v3939, 7
        %v3941 = vsub.s32 %v3938, %v3940
        %v3942 = vrot.slane %v3934, %v3941
        %v3944 = vunpack.c.l.s4 1934713408
        %v3945 = vunpack.c.0.s8 %v3944
        %v3946 = vlaneseq
        %v3947 = vshrl.u32 %v3946, 7
        %v3948 = vsub.s32 %v3945, %v3947
        %v3949 = vrot.slane %v3935, %v3948
        %v3950 = vcombine.low %v3885, %v3901
        %v3951 = vcombine.high %v3885, %v3901
        %v3953 = vunpack.c.l.s4 1934713408
        %v3954 = vunpack.c.0.s8 %v3953
        %v3955 = vlaneseq
        %v3956 = vshrl.u32 %v3955, 7
        %v3957 = vsub.s32 %v3954, %v3956
        %v3958 = vrot.slane %v3950, %v3957
        %v3960 = vunpack.c.l.s4 1934713408
        %v3961 = vunpack.c.0.s8 %v3960
        %v3962 = vlaneseq
        %v3963 = vshrl.u32 %v3962, 7
        %v3964 = vsub.s32 %v3961, %v3963
        %v3965 = vrot.slane %v3951, %v3964
        %v3966 = vcombine.low %v3910, %v3926
        %v3967 = vcombine.high %v3910, %v3926
        %v3969 = vunpack.c.l.s4 1934713408
        %v3970 = vunpack.c.0.s8 %v3969
        %v3971 = vlaneseq
        %v3972 = vshrl.u32 %v3971, 7
        %v3973 = vsub.s32 %v3970, %v3972
        %v3974 = vrot.slane %v3966, %v3973
        %v3976 = vunpack.c.l.s4 1934713408
        %v3977 = vunpack.c.0.s8 %v3976
        %v3978 = vlaneseq
        %v3979 = vshrl.u32 %v3978, 7
        %v3980 = vsub.s32 %v3977, %v3979
        %v3981 = vrot.slane %v3967, %v3980
        %v3982 = vcombine.low %v3917, %v3933
        %v3983 = vcombine.high %v3917, %v3933
        %v3985 = vunpack.c.l.s4 1934713408
        %v3986 = vunpack.c.0.s8 %v3985
        %v3987 = vlaneseq
        %v3988 = vshrl.u32 %v3987, 7
        %v3989 = vsub.s32 %v3986, %v3988
        %v3990 = vrot.slane %v3982, %v3989
        %v3992 = vunpack.c.l.s4 1934713408
        %v3993 = vunpack.c.0.s8 %v3992
        %v3994 = vlaneseq
        %v3995 = vshrl.u32 %v3994, 7
        %v3996 = vsub.s32 %v3993, %v3995
        %v3997 = vrot.slane %v3983, %v3996
        %v3998 = vcombine.low %v3942, %v3974
        %v3999 = vcombine.high %v3942, %v3974
        %v4000 = vcombine.low %v3949, %v3981
        %v4001 = vcombine.high %v3949, %v3981
        %v4002 = vcombine.low %v3958, %v3990
        %v4003 = vcombine.high %v3958, %v3990
        %v4004 = vcombine.low %v3965, %v3997
        %v4005 = vcombine.high %v3965, %v3997
        %4006 = vst.msk [vmem:[%s291] sm:$0xff] %vm1156, %v3862
        %4007 = vst.msk [vmem:[%s291 + $0x8] sm:$0xff] %vm1156, %v3998
        %4008 = vst.msk [vmem:[%s291 + $0x10] sm:$0xff] %vm1156, %v3863
        %4009 = vst.msk [vmem:[%s291 + $0x18] sm:$0xff] %vm1156, %v3999
        %4010 = vst.msk [vmem:[%s291 + $0x20] sm:$0xff] %vm1156, %v3864
        %4011 = vst.msk [vmem:[%s291 + $0x28] sm:$0xff] %vm1156, %v4000
        %4012 = vst.msk [vmem:[%s291 + $0x30] sm:$0xff] %vm1156, %v3865
        %4013 = vst.msk [vmem:[%s291 + $0x38] sm:$0xff] %vm1156, %v4001
        %4014 = vst.msk [vmem:[%s291 + $0x40] sm:$0xff] %vm1156, %v3866
        %4015 = vst.msk [vmem:[%s291 + $0x48] sm:$0xff] %vm1156, %v4002
        %4016 = vst.msk [vmem:[%s291 + $0x50] sm:$0xff] %vm1156, %v3867
        %4017 = vst.msk [vmem:[%s291 + $0x58] sm:$0xff] %vm1156, %v4003
        %4018 = vst.msk [vmem:[%s291 + $0x60] sm:$0xff] %vm1156, %v3868
        %4019 = vst.msk [vmem:[%s291 + $0x68] sm:$0xff] %vm1156, %v4004
        %4020 = vst.msk [vmem:[%s291 + $0x70] sm:$0xff] %vm1156, %v3869
        %4021 = vst.msk [vmem:[%s291 + $0x78] sm:$0xff] %vm1156, %v4005
        %s4022 = sand.u32 %s129, 1
        %s4023 = scalar_lea.sflag [#allocation4], %s4022
        %s4024 = sand.u32 %s129, 1
        %s4025 = smul.addr %s4024, 128
        %s4026 = scalar_lea.vmem [#allocation8], %s4025
        // Predicated region
        $region45: #{tpu_custom_call.1} parent=31 // pred_check
          %p4027 = pneg %p139
        $region46: #{tpu_custom_call.1} parent=31 // pred_check_branch
          %4029 = sbr.rel (%p4027) target = $region48
        $region47: #{tpu_custom_call.1} parent=31 // pred_region
          %s4031 = ssub.s32 2048, 2048
          %4032 = vsyncadd %s4023, %s4031
          %s4033 = smul.addr %s28, 16
          %s4034 = smul.addr %s27, 64
          %s4035 = sadd.s32 %s4033, %s4034
          %s4036 = smul.addr %s4035, 128
          %s4037 = scalar_lea.hbm %s3, %s4036
          %s4038 = sshll.u32 %s4026, 4
          %s4039 = int_to_ptr.vmem [resolvable:$true] %s4038
          %4044 = dma.vmem_to_hbm [thread:$0]  %s4039, 2048, %s4037, %s4023, 128, 128, 8
        $region48: #{tpu_custom_call.1} parent=31 // pred_fallthru
          _
      $region32: #{tpu_custom_call.1} parent=5 // pred_fallthru
        _
      %p4045 = scmp.le.s32.totalorder 2, %s18
      // Predicated region
      $region49: #{tpu_custom_call.1} parent=5 // pred_check
        %p4046 = pneg %p4045
      $region50: #{tpu_custom_call.1} parent=5 // pred_check_branch
        %4048 = sbr.rel (%p4046) target = $region52
      $region51: #{tpu_custom_call.1} parent=5 // pred_region
        %s4049 = ssub.s32 %s18, 2
        // Predicated region
        $region53: #{tpu_custom_call.1} parent=51 // pred_check
          %p4050 = pneg %p145
        $region54: #{tpu_custom_call.1} parent=51 // pred_check_branch
          %4052 = sbr.rel (%p4050) target = $region56
        $region55: #{tpu_custom_call.1} parent=51 // pred_region
          %s4053 = sand.u32 %s130, 1
          %s4054 = scalar_lea.sflag [#allocation4], %s4053
          %s4055 = sand.u32 %s130, 1
          %s4056 = smul.addr %s4055, 128
          %s4057 = scalar_lea.vmem [#allocation8], %s4056
          %4058 = dma.done %s4054, 2048
        $region56: #{tpu_custom_call.1} parent=51 // pred_fallthru
          _
      $region52: #{tpu_custom_call.1} parent=5 // pred_fallthru
        _
    $region6: #{tpu_custom_call.1} parent=1 // loop_footer
      %s22 = sadd.s32 1, %s18
    $region7: #{tpu_custom_call.1} parent=1 // loop_footer_branch
      %17 = sbr.rel target = $region3
    $region8: #{tpu_custom_call.1} parent=1 // loop_exit
      _
    %4059 = vsyncpa [#allocation3], 1
    %s4060 = scalar_lea.sflag [#allocation3], 1
    %4061 = vsyncpa %s4060, 1
    %4062 = vsyncpa [#allocation6], 1
    %s4063 = scalar_lea.sflag [#allocation6], 1
    %4064 = vsyncpa %s4063, 1
    %4065 = vsyncpa [#allocation4], 1
    %s4066 = scalar_lea.sflag [#allocation4], 1
    %4067 = vsyncpa %s4066, 1

</llo_original>
